<compile_context>
chip_gen: v6e
topology: v6e:2x2x1
jax: 0.10.0
libtpu: 0.0.40
codegen_flags: <defaults>
</compile_context>

<pallas_src>
import functools

import numpy as np
import jax
import jax.numpy as jnp
from jax.experimental import pallas as pl
from jax.experimental.pallas import tpu as pltpu

LN_EPS = 1e-5           # torch.nn.LayerNorm default
_BF16 = jnp.bfloat16
_SQRT1_2 = 0.7071067811865476


# ----------------------------------------------------------------------------- helpers
def _layer_norm(x, gamma, beta):
    """f32 LayerNorm over the last axis (shared by kernels and the reference)."""
    mu = jnp.mean(x, axis=-1, keepdims=True)
    xc = x - mu
    var = jnp.mean(xc * xc, axis=-1, keepdims=True)
    return xc * jax.lax.rsqrt(var + LN_EPS) * gamma + beta


def _gelu_exact(x):
    """Exact (erf) GELU matching torch.nn.GELU(approximate='none') — kernel-only.

    erf via Abramowitz-Stegun 7.1.26 polynomial (|err| < 1.5e-7); the divide goes through the
    EUP approximate reciprocal (free slot), everything else is VPU exp/mul/add/select.
    """
    z = x * _SQRT1_2
    sgn = jnp.where(z >= 0, 1.0, -1.0)
    az = jnp.abs(z)
    t = pl.reciprocal(1.0 + 0.3275911 * az, approx=True)
    poly = ((((1.061405429 * t - 1.453152027) * t + 1.421413741) * t
             - 0.284496736) * t + 0.254829592) * t
    erf = sgn * (1.0 - poly * jnp.exp(-az * az))
    return 0.5 * x * (1.0 + erf)


def _softmax_rows(s):
    """Row softmax with f32 stats; denominator via the (otherwise idle) EUP vrcp."""
    s = s - jnp.max(s, axis=-1, keepdims=True)
    p = jnp.exp(s)
    return p * pl.reciprocal(jnp.sum(p, axis=-1, keepdims=True), approx=True)


def _mha_into_proj(q_cols, k_cols, v_cols, bias, num_heads, wproj_ref, bproj_ref):
    """Multi-head attention with the output projection accumulated per head.

    q_cols/k_cols/v_cols: (Tq, C)/(Tk, C)/(Tk, C) f32 (attention scale already folded into q).
    bias: (Tq, Tk) additive f32 or None.  Returns (Tq, C) f32 = concat_h(head_h) @ Wproj + bproj,
    computed as sum_h head_h @ Wproj[h*d:(h+1)*d, :] — no lane-axis head concatenate.
    """
    c = q_cols.shape[1]
    d = c // num_heads
    acc = None
    for h in range(num_heads):                      # unrolled; head_dim stays a lane slice
        q = q_cols[:, h * d:(h + 1) * d].astype(_BF16)
        k = k_cols[:, h * d:(h + 1) * d].astype(_BF16)
        v = v_cols[:, h * d:(h + 1) * d].astype(_BF16)
        s = jax.lax.dot_general(q, k, (((1,), (1,)), ((), ())),
                                preferred_element_type=jnp.float32)   # (Tq, Tk), K^T on the MXU
        if bias is not None:
            s = s + bias
        p = _softmax_rows(s)
        head = jnp.dot(p.astype(_BF16), v, preferred_element_type=jnp.float32)      # (Tq, d)
        contrib = jnp.dot(head.astype(_BF16), wproj_ref[h * d:(h + 1) * d, :],
                          preferred_element_type=jnp.float32)                       # (Tq, C)
        acc = contrib if acc is None else acc + contrib
    return acc + bproj_ref[...]


def _causal_bias(n):
    """Additive causal-mask bias built in-kernel from 2-D iota compares (no HBM stream)."""
    row = jax.lax.broadcasted_iota(jnp.int32, (n, n), 0)
    col = jax.lax.broadcasted_iota(jnp.int32, (n, n), 1)
    # -1e30 underflows to 0 after exp; identical to masked_fill(-inf) for any row with >=1 visible key.
    return jnp.where(col > row, jnp.float32(-1e30), jnp.float32(0.0))


def _row_spec(rows, cols):
    return pl.BlockSpec((rows, cols), lambda b: (b, 0))


def _const_spec(shape):
    return pl.BlockSpec(shape, lambda b: (0,) * len(shape))


# ----------------------------------------------------------------------------- kernels
def _local_block_kernel(*refs, num_heads, mask_mode, final_ln):
    """Fused local Block: r = (x+pos) + Proj(MHSA(LN1(x+pos))); out = r + MLP(LN2(r)).

    If final_ln: also writes ln_f1(out) to a second output (the pre-LN value is still needed as
    cross-attention context, so both are emitted).
    """
    it = iter(refs)
    x_ref = next(it); pos_ref = next(it)
    mask_ref = next(it) if mask_mode == "dense" else None
    ln1_g = next(it); ln1_b = next(it)
    wqkv = next(it); bqkv = next(it)
    wproj = next(it); bproj = next(it)
    ln2_g = next(it); ln2_b = next(it)
    w1 = next(it); b1 = next(it); w2 = next(it); b2 = next(it)
    lnf_g = next(it) if final_ln else None
    lnf_b = next(it) if final_ln else None
    o_ref = next(it)
    of_ref = next(it) if final_ln else None

    xp = x_ref[...] + pos_ref[...]                                   # (N, C) f32 residual base
    xn = _layer_norm(xp, ln1_g[...], ln1_b[...]).astype(_BF16)
    qkv = jnp.dot(xn, wqkv[...], preferred_element_type=jnp.float32) + bqkv[...]   # scale folded in Q
    c = qkv.shape[1] // 3

    if mask_mode == "causal":
        bias = _causal_bias(xp.shape[0])
    elif mask_mode == "dense":
        bias = mask_ref[...]
    else:
        bias = None

    y = _mha_into_proj(qkv[:, 0 * c:1 * c], qkv[:, 1 * c:2 * c], qkv[:, 2 * c:3 * c],
                       bias, num_heads, wproj, bproj)
    r = xp + y                                                       # attn residual

    rn = _layer_norm(r, ln2_g[...], ln2_b[...]).astype(_BF16)
    h = jnp.dot(rn, w1[...], preferred_element_type=jnp.float32) + b1[...]
    h = _gelu_exact(h)
    y2 = jnp.dot(h.astype(_BF16), w2[...], preferred_element_type=jnp.float32) + b2[...]
    out = r + y2

    o_ref[...] = out.astype(o_ref.dtype)
    if final_ln:
        of_ref[...] = _layer_norm(out, lnf_g[...], lnf_b[...]).astype(of_ref.dtype)


def _cross_block_kernel(*refs, num_heads, final_ln):
    """Fused CrossBlock: r = q + Proj(MHCA(LN1(q), LN1(ctx))); out = r + MLP(LN2(r)).

    If final_ln: applies ln_f2 to out before the store (out is not needed un-normalized afterwards).
    """
    it = iter(refs)
    xq_ref = next(it); y_ref = next(it)
    ln1_g = next(it); ln1_b = next(it)
    wq = next(it); bq = next(it); wkv = next(it); bkv = next(it)
    wproj = next(it); bproj = next(it)
    ln2_g = next(it); ln2_b = next(it)
    w1 = next(it); b1 = next(it); w2 = next(it); b2 = next(it)
    lnf_g = next(it) if final_ln else None
    lnf_b = next(it) if final_ln else None
    o_ref = next(it)

    xq = xq_ref[...]                                                 # (M, C) f32 residual base
    g, b = ln1_g[...], ln1_b[...]
    qn = _layer_norm(xq, g, b).astype(_BF16)
    yn = _layer_norm(y_ref[...], g, b).astype(_BF16)                 # CrossBlock applies norm1 to both

    qp = jnp.dot(qn, wq[...], preferred_element_type=jnp.float32) + bq[...]    # (M, C), scale folded
    kv = jnp.dot(yn, wkv[...], preferred_element_type=jnp.float32) + bkv[...]  # (N, 2C)
    c = qp.shape[1]

    y = _mha_into_proj(qp, kv[:, 0:c], kv[:, c:2 * c], None, num_heads, wproj, bproj)
    r = xq + y

    rn = _layer_norm(r, ln2_g[...], ln2_b[...]).astype(_BF16)
    h = jnp.dot(rn, w1[...], preferred_element_type=jnp.float32) + b1[...]
    h = _gelu_exact(h)
    y2 = jnp.dot(h.astype(_BF16), w2[...], preferred_element_type=jnp.float32) + b2[...]
    out = r + y2
    if final_ln:
        out = _layer_norm(out, lnf_g[...], lnf_b[...])
    o_ref[...] = out.astype(o_ref.dtype)


# ----------------------------------------------------------------------------- wrappers
_PARALLEL = pltpu.CompilerParams(dimension_semantics=("parallel",))


def local_block_pallas(x, pos, lp, *, num_heads, mask_mode, mask_bias=None, final_ln_params=None):
    B, N, C = x.shape
    H = lp["w_fc1"].shape[1]
    final_ln = final_ln_params is not None
    kernel = functools.partial(_local_block_kernel, num_heads=num_heads,
                               mask_mode=mask_mode, final_ln=final_ln)

    in_specs = [_row_spec(N, C), _row_spec(N, C)]
    args = [x.reshape(B * N, C), pos.reshape(B * N, C)]
    if mask_mode == "dense":
        in_specs.append(_const_spec((N, N)))
        args.append(mask_bias)
    in_specs += [
        _const_spec((1, C)), _const_spec((1, C)),
        _const_spec((C, 3 * C)), _const_spec((1, 3 * C)),
        _const_spec((C, C)), _const_spec((1, C)),
        _const_spec((1, C)), _const_spec((1, C)),
        _const_spec((C, H)), _const_spec((1, H)),
        _const_spec((H, C)), _const_spec((1, C)),
    ]
    args += [lp["ln1_g"], lp["ln1_b"], lp["w_qkv"], lp["b_qkv"], lp["w_proj"], lp["b_proj"],
             lp["ln2_g"], lp["ln2_b"], lp["w_fc1"], lp["b_fc1"], lp["w_fc2"], lp["b_fc2"]]

    if final_ln:
        in_specs += [_const_spec((1, C)), _const_spec((1, C))]
        args += [final_ln_params[0], final_ln_params[1]]
        out_shape = (jax.ShapeDtypeStruct((B * N, C), x.dtype),
                     jax.ShapeDtypeStruct((B * N, C), x.dtype))
        out_specs = [_row_spec(N, C), _row_spec(N, C)]
    else:
        out_shape = jax.ShapeDtypeStruct((B * N, C), x.dtype)
        out_specs = _row_spec(N, C)

    out = pl.pallas_call(
        kernel,
        out_shape=out_shape,
        grid_spec=pltpu.PrefetchScalarGridSpec(
            num_scalar_prefetch=0, grid=(B,), in_specs=in_specs, out_specs=out_specs),
        compiler_params=_PARALLEL,
    )(*args)

    if final_ln:
        return out[0].reshape(B, N, C), out[1].reshape(B, N, C)
    return out.reshape(B, N, C), None


def cross_block_pallas(xq, y, gp, *, num_heads, final_ln_params=None):
    B, M, C = xq.shape
    N = y.shape[1]
    H = gp["w_fc1"].shape[1]
    final_ln = final_ln_params is not None
    kernel = functools.partial(_cross_block_kernel, num_heads=num_heads, final_ln=final_ln)

    in_specs = [
        _row_spec(M, C), _row_spec(N, C),
        _const_spec((1, C)), _const_spec((1, C)),
        _const_spec((C, C)), _const_spec((1, C)),
        _const_spec((C, 2 * C)), _const_spec((1, 2 * C)),
        _const_spec((C, C)), _const_spec((1, C)),
        _const_spec((1, C)), _const_spec((1, C)),
        _const_spec((C, H)), _const_spec((1, H)),
        _const_spec((H, C)), _const_spec((1, C)),
    ]
    args = [xq.reshape(B * M, C), y.reshape(B * N, C),
            gp["ln1_g"], gp["ln1_b"], gp["w_q"], gp["b_q"], gp["w_kv"], gp["b_kv"],
            gp["w_proj"], gp["b_proj"], gp["ln2_g"], gp["ln2_b"],
            gp["w_fc1"], gp["b_fc1"], gp["w_fc2"], gp["b_fc2"]]
    if final_ln:
        in_specs += [_const_spec((1, C)), _const_spec((1, C))]
        args += [final_ln_params[0], final_ln_params[1]]

    out = pl.pallas_call(
        kernel,
        out_shape=jax.ShapeDtypeStruct((B * M, C), xq.dtype),
        grid_spec=pltpu.PrefetchScalarGridSpec(
            num_scalar_prefetch=0, grid=(B,), in_specs=in_specs, out_specs=_row_spec(M, C)),
        compiler_params=_PARALLEL,
    )(*args)
    return out.reshape(B, M, C)


# ----------------------------------------------------------------------------- param prep
def prepare_params(params, *, num_heads):
    """One-time parameter prep: bf16 weight copies, attention scale folded into Q weights/biases,
    biases / LN params reshaped to (1, C). Done ONCE, so no per-call converts in the forward."""
    def prep_mlp(p, C):
        H = p["w_fc1"].shape[1]
        return dict(
            ln2_g=p["ln2_g"].reshape(1, C), ln2_b=p["ln2_b"].reshape(1, C),
            w_fc1=p["w_fc1"].astype(_BF16), b_fc1=p["b_fc1"].reshape(1, H),
            w_fc2=p["w_fc2"].astype(_BF16), b_fc2=p["b_fc2"].reshape(1, C),
        )

    out = {
        "sos": params["sos"], "sos_pos": params["sos_pos"],
        "lnf1_g": params["lnf1_g"].reshape(1, -1), "lnf1_b": params["lnf1_b"].reshape(1, -1),
        "lnf2_g": params["lnf2_g"].reshape(1, -1), "lnf2_b": params["lnf2_b"].reshape(1, -1),
        "local": [], "global": [],
    }
    for lp in params["local"]:
        C = lp["w_qkv"].shape[0]
        scale = (C // num_heads) ** -0.5
        qscale = jnp.concatenate([jnp.full((C,), scale, jnp.float32),
                                  jnp.ones((2 * C,), jnp.float32)])
        d = dict(
            ln1_g=lp["ln1_g"].reshape(1, C), ln1_b=lp["ln1_b"].reshape(1, C),
            w_qkv=(lp["w_qkv"] * qscale[None, :]).astype(_BF16),
            b_qkv=(lp["b_qkv"] * qscale).reshape(1, 3 * C),
            w_proj=lp["w_proj"].astype(_BF16), b_proj=lp["b_proj"].reshape(1, C),
        )
        d.update(prep_mlp(lp, C))
        out["local"].append(d)
    for gp in params["global"]:
        C = gp["w_q"].shape[0]
        scale = (C // num_heads) ** -0.5
        d = dict(
            ln1_g=gp["ln1_g"].reshape(1, C), ln1_b=gp["ln1_b"].reshape(1, C),
            w_q=(gp["w_q"] * scale).astype(_BF16), b_q=(gp["b_q"] * scale).reshape(1, C),
            w_kv=gp["w_kv"].astype(_BF16), b_kv=gp["b_kv"].reshape(1, 2 * C),
            w_proj=gp["w_proj"].astype(_BF16), b_proj=gp["b_proj"].reshape(1, C),
        )
        d.update(prep_mlp(gp, C))
        out["global"].append(d)
    return out


# ----------------------------------------------------------------------------- forward
def gpt_extractor_pallas(pparams, x, pos, attn_mask, query, *, num_heads, mask_mode=None):
    """Mirrors GPTExtractor.forward (every_layer_add_pos=True, eval mode). `pparams` = prepare_params(...)."""
    B, N, C = x.shape
    sos = jnp.broadcast_to(pparams["sos"], (B, 1, C))
    sos_pos = jnp.broadcast_to(pparams["sos_pos"], (B, 1, C))
    x = jnp.concatenate([sos, x[:, :-1]], axis=1)          # trivial data movement -> XLA
    pos = jnp.concatenate([sos_pos, pos[:, :-1]], axis=1)

    if mask_mode is None:
        if attn_mask is None:
            mask_mode = "none"
        else:
            mask_np = np.asarray(attn_mask)
            causal = np.triu(np.ones((N, N), dtype=bool), 1)
            mask_mode = "causal" if (mask_np.shape == (N, N) and np.array_equal(mask_np, causal)) \
                else "dense"
    mask_bias = None
    if mask_mode == "dense":
        # masked_fill(mask, -inf) as an additive bias (-1e30 underflows to 0 after exp)
        mask_bias = jnp.where(attn_mask, jnp.float32(-1e30), jnp.float32(0.0))
    # TODO(synk): per-batch / per-head masks would need a (B, N, N) mask with a batch-indexed spec.

    depth = len(pparams["local"])
    encoded_points = None
    for i, (lp, gp) in enumerate(zip(pparams["local"], pparams["global"])):
        last = i == depth - 1
        x, x_ln = local_block_pallas(
            x, pos, lp, num_heads=num_heads, mask_mode=mask_mode, mask_bias=mask_bias,
            final_ln_params=(pparams["lnf1_g"], pparams["lnf1_b"]) if last else None)
        if last:
            encoded_points = x_ln                       # ln_f1 folded into the last local block
        if query is not None:
            query = cross_block_pallas(
                query, x, gp, num_heads=num_heads,
                final_ln_params=(pparams["lnf2_g"], pparams["lnf2_b"]) if last else None)
    return encoded_points, query                         # query already ln_f2-normalized


# ----------------------------------------------------------------------------- reference
def gpt_extractor_reference(params, x, pos, attn_mask, query, *, num_heads):
    """Plain-JAX mirror of the PyTorch forward, with the same bf16 matmul-operand casts."""

    def dense(v, w, b):
        return jnp.einsum('...i,io->...o', v.astype(_BF16), w.astype(_BF16),
                          preferred_element_type=jnp.float32) + b

    def self_attn(xin, p):
        Bq, Nq, C = xin.shape
        d = C // num_heads
        scale = d ** -0.5
        h = _layer_norm(xin, p["ln1_g"], p["ln1_b"])
        qkv = dense(h, p["w_qkv"], p["b_qkv"]).reshape(Bq, Nq, 3, num_heads, d)
        qkv = qkv.transpose(2, 0, 3, 1, 4)
        q, k, v = qkv[0], qkv[1], qkv[2]
        q = (q * scale).astype(_BF16)
        k, v = k.astype(_BF16), v.astype(_BF16)
        s = jnp.einsum('bhqd,bhkd->bhqk', q, k, preferred_element_type=jnp.float32)
        if attn_mask is not None:
            s = jnp.where(attn_mask, -jnp.inf, s)
        a = jax.nn.softmax(s, axis=-1)
        o = jnp.einsum('bhqk,bhkd->bhqd', a.astype(_BF16), v, preferred_element_type=jnp.float32)
        o = o.transpose(0, 2, 1, 3).reshape(Bq, Nq, C)
        return dense(o, p["w_proj"], p["b_proj"])

    def cross_attn(xq, y, p):
        Bq, M, C = xq.shape
        Ny = y.shape[1]
        d = C // num_heads
        scale = d ** -0.5
        qn = _layer_norm(xq, p["ln1_g"], p["ln1_b"])
        yn = _layer_norm(y, p["ln1_g"], p["ln1_b"])
        q = dense(qn, p["w_q"], p["b_q"]).reshape(Bq, M, num_heads, d).transpose(0, 2, 1, 3)
        kv = dense(yn, p["w_kv"], p["b_kv"]).reshape(Bq, Ny, 2, num_heads, d).transpose(2, 0, 3, 1, 4)
        k, v = kv[0].astype(_BF16), kv[1].astype(_BF16)
        q = (q * scale).astype(_BF16)
        s = jnp.einsum('bhmd,bhnd->bhmn', q, k, preferred_element_type=jnp.float32)
        a = jax.nn.softmax(s, axis=-1)
        o = jnp.einsum('bhmn,bhnd->bhmd', a.astype(_BF16), v, preferred_element_type=jnp.float32)
        o = o.transpose(0, 2, 1, 3).reshape(Bq, M, C)
        return dense(o, p["w_proj"], p["b_proj"])

    def mlp(xin, p):
        h = _layer_norm(xin, p["ln2_g"], p["ln2_b"])
        h = dense(h, p["w_fc1"], p["b_fc1"])
        h = jax.nn.gelu(h, approximate=False)
        return dense(h, p["w_fc2"], p["b_fc2"])

    B, N, C = x.shape
    sos = jnp.broadcast_to(params["sos"], (B, 1, C))
    sos_pos = jnp.broadcast_to(params["sos_pos"], (B, 1, C))
    x = jnp.concatenate([sos, x[:, :-1]], axis=1)
    pos = jnp.concatenate([sos_pos, pos[:, :-1]], axis=1)

    for lp, gp in zip(params["local"], params["global"]):
        h = x + pos
        h = h + self_attn(h, lp)
        h = h + mlp(h, lp)
        x = h
        if query is not None:
            query = query + cross_attn(query, x, gp)
            query = query + mlp(query, gp)

    enc = _layer_norm(x, params["lnf1_g"], params["lnf1_b"])
    q = _layer_norm(query, params["lnf2_g"], params["lnf2_b"]) if query is not None else None
    return enc, q


# ----------------------------------------------------------------------------- params
def init_params(key, *, dim, depth, mlp_ratio=4.0):
    """Weights stored as (in, out), i.e. torch's Linear.weight.T; biases/LN params f32."""
    hidden = int(dim * mlp_ratio)
    kit = iter(jax.random.split(key, 512))

    def linear(fan_in, fan_out):
        w = jax.random.normal(next(kit), (fan_in, fan_out), jnp.float32) * (fan_in ** -0.5)
        b = 0.02 * jax.random.normal(next(kit), (fan_out,), jnp.float32)
        return w, b

    def layer_norm():
        g = 1.0 + 0.05 * jax.random.normal(next(kit), (dim,), jnp.float32)
        b = 0.05 * jax.random.normal(next(kit), (dim,), jnp.float32)
        return g, b

    params = {
        "sos": jax.random.normal(next(kit), (1, 1, dim), jnp.float32),
        "sos_pos": jax.random.normal(next(kit), (1, 1, dim), jnp.float32),
        "local": [], "global": [],
    }
    for _ in range(depth):
        ln1g, ln1b = layer_norm()
        wqkv, bqkv = linear(dim, 3 * dim)
        wproj, bproj = linear(dim, dim)
        ln2g, ln2b = layer_norm()
        w1, b1 = linear(dim, hidden)
        w2, b2 = linear(hidden, dim)
        params["local"].append(dict(ln1_g=ln1g, ln1_b=ln1b, w_qkv=wqkv, b_qkv=bqkv,
                                    w_proj=wproj, b_proj=bproj, ln2_g=ln2g, ln2_b=ln2b,
                                    w_fc1=w1, b_fc1=b1, w_fc2=w2, b_fc2=b2))
        ln1g, ln1b = layer_norm()
        wq, bq = linear(dim, dim)
        wkv, bkv = linear(dim, 2 * dim)
        wproj, bproj = linear(dim, dim)
        ln2g, ln2b = layer_norm()
        w1, b1 = linear(dim, hidden)
        w2, b2 = linear(hidden, dim)
        params["global"].append(dict(ln1_g=ln1g, ln1_b=ln1b, w_q=wq, b_q=bq, w_kv=wkv, b_kv=bkv,
                                     w_proj=wproj, b_proj=bproj, ln2_g=ln2g, ln2_b=ln2b,
                                     w_fc1=w1, b_fc1=b1, w_fc2=w2, b_fc2=b2))
    params["lnf1_g"], params["lnf1_b"] = layer_norm()
    params["lnf2_g"], params["lnf2_b"] = layer_norm()
    return params


# ----------------------------------------------------------------------------- demo
if __name__ == "__main__":
    # Small-but-lane-dense config: C multiple of 128 so every block's last dim is full-width.
    B, N, M, C = 2, 8, 8, 128        # batch, point tokens, query tokens, embed dim
    NUM_HEADS, DEPTH = 8, 2          # head_dim = 16

    key = jax.random.PRNGKey(0)
    kp, kx, kpos, kq = jax.random.split(key, 4)
    params = init_params(kp, dim=C, depth=DEPTH)
    pparams = prepare_params(params, num_heads=NUM_HEADS)   # one-time bf16 / scale-folded copies

    x = jax.random.normal(kx, (B, N, C), jnp.float32)
    pos = 0.1 * jax.random.normal(kpos, (B, N, C), jnp.float32)
    query = jax.random.normal(kq, (B, M, C), jnp.float32)
    attn_mask = jnp.triu(jnp.ones((N, N), dtype=bool), k=1)   # GPT causal mask: True = blocked

    enc, q_out = gpt_extractor_pallas(pparams, x, pos, attn_mask, query, num_heads=NUM_HEADS)
    enc = jax.block_until_ready(enc)
    q_out = jax.block_until_ready(q_out)

    enc_ref, q_ref = gpt_extractor_reference(params, x, pos, attn_mask, query, num_heads=NUM_HEADS)
    enc_ref = jax.block_until_ready(enc_ref)
    q_ref = jax.block_until_ready(q_ref)

    assert enc.shape == (B, N, C) and q_out.shape == (B, M, C), (enc.shape, q_out.shape)
    err_enc = float(jnp.max(jnp.abs(enc - enc_ref)))
    err_q = float(jnp.max(jnp.abs(q_out - q_ref)))
    assert jnp.allclose(enc, enc_ref, atol=5e-2, rtol=5e-2), f"encoded_points max err {err_enc}"
    assert jnp.allclose(q_out, q_ref, atol=5e-2, rtol=5e-2), f"query max err {err_q}"

    print("KERNEL_OK")
</pallas_src>

<mosaic_0001>
module attributes {stable_mosaic.version = 11 : i64} {
  func.func @_local_block_kernel(%arg0: i32, %arg1: memref<8x128xf32, #tpu.memory_space<vmem>>, %arg2: memref<8x128xf32, #tpu.memory_space<vmem>>, %arg3: memref<1x128xf32, #tpu.memory_space<vmem>>, %arg4: memref<1x128xf32, #tpu.memory_space<vmem>>, %arg5: memref<128x384xbf16, #tpu.memory_space<vmem>>, %arg6: memref<1x384xf32, #tpu.memory_space<vmem>>, %arg7: memref<128x128xbf16, #tpu.memory_space<vmem>>, %arg8: memref<1x128xf32, #tpu.memory_space<vmem>>, %arg9: memref<1x128xf32, #tpu.memory_space<vmem>>, %arg10: memref<1x128xf32, #tpu.memory_space<vmem>>, %arg11: memref<128x512xbf16, #tpu.memory_space<vmem>>, %arg12: memref<1x512xf32, #tpu.memory_space<vmem>>, %arg13: memref<512x128xbf16, #tpu.memory_space<vmem>>, %arg14: memref<1x128xf32, #tpu.memory_space<vmem>>, %arg15: memref<8x128xf32, #tpu.memory_space<vmem>>) attributes {dimension_semantics = [#tpu.dimension_semantics<parallel>], iteration_bounds = array<i64: 2>, scalar_prefetch = 0 : i64, scratch_operands = 0 : i64, tpu.core_type = #tpu.core_type<tc>, window_params = [{transform_indices = @transform_0, window_bounds = array<i64: 8, 128>}, {transform_indices = @transform_1, window_bounds = array<i64: 8, 128>}, {pipeline_mode = #tpu.pipeline_mode<synchronous>, transform_indices = @transform_2, window_bounds = array<i64: 1, 128>}, {pipeline_mode = #tpu.pipeline_mode<synchronous>, transform_indices = @transform_3, window_bounds = array<i64: 1, 128>}, {pipeline_mode = #tpu.pipeline_mode<synchronous>, transform_indices = @transform_4, window_bounds = array<i64: 128, 384>}, {pipeline_mode = #tpu.pipeline_mode<synchronous>, transform_indices = @transform_5, window_bounds = array<i64: 1, 384>}, {pipeline_mode = #tpu.pipeline_mode<synchronous>, transform_indices = @transform_6, window_bounds = array<i64: 128, 128>}, {pipeline_mode = #tpu.pipeline_mode<synchronous>, transform_indices = @transform_7, window_bounds = array<i64: 1, 128>}, {pipeline_mode = #tpu.pipeline_mode<synchronous>, transform_indices = @transform_8, window_bounds = array<i64: 1, 128>}, {pipeline_mode = #tpu.pipeline_mode<synchronous>, transform_indices = @transform_9, window_bounds = array<i64: 1, 128>}, {pipeline_mode = #tpu.pipeline_mode<synchronous>, transform_indices = @transform_10, window_bounds = array<i64: 128, 512>}, {pipeline_mode = #tpu.pipeline_mode<synchronous>, transform_indices = @transform_11, window_bounds = array<i64: 1, 512>}, {pipeline_mode = #tpu.pipeline_mode<synchronous>, transform_indices = @transform_12, window_bounds = array<i64: 512, 128>}, {pipeline_mode = #tpu.pipeline_mode<synchronous>, transform_indices = @transform_13, window_bounds = array<i64: 1, 128>}, {transform_indices = @transform_14, window_bounds = array<i64: 8, 128>}]} {
    %c0 = arith.constant 0 : index
    %c0_0 = arith.constant 0 : index
    %0 = vector.load %arg1[%c0, %c0_0] : memref<8x128xf32, #tpu.memory_space<vmem>>, vector<8x128xf32>
    %c0_1 = arith.constant 0 : index
    %c0_2 = arith.constant 0 : index
    %1 = vector.load %arg2[%c0_1, %c0_2] : memref<8x128xf32, #tpu.memory_space<vmem>>, vector<8x128xf32>
    %2 = arith.addf %0, %1 : vector<8x128xf32>
    %c0_3 = arith.constant 0 : index
    %c0_4 = arith.constant 0 : index
    %3 = vector.load %arg3[%c0_3, %c0_4] : memref<1x128xf32, #tpu.memory_space<vmem>>, vector<1x128xf32>
    %c0_5 = arith.constant 0 : index
    %c0_6 = arith.constant 0 : index
    %4 = vector.load %arg4[%c0_5, %c0_6] : memref<1x128xf32, #tpu.memory_space<vmem>>, vector<1x128xf32>
    %cst = arith.constant dense<0.000000e+00> : vector<8xf32>
    %5 = vector.multi_reduction <add>, %2, %cst [1] : vector<8x128xf32> to vector<8xf32>
    %6 = vector.shape_cast %5 : vector<8xf32> to vector<8x1xf32>
    %cst_7 = arith.constant 1.280000e+02 : f32
    %7 = vector.broadcast %cst_7 : f32 to vector<8x1xf32>
    %8 = arith.divf %6, %7 : vector<8x1xf32>
    %9 = vector.broadcast %8 : vector<8x1xf32> to vector<8x128xf32>
    %10 = arith.subf %2, %9 : vector<8x128xf32>
    %11 = arith.mulf %10, %10 : vector<8x128xf32>
    %cst_8 = arith.constant dense<0.000000e+00> : vector<8xf32>
    %12 = vector.multi_reduction <add>, %11, %cst_8 [1] : vector<8x128xf32> to vector<8xf32>
    %13 = vector.shape_cast %12 : vector<8xf32> to vector<8x1xf32>
    %cst_9 = arith.constant 1.280000e+02 : f32
    %14 = vector.broadcast %cst_9 : f32 to vector<8x1xf32>
    %15 = arith.divf %13, %14 : vector<8x1xf32>
    %cst_10 = arith.constant 9.99999974E-6 : f32
    %16 = vector.broadcast %cst_10 : f32 to vector<8x1xf32>
    %17 = arith.addf %15, %16 : vector<8x1xf32>
    %18 = math.rsqrt %17 : vector<8x1xf32>
    %19 = vector.broadcast %18 : vector<8x1xf32> to vector<8x128xf32>
    %20 = arith.mulf %10, %19 : vector<8x128xf32>
    %21 = vector.broadcast %3 : vector<1x128xf32> to vector<8x128xf32>
    %22 = arith.mulf %20, %21 : vector<8x128xf32>
    %23 = vector.broadcast %4 : vector<1x128xf32> to vector<8x128xf32>
    %24 = arith.addf %22, %23 : vector<8x128xf32>
    %25 = arith.truncf %24 : vector<8x128xf32> to vector<8x128xbf16>
    %c0_11 = arith.constant 0 : index
    %c0_12 = arith.constant 0 : index
    %26 = vector.load %arg5[%c0_11, %c0_12] : memref<128x384xbf16, #tpu.memory_space<vmem>>, vector<128x384xbf16>
    %cst_13 = arith.constant dense<0.000000e+00> : vector<8x384xf32>
    %27 = tpu.matmul %25, %26, %cst_13 {dimension_numbers = #tpu.dot_dimension_numbers<[1], [0], [0], [1], [0, 0, 1, 1], [], []>} : vector<8x128xbf16>, vector<128x384xbf16>, vector<8x384xf32> -> vector<8x384xf32>
    %c0_14 = arith.constant 0 : index
    %c0_15 = arith.constant 0 : index
    %28 = vector.load %arg6[%c0_14, %c0_15] : memref<1x384xf32, #tpu.memory_space<vmem>>, vector<1x384xf32>
    %29 = vector.broadcast %28 : vector<1x384xf32> to vector<8x384xf32>
    %30 = arith.addf %27, %29 : vector<8x384xf32>
    %31 = tpu.iota {dimensions = array<i32: 0>} : vector<8x8xi32>
    %32 = tpu.iota {dimensions = array<i32: 1>} : vector<8x8xi32>
    %33 = arith.cmpi sgt, %32, %31 : vector<8x8xi32>
    %cst_16 = arith.constant -1.000000e+30 : f32
    %cst_17 = arith.constant 0.000000e+00 : f32
    %34 = vector.broadcast %cst_16 : f32 to vector<8x8xf32>
    %35 = vector.broadcast %cst_17 : f32 to vector<8x8xf32>
    %36 = arith.select %33, %34, %35 : vector<8x8xi1>, vector<8x8xf32>
    %37 = vector.extract_strided_slice %30 {offsets = [0, 0], sizes = [8, 128], strides = [1, 1]} : vector<8x384xf32> to vector<8x128xf32>
    %38 = vector.extract_strided_slice %30 {offsets = [0, 128], sizes = [8, 128], strides = [1, 1]} : vector<8x384xf32> to vector<8x128xf32>
    %39 = vector.extract_strided_slice %30 {offsets = [0, 256], sizes = [8, 128], strides = [1, 1]} : vector<8x384xf32> to vector<8x128xf32>
    %40 = vector.extract_strided_slice %37 {offsets = [0, 0], sizes = [8, 16], strides = [1, 1]} : vector<8x128xf32> to vector<8x16xf32>
    %41 = arith.truncf %40 : vector<8x16xf32> to vector<8x16xbf16>
    %42 = vector.extract_strided_slice %38 {offsets = [0, 0], sizes = [8, 16], strides = [1, 1]} : vector<8x128xf32> to vector<8x16xf32>
    %43 = arith.truncf %42 : vector<8x16xf32> to vector<8x16xbf16>
    %44 = vector.extract_strided_slice %39 {offsets = [0, 0], sizes = [8, 16], strides = [1, 1]} : vector<8x128xf32> to vector<8x16xf32>
    %45 = arith.truncf %44 : vector<8x16xf32> to vector<8x16xbf16>
    %cst_18 = arith.constant dense<0.000000e+00> : vector<8x8xf32>
    %46 = tpu.matmul %41, %43, %cst_18 {dimension_numbers = #tpu.dot_dimension_numbers<[1], [1], [0], [0], [0, 0, 1, 0], [], []>} : vector<8x16xbf16>, vector<8x16xbf16>, vector<8x8xf32> -> vector<8x8xf32>
    %47 = arith.addf %46, %36 : vector<8x8xf32>
    %cst_19 = arith.constant dense<0xFF800000> : vector<8xf32>
    %48 = vector.multi_reduction <maximumf>, %47, %cst_19 [1] : vector<8x8xf32> to vector<8xf32>
    %49 = vector.shape_cast %48 : vector<8xf32> to vector<8x1xf32>
    %50 = vector.broadcast %49 : vector<8x1xf32> to vector<8x8xf32>
    %51 = arith.subf %47, %50 : vector<8x8xf32>
    %52 = math.exp %51 : vector<8x8xf32>
    %cst_20 = arith.constant dense<0.000000e+00> : vector<8xf32>
    %53 = vector.multi_reduction <add>, %52, %cst_20 [1] : vector<8x8xf32> to vector<8xf32>
    %54 = vector.shape_cast %53 : vector<8xf32> to vector<8x1xf32>
    %55 = tpu.reciprocal %54 {approx = true} : vector<8x1xf32> -> vector<8x1xf32>
    %56 = vector.broadcast %55 : vector<8x1xf32> to vector<8x8xf32>
    %57 = arith.mulf %52, %56 : vector<8x8xf32>
    %58 = arith.truncf %57 : vector<8x8xf32> to vector<8x8xbf16>
    %cst_21 = arith.constant dense<0.000000e+00> : vector<8x16xf32>
    %59 = tpu.matmul %58, %45, %cst_21 {dimension_numbers = #tpu.dot_dimension_numbers<[1], [0], [0], [1], [0, 0, 1, 1], [], []>} : vector<8x8xbf16>, vector<8x16xbf16>, vector<8x16xf32> -> vector<8x16xf32>
    %60 = arith.truncf %59 : vector<8x16xf32> to vector<8x16xbf16>
    %c0_22 = arith.constant 0 : index
    %c0_23 = arith.constant 0 : index
    %61 = vector.load %arg7[%c0_22, %c0_23] : memref<128x128xbf16, #tpu.memory_space<vmem>>, vector<16x128xbf16>
    %cst_24 = arith.constant dense<0.000000e+00> : vector<8x128xf32>
    %62 = tpu.matmul %60, %61, %cst_24 {dimension_numbers = #tpu.dot_dimension_numbers<[1], [0], [0], [1], [0, 0, 1, 1], [], []>} : vector<8x16xbf16>, vector<16x128xbf16>, vector<8x128xf32> -> vector<8x128xf32>
    %63 = vector.extract_strided_slice %37 {offsets = [0, 16], sizes = [8, 16], strides = [1, 1]} : vector<8x128xf32> to vector<8x16xf32>
    %64 = arith.truncf %63 : vector<8x16xf32> to vector<8x16xbf16>
    %65 = vector.extract_strided_slice %38 {offsets = [0, 16], sizes = [8, 16], strides = [1, 1]} : vector<8x128xf32> to vector<8x16xf32>
    %66 = arith.truncf %65 : vector<8x16xf32> to vector<8x16xbf16>
    %67 = vector.extract_strided_slice %39 {offsets = [0, 16], sizes = [8, 16], strides = [1, 1]} : vector<8x128xf32> to vector<8x16xf32>
    %68 = arith.truncf %67 : vector<8x16xf32> to vector<8x16xbf16>
    %cst_25 = arith.constant dense<0.000000e+00> : vector<8x8xf32>
    %69 = tpu.matmul %64, %66, %cst_25 {dimension_numbers = #tpu.dot_dimension_numbers<[1], [1], [0], [0], [0, 0, 1, 0], [], []>} : vector<8x16xbf16>, vector<8x16xbf16>, vector<8x8xf32> -> vector<8x8xf32>
    %70 = arith.addf %69, %36 : vector<8x8xf32>
    %cst_26 = arith.constant dense<0xFF800000> : vector<8xf32>
    %71 = vector.multi_reduction <maximumf>, %70, %cst_26 [1] : vector<8x8xf32> to vector<8xf32>
    %72 = vector.shape_cast %71 : vector<8xf32> to vector<8x1xf32>
    %73 = vector.broadcast %72 : vector<8x1xf32> to vector<8x8xf32>
    %74 = arith.subf %70, %73 : vector<8x8xf32>
    %75 = math.exp %74 : vector<8x8xf32>
    %cst_27 = arith.constant dense<0.000000e+00> : vector<8xf32>
    %76 = vector.multi_reduction <add>, %75, %cst_27 [1] : vector<8x8xf32> to vector<8xf32>
    %77 = vector.shape_cast %76 : vector<8xf32> to vector<8x1xf32>
    %78 = tpu.reciprocal %77 {approx = true} : vector<8x1xf32> -> vector<8x1xf32>
    %79 = vector.broadcast %78 : vector<8x1xf32> to vector<8x8xf32>
    %80 = arith.mulf %75, %79 : vector<8x8xf32>
    %81 = arith.truncf %80 : vector<8x8xf32> to vector<8x8xbf16>
    %cst_28 = arith.constant dense<0.000000e+00> : vector<8x16xf32>
    %82 = tpu.matmul %81, %68, %cst_28 {dimension_numbers = #tpu.dot_dimension_numbers<[1], [0], [0], [1], [0, 0, 1, 1], [], []>} : vector<8x8xbf16>, vector<8x16xbf16>, vector<8x16xf32> -> vector<8x16xf32>
    %83 = arith.truncf %82 : vector<8x16xf32> to vector<8x16xbf16>
    %c16 = arith.constant 16 : index
    %c0_29 = arith.constant 0 : index
    %84 = vector.load %arg7[%c16, %c0_29] : memref<128x128xbf16, #tpu.memory_space<vmem>>, vector<16x128xbf16>
    %cst_30 = arith.constant dense<0.000000e+00> : vector<8x128xf32>
    %85 = tpu.matmul %83, %84, %cst_30 {dimension_numbers = #tpu.dot_dimension_numbers<[1], [0], [0], [1], [0, 0, 1, 1], [], []>} : vector<8x16xbf16>, vector<16x128xbf16>, vector<8x128xf32> -> vector<8x128xf32>
    %86 = arith.addf %62, %85 : vector<8x128xf32>
    %87 = vector.extract_strided_slice %37 {offsets = [0, 32], sizes = [8, 16], strides = [1, 1]} : vector<8x128xf32> to vector<8x16xf32>
    %88 = arith.truncf %87 : vector<8x16xf32> to vector<8x16xbf16>
    %89 = vector.extract_strided_slice %38 {offsets = [0, 32], sizes = [8, 16], strides = [1, 1]} : vector<8x128xf32> to vector<8x16xf32>
    %90 = arith.truncf %89 : vector<8x16xf32> to vector<8x16xbf16>
    %91 = vector.extract_strided_slice %39 {offsets = [0, 32], sizes = [8, 16], strides = [1, 1]} : vector<8x128xf32> to vector<8x16xf32>
    %92 = arith.truncf %91 : vector<8x16xf32> to vector<8x16xbf16>
    %cst_31 = arith.constant dense<0.000000e+00> : vector<8x8xf32>
    %93 = tpu.matmul %88, %90, %cst_31 {dimension_numbers = #tpu.dot_dimension_numbers<[1], [1], [0], [0], [0, 0, 1, 0], [], []>} : vector<8x16xbf16>, vector<8x16xbf16>, vector<8x8xf32> -> vector<8x8xf32>
    %94 = arith.addf %93, %36 : vector<8x8xf32>
    %cst_32 = arith.constant dense<0xFF800000> : vector<8xf32>
    %95 = vector.multi_reduction <maximumf>, %94, %cst_32 [1] : vector<8x8xf32> to vector<8xf32>
    %96 = vector.shape_cast %95 : vector<8xf32> to vector<8x1xf32>
    %97 = vector.broadcast %96 : vector<8x1xf32> to vector<8x8xf32>
    %98 = arith.subf %94, %97 : vector<8x8xf32>
    %99 = math.exp %98 : vector<8x8xf32>
    %cst_33 = arith.constant dense<0.000000e+00> : vector<8xf32>
    %100 = vector.multi_reduction <add>, %99, %cst_33 [1] : vector<8x8xf32> to vector<8xf32>
    %101 = vector.shape_cast %100 : vector<8xf32> to vector<8x1xf32>
    %102 = tpu.reciprocal %101 {approx = true} : vector<8x1xf32> -> vector<8x1xf32>
    %103 = vector.broadcast %102 : vector<8x1xf32> to vector<8x8xf32>
    %104 = arith.mulf %99, %103 : vector<8x8xf32>
    %105 = arith.truncf %104 : vector<8x8xf32> to vector<8x8xbf16>
    %cst_34 = arith.constant dense<0.000000e+00> : vector<8x16xf32>
    %106 = tpu.matmul %105, %92, %cst_34 {dimension_numbers = #tpu.dot_dimension_numbers<[1], [0], [0], [1], [0, 0, 1, 1], [], []>} : vector<8x8xbf16>, vector<8x16xbf16>, vector<8x16xf32> -> vector<8x16xf32>
    %107 = arith.truncf %106 : vector<8x16xf32> to vector<8x16xbf16>
    %c32 = arith.constant 32 : index
    %c0_35 = arith.constant 0 : index
    %108 = vector.load %arg7[%c32, %c0_35] : memref<128x128xbf16, #tpu.memory_space<vmem>>, vector<16x128xbf16>
    %cst_36 = arith.constant dense<0.000000e+00> : vector<8x128xf32>
    %109 = tpu.matmul %107, %108, %cst_36 {dimension_numbers = #tpu.dot_dimension_numbers<[1], [0], [0], [1], [0, 0, 1, 1], [], []>} : vector<8x16xbf16>, vector<16x128xbf16>, vector<8x128xf32> -> vector<8x128xf32>
    %110 = arith.addf %86, %109 : vector<8x128xf32>
    %111 = vector.extract_strided_slice %37 {offsets = [0, 48], sizes = [8, 16], strides = [1, 1]} : vector<8x128xf32> to vector<8x16xf32>
    %112 = arith.truncf %111 : vector<8x16xf32> to vector<8x16xbf16>
    %113 = vector.extract_strided_slice %38 {offsets = [0, 48], sizes = [8, 16], strides = [1, 1]} : vector<8x128xf32> to vector<8x16xf32>
    %114 = arith.truncf %113 : vector<8x16xf32> to vector<8x16xbf16>
    %115 = vector.extract_strided_slice %39 {offsets = [0, 48], sizes = [8, 16], strides = [1, 1]} : vector<8x128xf32> to vector<8x16xf32>
    %116 = arith.truncf %115 : vector<8x16xf32> to vector<8x16xbf16>
    %cst_37 = arith.constant dense<0.000000e+00> : vector<8x8xf32>
    %117 = tpu.matmul %112, %114, %cst_37 {dimension_numbers = #tpu.dot_dimension_numbers<[1], [1], [0], [0], [0, 0, 1, 0], [], []>} : vector<8x16xbf16>, vector<8x16xbf16>, vector<8x8xf32> -> vector<8x8xf32>
    %118 = arith.addf %117, %36 : vector<8x8xf32>
    %cst_38 = arith.constant dense<0xFF800000> : vector<8xf32>
    %119 = vector.multi_reduction <maximumf>, %118, %cst_38 [1] : vector<8x8xf32> to vector<8xf32>
    %120 = vector.shape_cast %119 : vector<8xf32> to vector<8x1xf32>
    %121 = vector.broadcast %120 : vector<8x1xf32> to vector<8x8xf32>
    %122 = arith.subf %118, %121 : vector<8x8xf32>
    %123 = math.exp %122 : vector<8x8xf32>
    %cst_39 = arith.constant dense<0.000000e+00> : vector<8xf32>
    %124 = vector.multi_reduction <add>, %123, %cst_39 [1] : vector<8x8xf32> to vector<8xf32>
    %125 = vector.shape_cast %124 : vector<8xf32> to vector<8x1xf32>
    %126 = tpu.reciprocal %125 {approx = true} : vector<8x1xf32> -> vector<8x1xf32>
    %127 = vector.broadcast %126 : vector<8x1xf32> to vector<8x8xf32>
    %128 = arith.mulf %123, %127 : vector<8x8xf32>
    %129 = arith.truncf %128 : vector<8x8xf32> to vector<8x8xbf16>
    %cst_40 = arith.constant dense<0.000000e+00> : vector<8x16xf32>
    %130 = tpu.matmul %129, %116, %cst_40 {dimension_numbers = #tpu.dot_dimension_numbers<[1], [0], [0], [1], [0, 0, 1, 1], [], []>} : vector<8x8xbf16>, vector<8x16xbf16>, vector<8x16xf32> -> vector<8x16xf32>
    %131 = arith.truncf %130 : vector<8x16xf32> to vector<8x16xbf16>
    %c48 = arith.constant 48 : index
    %c0_41 = arith.constant 0 : index
    %132 = vector.load %arg7[%c48, %c0_41] : memref<128x128xbf16, #tpu.memory_space<vmem>>, vector<16x128xbf16>
    %cst_42 = arith.constant dense<0.000000e+00> : vector<8x128xf32>
    %133 = tpu.matmul %131, %132, %cst_42 {dimension_numbers = #tpu.dot_dimension_numbers<[1], [0], [0], [1], [0, 0, 1, 1], [], []>} : vector<8x16xbf16>, vector<16x128xbf16>, vector<8x128xf32> -> vector<8x128xf32>
    %134 = arith.addf %110, %133 : vector<8x128xf32>
    %135 = vector.extract_strided_slice %37 {offsets = [0, 64], sizes = [8, 16], strides = [1, 1]} : vector<8x128xf32> to vector<8x16xf32>
    %136 = arith.truncf %135 : vector<8x16xf32> to vector<8x16xbf16>
    %137 = vector.extract_strided_slice %38 {offsets = [0, 64], sizes = [8, 16], strides = [1, 1]} : vector<8x128xf32> to vector<8x16xf32>
    %138 = arith.truncf %137 : vector<8x16xf32> to vector<8x16xbf16>
    %139 = vector.extract_strided_slice %39 {offsets = [0, 64], sizes = [8, 16], strides = [1, 1]} : vector<8x128xf32> to vector<8x16xf32>
    %140 = arith.truncf %139 : vector<8x16xf32> to vector<8x16xbf16>
    %cst_43 = arith.constant dense<0.000000e+00> : vector<8x8xf32>
    %141 = tpu.matmul %136, %138, %cst_43 {dimension_numbers = #tpu.dot_dimension_numbers<[1], [1], [0], [0], [0, 0, 1, 0], [], []>} : vector<8x16xbf16>, vector<8x16xbf16>, vector<8x8xf32> -> vector<8x8xf32>
    %142 = arith.addf %141, %36 : vector<8x8xf32>
    %cst_44 = arith.constant dense<0xFF800000> : vector<8xf32>
    %143 = vector.multi_reduction <maximumf>, %142, %cst_44 [1] : vector<8x8xf32> to vector<8xf32>
    %144 = vector.shape_cast %143 : vector<8xf32> to vector<8x1xf32>
    %145 = vector.broadcast %144 : vector<8x1xf32> to vector<8x8xf32>
    %146 = arith.subf %142, %145 : vector<8x8xf32>
    %147 = math.exp %146 : vector<8x8xf32>
    %cst_45 = arith.constant dense<0.000000e+00> : vector<8xf32>
    %148 = vector.multi_reduction <add>, %147, %cst_45 [1] : vector<8x8xf32> to vector<8xf32>
    %149 = vector.shape_cast %148 : vector<8xf32> to vector<8x1xf32>
    %150 = tpu.reciprocal %149 {approx = true} : vector<8x1xf32> -> vector<8x1xf32>
    %151 = vector.broadcast %150 : vector<8x1xf32> to vector<8x8xf32>
    %152 = arith.mulf %147, %151 : vector<8x8xf32>
    %153 = arith.truncf %152 : vector<8x8xf32> to vector<8x8xbf16>
    %cst_46 = arith.constant dense<0.000000e+00> : vector<8x16xf32>
    %154 = tpu.matmul %153, %140, %cst_46 {dimension_numbers = #tpu.dot_dimension_numbers<[1], [0], [0], [1], [0, 0, 1, 1], [], []>} : vector<8x8xbf16>, vector<8x16xbf16>, vector<8x16xf32> -> vector<8x16xf32>
    %155 = arith.truncf %154 : vector<8x16xf32> to vector<8x16xbf16>
    %c64 = arith.constant 64 : index
    %c0_47 = arith.constant 0 : index
    %156 = vector.load %arg7[%c64, %c0_47] : memref<128x128xbf16, #tpu.memory_space<vmem>>, vector<16x128xbf16>
    %cst_48 = arith.constant dense<0.000000e+00> : vector<8x128xf32>
    %157 = tpu.matmul %155, %156, %cst_48 {dimension_numbers = #tpu.dot_dimension_numbers<[1], [0], [0], [1], [0, 0, 1, 1], [], []>} : vector<8x16xbf16>, vector<16x128xbf16>, vector<8x128xf32> -> vector<8x128xf32>
    %158 = arith.addf %134, %157 : vector<8x128xf32>
    %159 = vector.extract_strided_slice %37 {offsets = [0, 80], sizes = [8, 16], strides = [1, 1]} : vector<8x128xf32> to vector<8x16xf32>
    %160 = arith.truncf %159 : vector<8x16xf32> to vector<8x16xbf16>
    %161 = vector.extract_strided_slice %38 {offsets = [0, 80], sizes = [8, 16], strides = [1, 1]} : vector<8x128xf32> to vector<8x16xf32>
    %162 = arith.truncf %161 : vector<8x16xf32> to vector<8x16xbf16>
    %163 = vector.extract_strided_slice %39 {offsets = [0, 80], sizes = [8, 16], strides = [1, 1]} : vector<8x128xf32> to vector<8x16xf32>
    %164 = arith.truncf %163 : vector<8x16xf32> to vector<8x16xbf16>
    %cst_49 = arith.constant dense<0.000000e+00> : vector<8x8xf32>
    %165 = tpu.matmul %160, %162, %cst_49 {dimension_numbers = #tpu.dot_dimension_numbers<[1], [1], [0], [0], [0, 0, 1, 0], [], []>} : vector<8x16xbf16>, vector<8x16xbf16>, vector<8x8xf32> -> vector<8x8xf32>
    %166 = arith.addf %165, %36 : vector<8x8xf32>
    %cst_50 = arith.constant dense<0xFF800000> : vector<8xf32>
    %167 = vector.multi_reduction <maximumf>, %166, %cst_50 [1] : vector<8x8xf32> to vector<8xf32>
    %168 = vector.shape_cast %167 : vector<8xf32> to vector<8x1xf32>
    %169 = vector.broadcast %168 : vector<8x1xf32> to vector<8x8xf32>
    %170 = arith.subf %166, %169 : vector<8x8xf32>
    %171 = math.exp %170 : vector<8x8xf32>
    %cst_51 = arith.constant dense<0.000000e+00> : vector<8xf32>
    %172 = vector.multi_reduction <add>, %171, %cst_51 [1] : vector<8x8xf32> to vector<8xf32>
    %173 = vector.shape_cast %172 : vector<8xf32> to vector<8x1xf32>
    %174 = tpu.reciprocal %173 {approx = true} : vector<8x1xf32> -> vector<8x1xf32>
    %175 = vector.broadcast %174 : vector<8x1xf32> to vector<8x8xf32>
    %176 = arith.mulf %171, %175 : vector<8x8xf32>
    %177 = arith.truncf %176 : vector<8x8xf32> to vector<8x8xbf16>
    %cst_52 = arith.constant dense<0.000000e+00> : vector<8x16xf32>
    %178 = tpu.matmul %177, %164, %cst_52 {dimension_numbers = #tpu.dot_dimension_numbers<[1], [0], [0], [1], [0, 0, 1, 1], [], []>} : vector<8x8xbf16>, vector<8x16xbf16>, vector<8x16xf32> -> vector<8x16xf32>
    %179 = arith.truncf %178 : vector<8x16xf32> to vector<8x16xbf16>
    %c80 = arith.constant 80 : index
    %c0_53 = arith.constant 0 : index
    %180 = vector.load %arg7[%c80, %c0_53] : memref<128x128xbf16, #tpu.memory_space<vmem>>, vector<16x128xbf16>
    %cst_54 = arith.constant dense<0.000000e+00> : vector<8x128xf32>
    %181 = tpu.matmul %179, %180, %cst_54 {dimension_numbers = #tpu.dot_dimension_numbers<[1], [0], [0], [1], [0, 0, 1, 1], [], []>} : vector<8x16xbf16>, vector<16x128xbf16>, vector<8x128xf32> -> vector<8x128xf32>
    %182 = arith.addf %158, %181 : vector<8x128xf32>
    %183 = vector.extract_strided_slice %37 {offsets = [0, 96], sizes = [8, 16], strides = [1, 1]} : vector<8x128xf32> to vector<8x16xf32>
    %184 = arith.truncf %183 : vector<8x16xf32> to vector<8x16xbf16>
    %185 = vector.extract_strided_slice %38 {offsets = [0, 96], sizes = [8, 16], strides = [1, 1]} : vector<8x128xf32> to vector<8x16xf32>
    %186 = arith.truncf %185 : vector<8x16xf32> to vector<8x16xbf16>
    %187 = vector.extract_strided_slice %39 {offsets = [0, 96], sizes = [8, 16], strides = [1, 1]} : vector<8x128xf32> to vector<8x16xf32>
    %188 = arith.truncf %187 : vector<8x16xf32> to vector<8x16xbf16>
    %cst_55 = arith.constant dense<0.000000e+00> : vector<8x8xf32>
    %189 = tpu.matmul %184, %186, %cst_55 {dimension_numbers = #tpu.dot_dimension_numbers<[1], [1], [0], [0], [0, 0, 1, 0], [], []>} : vector<8x16xbf16>, vector<8x16xbf16>, vector<8x8xf32> -> vector<8x8xf32>
    %190 = arith.addf %189, %36 : vector<8x8xf32>
    %cst_56 = arith.constant dense<0xFF800000> : vector<8xf32>
    %191 = vector.multi_reduction <maximumf>, %190, %cst_56 [1] : vector<8x8xf32> to vector<8xf32>
    %192 = vector.shape_cast %191 : vector<8xf32> to vector<8x1xf32>
    %193 = vector.broadcast %192 : vector<8x1xf32> to vector<8x8xf32>
    %194 = arith.subf %190, %193 : vector<8x8xf32>
    %195 = math.exp %194 : vector<8x8xf32>
    %cst_57 = arith.constant dense<0.000000e+00> : vector<8xf32>
    %196 = vector.multi_reduction <add>, %195, %cst_57 [1] : vector<8x8xf32> to vector<8xf32>
    %197 = vector.shape_cast %196 : vector<8xf32> to vector<8x1xf32>
    %198 = tpu.reciprocal %197 {approx = true} : vector<8x1xf32> -> vector<8x1xf32>
    %199 = vector.broadcast %198 : vector<8x1xf32> to vector<8x8xf32>
    %200 = arith.mulf %195, %199 : vector<8x8xf32>
    %201 = arith.truncf %200 : vector<8x8xf32> to vector<8x8xbf16>
    %cst_58 = arith.constant dense<0.000000e+00> : vector<8x16xf32>
    %202 = tpu.matmul %201, %188, %cst_58 {dimension_numbers = #tpu.dot_dimension_numbers<[1], [0], [0], [1], [0, 0, 1, 1], [], []>} : vector<8x8xbf16>, vector<8x16xbf16>, vector<8x16xf32> -> vector<8x16xf32>
    %203 = arith.truncf %202 : vector<8x16xf32> to vector<8x16xbf16>
    %c96 = arith.constant 96 : index
    %c0_59 = arith.constant 0 : index
    %204 = vector.load %arg7[%c96, %c0_59] : memref<128x128xbf16, #tpu.memory_space<vmem>>, vector<16x128xbf16>
    %cst_60 = arith.constant dense<0.000000e+00> : vector<8x128xf32>
    %205 = tpu.matmul %203, %204, %cst_60 {dimension_numbers = #tpu.dot_dimension_numbers<[1], [0], [0], [1], [0, 0, 1, 1], [], []>} : vector<8x16xbf16>, vector<16x128xbf16>, vector<8x128xf32> -> vector<8x128xf32>
    %206 = arith.addf %182, %205 : vector<8x128xf32>
    %207 = vector.extract_strided_slice %37 {offsets = [0, 112], sizes = [8, 16], strides = [1, 1]} : vector<8x128xf32> to vector<8x16xf32>
    %208 = arith.truncf %207 : vector<8x16xf32> to vector<8x16xbf16>
    %209 = vector.extract_strided_slice %38 {offsets = [0, 112], sizes = [8, 16], strides = [1, 1]} : vector<8x128xf32> to vector<8x16xf32>
    %210 = arith.truncf %209 : vector<8x16xf32> to vector<8x16xbf16>
    %211 = vector.extract_strided_slice %39 {offsets = [0, 112], sizes = [8, 16], strides = [1, 1]} : vector<8x128xf32> to vector<8x16xf32>
    %212 = arith.truncf %211 : vector<8x16xf32> to vector<8x16xbf16>
    %cst_61 = arith.constant dense<0.000000e+00> : vector<8x8xf32>
    %213 = tpu.matmul %208, %210, %cst_61 {dimension_numbers = #tpu.dot_dimension_numbers<[1], [1], [0], [0], [0, 0, 1, 0], [], []>} : vector<8x16xbf16>, vector<8x16xbf16>, vector<8x8xf32> -> vector<8x8xf32>
    %214 = arith.addf %213, %36 : vector<8x8xf32>
    %cst_62 = arith.constant dense<0xFF800000> : vector<8xf32>
    %215 = vector.multi_reduction <maximumf>, %214, %cst_62 [1] : vector<8x8xf32> to vector<8xf32>
    %216 = vector.shape_cast %215 : vector<8xf32> to vector<8x1xf32>
    %217 = vector.broadcast %216 : vector<8x1xf32> to vector<8x8xf32>
    %218 = arith.subf %214, %217 : vector<8x8xf32>
    %219 = math.exp %218 : vector<8x8xf32>
    %cst_63 = arith.constant dense<0.000000e+00> : vector<8xf32>
    %220 = vector.multi_reduction <add>, %219, %cst_63 [1] : vector<8x8xf32> to vector<8xf32>
    %221 = vector.shape_cast %220 : vector<8xf32> to vector<8x1xf32>
    %222 = tpu.reciprocal %221 {approx = true} : vector<8x1xf32> -> vector<8x1xf32>
    %223 = vector.broadcast %222 : vector<8x1xf32> to vector<8x8xf32>
    %224 = arith.mulf %219, %223 : vector<8x8xf32>
    %225 = arith.truncf %224 : vector<8x8xf32> to vector<8x8xbf16>
    %cst_64 = arith.constant dense<0.000000e+00> : vector<8x16xf32>
    %226 = tpu.matmul %225, %212, %cst_64 {dimension_numbers = #tpu.dot_dimension_numbers<[1], [0], [0], [1], [0, 0, 1, 1], [], []>} : vector<8x8xbf16>, vector<8x16xbf16>, vector<8x16xf32> -> vector<8x16xf32>
    %227 = arith.truncf %226 : vector<8x16xf32> to vector<8x16xbf16>
    %c112 = arith.constant 112 : index
    %c0_65 = arith.constant 0 : index
    %228 = vector.load %arg7[%c112, %c0_65] : memref<128x128xbf16, #tpu.memory_space<vmem>>, vector<16x128xbf16>
    %cst_66 = arith.constant dense<0.000000e+00> : vector<8x128xf32>
    %229 = tpu.matmul %227, %228, %cst_66 {dimension_numbers = #tpu.dot_dimension_numbers<[1], [0], [0], [1], [0, 0, 1, 1], [], []>} : vector<8x16xbf16>, vector<16x128xbf16>, vector<8x128xf32> -> vector<8x128xf32>
    %230 = arith.addf %206, %229 : vector<8x128xf32>
    %c0_67 = arith.constant 0 : index
    %c0_68 = arith.constant 0 : index
    %231 = vector.load %arg8[%c0_67, %c0_68] : memref<1x128xf32, #tpu.memory_space<vmem>>, vector<1x128xf32>
    %232 = vector.broadcast %231 : vector<1x128xf32> to vector<8x128xf32>
    %233 = arith.addf %230, %232 : vector<8x128xf32>
    %234 = arith.addf %2, %233 : vector<8x128xf32>
    %c0_69 = arith.constant 0 : index
    %c0_70 = arith.constant 0 : index
    %235 = vector.load %arg9[%c0_69, %c0_70] : memref<1x128xf32, #tpu.memory_space<vmem>>, vector<1x128xf32>
    %c0_71 = arith.constant 0 : index
    %c0_72 = arith.constant 0 : index
    %236 = vector.load %arg10[%c0_71, %c0_72] : memref<1x128xf32, #tpu.memory_space<vmem>>, vector<1x128xf32>
    %cst_73 = arith.constant dense<0.000000e+00> : vector<8xf32>
    %237 = vector.multi_reduction <add>, %234, %cst_73 [1] : vector<8x128xf32> to vector<8xf32>
    %238 = vector.shape_cast %237 : vector<8xf32> to vector<8x1xf32>
    %cst_74 = arith.constant 1.280000e+02 : f32
    %239 = vector.broadcast %cst_74 : f32 to vector<8x1xf32>
    %240 = arith.divf %238, %239 : vector<8x1xf32>
    %241 = vector.broadcast %240 : vector<8x1xf32> to vector<8x128xf32>
    %242 = arith.subf %234, %241 : vector<8x128xf32>
    %243 = arith.mulf %242, %242 : vector<8x128xf32>
    %cst_75 = arith.constant dense<0.000000e+00> : vector<8xf32>
    %244 = vector.multi_reduction <add>, %243, %cst_75 [1] : vector<8x128xf32> to vector<8xf32>
    %245 = vector.shape_cast %244 : vector<8xf32> to vector<8x1xf32>
    %cst_76 = arith.constant 1.280000e+02 : f32
    %246 = vector.broadcast %cst_76 : f32 to vector<8x1xf32>
    %247 = arith.divf %245, %246 : vector<8x1xf32>
    %cst_77 = arith.constant 9.99999974E-6 : f32
    %248 = vector.broadcast %cst_77 : f32 to vector<8x1xf32>
    %249 = arith.addf %247, %248 : vector<8x1xf32>
    %250 = math.rsqrt %249 : vector<8x1xf32>
    %251 = vector.broadcast %250 : vector<8x1xf32> to vector<8x128xf32>
    %252 = arith.mulf %242, %251 : vector<8x128xf32>
    %253 = vector.broadcast %235 : vector<1x128xf32> to vector<8x128xf32>
    %254 = arith.mulf %252, %253 : vector<8x128xf32>
    %255 = vector.broadcast %236 : vector<1x128xf32> to vector<8x128xf32>
    %256 = arith.addf %254, %255 : vector<8x128xf32>
    %257 = arith.truncf %256 : vector<8x128xf32> to vector<8x128xbf16>
    %c0_78 = arith.constant 0 : index
    %c0_79 = arith.constant 0 : index
    %258 = vector.load %arg11[%c0_78, %c0_79] : memref<128x512xbf16, #tpu.memory_space<vmem>>, vector<128x512xbf16>
    %cst_80 = arith.constant dense<0.000000e+00> : vector<8x512xf32>
    %259 = tpu.matmul %257, %258, %cst_80 {dimension_numbers = #tpu.dot_dimension_numbers<[1], [0], [0], [1], [0, 0, 1, 1], [], []>} : vector<8x128xbf16>, vector<128x512xbf16>, vector<8x512xf32> -> vector<8x512xf32>
    %c0_81 = arith.constant 0 : index
    %c0_82 = arith.constant 0 : index
    %260 = vector.load %arg12[%c0_81, %c0_82] : memref<1x512xf32, #tpu.memory_space<vmem>>, vector<1x512xf32>
    %261 = vector.broadcast %260 : vector<1x512xf32> to vector<8x512xf32>
    %262 = arith.addf %259, %261 : vector<8x512xf32>
    %cst_83 = arith.constant 0.707106769 : f32
    %263 = vector.broadcast %cst_83 : f32 to vector<8x512xf32>
    %264 = arith.mulf %262, %263 : vector<8x512xf32>
    %cst_84 = arith.constant 0.000000e+00 : f32
    %265 = vector.broadcast %cst_84 : f32 to vector<8x512xf32>
    %266 = arith.cmpf oge, %264, %265 : vector<8x512xf32>
    %cst_85 = arith.constant 1.000000e+00 : f32
    %cst_86 = arith.constant -1.000000e+00 : f32
    %267 = vector.broadcast %cst_85 : f32 to vector<8x512xf32>
    %268 = vector.broadcast %cst_86 : f32 to vector<8x512xf32>
    %269 = arith.select %266, %267, %268 : vector<8x512xi1>, vector<8x512xf32>
    %270 = math.absf %264 : vector<8x512xf32>
    %cst_87 = arith.constant 0.327591091 : f32
    %271 = vector.broadcast %cst_87 : f32 to vector<8x512xf32>
    %272 = arith.mulf %271, %270 : vector<8x512xf32>
    %cst_88 = arith.constant 1.000000e+00 : f32
    %273 = vector.broadcast %cst_88 : f32 to vector<8x512xf32>
    %274 = arith.addf %273, %272 : vector<8x512xf32>
    %275 = tpu.reciprocal %274 {approx = true} : vector<8x512xf32> -> vector<8x512xf32>
    %cst_89 = arith.constant 1.06140542 : f32
    %276 = vector.broadcast %cst_89 : f32 to vector<8x512xf32>
    %277 = arith.mulf %276, %275 : vector<8x512xf32>
    %cst_90 = arith.constant 1.45315206 : f32
    %278 = vector.broadcast %cst_90 : f32 to vector<8x512xf32>
    %279 = arith.subf %277, %278 : vector<8x512xf32>
    %280 = arith.mulf %279, %275 : vector<8x512xf32>
    %cst_91 = arith.constant 1.42141378 : f32
    %281 = vector.broadcast %cst_91 : f32 to vector<8x512xf32>
    %282 = arith.addf %280, %281 : vector<8x512xf32>
    %283 = arith.mulf %282, %275 : vector<8x512xf32>
    %cst_92 = arith.constant 0.284496725 : f32
    %284 = vector.broadcast %cst_92 : f32 to vector<8x512xf32>
    %285 = arith.subf %283, %284 : vector<8x512xf32>
    %286 = arith.mulf %285, %275 : vector<8x512xf32>
    %cst_93 = arith.constant 0.254829586 : f32
    %287 = vector.broadcast %cst_93 : f32 to vector<8x512xf32>
    %288 = arith.addf %286, %287 : vector<8x512xf32>
    %289 = arith.mulf %288, %275 : vector<8x512xf32>
    %cst_94 = arith.constant 0.000000e+00 : f32
    %290 = vector.broadcast %cst_94 : f32 to vector<8x512xf32>
    %291 = arith.subf %290, %270 : vector<8x512xf32>
    %292 = arith.mulf %291, %270 : vector<8x512xf32>
    %293 = math.exp %292 : vector<8x512xf32>
    %294 = arith.mulf %289, %293 : vector<8x512xf32>
    %cst_95 = arith.constant 1.000000e+00 : f32
    %295 = vector.broadcast %cst_95 : f32 to vector<8x512xf32>
    %296 = arith.subf %295, %294 : vector<8x512xf32>
    %297 = arith.mulf %269, %296 : vector<8x512xf32>
    %cst_96 = arith.constant 5.000000e-01 : f32
    %298 = vector.broadcast %cst_96 : f32 to vector<8x512xf32>
    %299 = arith.mulf %298, %262 : vector<8x512xf32>
    %cst_97 = arith.constant 1.000000e+00 : f32
    %300 = vector.broadcast %cst_97 : f32 to vector<8x512xf32>
    %301 = arith.addf %300, %297 : vector<8x512xf32>
    %302 = arith.mulf %299, %301 : vector<8x512xf32>
    %303 = arith.truncf %302 : vector<8x512xf32> to vector<8x512xbf16>
    %c0_98 = arith.constant 0 : index
    %c0_99 = arith.constant 0 : index
    %304 = vector.load %arg13[%c0_98, %c0_99] : memref<512x128xbf16, #tpu.memory_space<vmem>>, vector<512x128xbf16>
    %cst_100 = arith.constant dense<0.000000e+00> : vector<8x128xf32>
    %305 = tpu.matmul %303, %304, %cst_100 {dimension_numbers = #tpu.dot_dimension_numbers<[1], [0], [0], [1], [0, 0, 1, 1], [], []>} : vector<8x512xbf16>, vector<512x128xbf16>, vector<8x128xf32> -> vector<8x128xf32>
    %c0_101 = arith.constant 0 : index
    %c0_102 = arith.constant 0 : index
    %306 = vector.load %arg14[%c0_101, %c0_102] : memref<1x128xf32, #tpu.memory_space<vmem>>, vector<1x128xf32>
    %307 = vector.broadcast %306 : vector<1x128xf32> to vector<8x128xf32>
    %308 = arith.addf %305, %307 : vector<8x128xf32>
    %309 = arith.addf %234, %308 : vector<8x128xf32>
    %c0_103 = arith.constant 0 : index
    %c0_104 = arith.constant 0 : index
    %310 = vector.load %arg15[%c0_103, %c0_104] : memref<8x128xf32, #tpu.memory_space<vmem>>, vector<8x128xf32>
    tpu.vector_store %arg15[%c0_103, %c0_104], %309 {strides = array<i32>} : memref<8x128xf32, #tpu.memory_space<vmem>>, vector<8x128xf32>,
    return
  }
  func.func @transform_0(%arg0: i32) -> (i32, i32) {
    %c0_i32 = arith.constant 0 : i32
    %c0_i32_0 = arith.constant 0 : i32
    return %arg0, %c0_i32 : i32, i32
  }
  func.func @transform_1(%arg0: i32) -> (i32, i32) {
    %c0_i32 = arith.constant 0 : i32
    %c0_i32_0 = arith.constant 0 : i32
    return %arg0, %c0_i32 : i32, i32
  }
  func.func @transform_2(%arg0: i32) -> (i32, i32) {
    %c0_i32 = arith.constant 0 : i32
    %c0_i32_0 = arith.constant 0 : i32
    %c0_i32_1 = arith.constant 0 : i32
    return %c0_i32, %c0_i32_0 : i32, i32
  }
  func.func @transform_3(%arg0: i32) -> (i32, i32) {
    %c0_i32 = arith.constant 0 : i32
    %c0_i32_0 = arith.constant 0 : i32
    %c0_i32_1 = arith.constant 0 : i32
    return %c0_i32, %c0_i32_0 : i32, i32
  }
  func.func @transform_4(%arg0: i32) -> (i32, i32) {
    %c0_i32 = arith.constant 0 : i32
    %c0_i32_0 = arith.constant 0 : i32
    %c0_i32_1 = arith.constant 0 : i32
    return %c0_i32, %c0_i32_0 : i32, i32
  }
  func.func @transform_5(%arg0: i32) -> (i32, i32) {
    %c0_i32 = arith.constant 0 : i32
    %c0_i32_0 = arith.constant 0 : i32
    %c0_i32_1 = arith.constant 0 : i32
    return %c0_i32, %c0_i32_0 : i32, i32
  }
  func.func @transform_6(%arg0: i32) -> (i32, i32) {
    %c0_i32 = arith.constant 0 : i32
    %c0_i32_0 = arith.constant 0 : i32
    %c0_i32_1 = arith.constant 0 : i32
    return %c0_i32, %c0_i32_0 : i32, i32
  }
  func.func @transform_7(%arg0: i32) -> (i32, i32) {
    %c0_i32 = arith.constant 0 : i32
    %c0_i32_0 = arith.constant 0 : i32
    %c0_i32_1 = arith.constant 0 : i32
    return %c0_i32, %c0_i32_0 : i32, i32
  }
  func.func @transform_8(%arg0: i32) -> (i32, i32) {
    %c0_i32 = arith.constant 0 : i32
    %c0_i32_0 = arith.constant 0 : i32
    %c0_i32_1 = arith.constant 0 : i32
    return %c0_i32, %c0_i32_0 : i32, i32
  }
  func.func @transform_9(%arg0: i32) -> (i32, i32) {
    %c0_i32 = arith.constant 0 : i32
    %c0_i32_0 = arith.constant 0 : i32
    %c0_i32_1 = arith.constant 0 : i32
    return %c0_i32, %c0_i32_0 : i32, i32
  }
  func.func @transform_10(%arg0: i32) -> (i32, i32) {
    %c0_i32 = arith.constant 0 : i32
    %c0_i32_0 = arith.constant 0 : i32
    %c0_i32_1 = arith.constant 0 : i32
    return %c0_i32, %c0_i32_0 : i32, i32
  }
  func.func @transform_11(%arg0: i32) -> (i32, i32) {
    %c0_i32 = arith.constant 0 : i32
    %c0_i32_0 = arith.constant 0 : i32
    %c0_i32_1 = arith.constant 0 : i32
    return %c0_i32, %c0_i32_0 : i32, i32
  }
  func.func @transform_12(%arg0: i32) -> (i32, i32) {
    %c0_i32 = arith.constant 0 : i32
    %c0_i32_0 = arith.constant 0 : i32
    %c0_i32_1 = arith.constant 0 : i32
    return %c0_i32, %c0_i32_0 : i32, i32
  }
  func.func @transform_13(%arg0: i32) -> (i32, i32) {
    %c0_i32 = arith.constant 0 : i32
    %c0_i32_0 = arith.constant 0 : i32
    %c0_i32_1 = arith.constant 0 : i32
    return %c0_i32, %c0_i32_0 : i32, i32
  }
  func.func @transform_14(%arg0: i32) -> (i32, i32) {
    %c0_i32 = arith.constant 0 : i32
    %c0_i32_0 = arith.constant 0 : i32
    return %arg0, %c0_i32 : i32, i32
  }
}

</mosaic_0001>

<llo_original>
// kernel: tpu_custom_call.1
$region0: #{tpu_custom_call.1}
  #allocation0 [shape = 'u32[]', space=smem, size = 0x4, offset = 0x4, fixed_abs, tag = 'smem constant byte address 0x4 - core index']
  #allocation1 [shape = 'u32[144,128]{1,0:T(1,128)}', space=vmem, size = 0x12000, scoped, tag = 'internal scratch']
  %s0 = inlined_call_operand.hbm [shape: f32[16,128], index: 0, kind: input, shape index: {}]
  %s1 = inlined_call_operand.hbm [shape: f32[16,128], index: 1, kind: input, shape index: {}]
  %s2 = inlined_call_operand.hbm [shape: f32[1,128], index: 2, kind: input, shape index: {}]
  %s3 = inlined_call_operand.hbm [shape: f32[1,128], index: 3, kind: input, shape index: {}]
  %s4 = inlined_call_operand.hbm [shape: bf16[128,384], index: 4, kind: input, shape index: {}]
  %s5 = inlined_call_operand.vmem [shape: f32[1,384], index: 5, kind: input, shape index: {}]
  %s6 = inlined_call_operand.hbm [shape: bf16[128,128], index: 6, kind: input, shape index: {}]
  %s7 = inlined_call_operand.vmem [shape: f32[1,128], index: 7, kind: input, shape index: {}]
  %s8 = inlined_call_operand.vmem [shape: f32[1,128], index: 8, kind: input, shape index: {}]
  %s9 = inlined_call_operand.vmem [shape: f32[1,128], index: 9, kind: input, shape index: {}]
  %s10 = inlined_call_operand.hbm [shape: bf16[128,512], index: 10, kind: input, shape index: {}]
  %s11 = inlined_call_operand.vmem [shape: f32[1,512], index: 11, kind: input, shape index: {}]
  %s12 = inlined_call_operand.hbm [shape: bf16[512,128], index: 12, kind: input, shape index: {}]
  %s13 = inlined_call_operand.vmem [shape: f32[1,128], index: 13, kind: input, shape index: {}]
  %s14 = inlined_call_operand.hbm [shape: f32[16,128], index: 14, kind: output, shape index: {}]
  %s15 = sld [smem:[#allocation0]]
  $region121: #{tpu_custom_call.1} parent=0
    _
  %s17 = ssub.s32 1, %s15
  %s18 = scalar_select 0, %s17, %s15
  $region1: #{tpu_custom_call.1} parent=0
    #allocation2 [shape = 'u8[8192]{0}', space=vmem, size = 0x2000, scoped, tag = 'input window, operand 0']
    #allocation3 [shape = 's32[2]{0}', space=sflag, size = 0x8, scoped, tag = 'scoped memory for tpu_custom_call.1']
    #allocation4 [shape = 's32[2]{0}', space=sflag, size = 0x8, scoped, tag = 'scoped memory for tpu_custom_call.1']
    #allocation5 [shape = 'u8[8192]{0}', space=vmem, size = 0x2000, scoped, tag = 'input window, operand 1']
    #allocation6 [shape = 's32[2]{0}', space=sflag, size = 0x8, scoped, tag = 'scoped memory for tpu_custom_call.1']
    #allocation7 [shape = 'u8[512]{0}', space=vmem, size = 0x400, scoped, tag = 'input window, operand 2, single buffered']
    #allocation8 [shape = 'u8[512]{0}', space=vmem, size = 0x400, scoped, tag = 'input window, operand 3, single buffered']
    #allocation9 [shape = 's32[1]{0}', space=sflag, size = 0x4, scoped, tag = 'scoped memory for tpu_custom_call.1']
    #allocation10 [shape = 'u8[98304]{0}', space=vmem, size = 0x18000, scoped, tag = 'input window, operand 4, single buffered']
    #allocation11 [shape = 'u8[32768]{0}', space=vmem, size = 0x8000, scoped, tag = 'input window, operand 6, single buffered']
    #allocation12 [shape = 's32[1]{0}', space=sflag, size = 0x4, scoped, tag = 'scoped memory for tpu_custom_call.1']
    #allocation13 [shape = 'u8[131072]{0}', space=vmem, size = 0x20000, scoped, tag = 'input window, operand 10, single buffered']
    #allocation14 [shape = 'u8[131072]{0}', space=vmem, size = 0x20000, scoped, tag = 'input window, operand 12, single buffered']
    #allocation15 [shape = 's32[1]{0}', space=sflag, size = 0x4, scoped, tag = 'scoped memory for tpu_custom_call.1']
    #allocation16 [shape = 'u8[8192]{0}', space=vmem, size = 0x2000, scoped, tag = 'output window, operand 0']
    %19 = vsyncpa [#allocation3], 0
    %s20 = scalar_lea.sflag [#allocation3], 1
    %21 = vsyncpa %s20, 0
    %22 = vsyncpa [#allocation6], 0
    %s23 = scalar_lea.sflag [#allocation6], 1
    %24 = vsyncpa %s23, 0
    %25 = vsyncpa [#allocation9], 0
    %26 = vsyncpa [#allocation12], 0
    %27 = vsyncpa [#allocation15], 0
    %28 = vsyncpa [#allocation4], 0
    %s29 = scalar_lea.sflag [#allocation4], 1
    %30 = vsyncpa %s29, 0
    loop: start=0, step=1, limit=4
    $region2: #{tpu_custom_call.1} parent=1 // loop_pre_header
      _
    $region3: #{tpu_custom_call.1} parent=1 // loop_header
      %s32 = sphi 0, %s36
      %p33 = scmp.ge.s32.totalorder %s32, 4
      %s42 = sphi 0, %s44
      %s45 = sphi 0, %s42
      %s46 = sphi 0, %s45
      %s62 = sphi 0, %s46
      %s68 = sphi 0, %s70
      %s71 = sphi 0, %s68
      %s72 = sphi 0, %s71
      %s88 = sphi 0, %s72
      %s92 = sphi 0, %s92
      %s94 = sphi 0, %s92
      %s95 = sphi 0, %s94
      %s109 = sphi 0, %s95
      %s113 = sphi 0, %s113
      %s115 = sphi 0, %s113
      %s116 = sphi 0, %s115
      %s130 = sphi 0, %s116
      %s134 = sphi 0, %s134
      %s136 = sphi 0, %s134
      %s137 = sphi 0, %s136
      %s151 = sphi 0, %s137
      %s155 = sphi 0, %s155
      %s157 = sphi 0, %s155
      %s158 = sphi 0, %s157
      %s172 = sphi 0, %s158
      %s176 = sphi 0, %s176
      %s178 = sphi 0, %s176
      %s179 = sphi 0, %s178
      %s193 = sphi 0, %s179
      %s197 = sphi 0, %s197
      %s199 = sphi 0, %s197
      %s200 = sphi 0, %s199
      %s214 = sphi 0, %s200
      %s218 = sphi 0, %s218
      %s220 = sphi 0, %s218
      %s221 = sphi 0, %s220
      %s235 = sphi 0, %s221
      %s239 = sphi 0, %s239
      %s241 = sphi 0, %s239
      %s242 = sphi 0, %s241
      %s256 = sphi 0, %s242
      %s260 = sphi 0, %s260
      %s262 = sphi 0, %s260
      %s263 = sphi 0, %s262
      %s277 = sphi 0, %s263
      %s281 = sphi 0, %s281
      %s283 = sphi 0, %s281
      %s284 = sphi 0, %s283
      %s298 = sphi 0, %s284
      %s302 = sphi 0, %s302
      %s304 = sphi 0, %s302
      %s305 = sphi 0, %s304
      %s319 = sphi 0, %s305
      %s323 = sphi 0, %s323
      %s325 = sphi 0, %s323
      %s326 = sphi 0, %s325
      %s340 = sphi 0, %s326
      %s346 = sphi 0, %s348
      %s349 = sphi 0, %s346
      %s350 = sphi 0, %s349
      %s366 = sphi 0, %s350
    $region4: #{tpu_custom_call.1} parent=1 // loop_header_branch
      %35 = sbr.rel (%p33) target = $region8
    $region5: #{tpu_custom_call.1} parent=1 // loop_body
      %s37 = ssub.s32 %s32, 1
      %s38 = ssub.s32 %s32, 2
      %s39 = sadd.s32 %s32, 1
      %s40 = ssub.s32 %s32, %s39
      %p41 = scmp.eq.s32.totalorder %s40, 0
      %s43 = sadd.s32 %s42, 1
      %s44 = scalar_select %p41, %s42, %s43
      %p47 = pneg %p41
      %p48 = scmp.eq.s32.totalorder %s32, 1
      %p49 = por %p47, %p48
      %p50 = scmp.ne.s32.totalorder %s42, %s45
      %p51 = scmp.eq.s32.totalorder %s32, 0
      %p52 = por %p50, %p51
      %p53 = scmp.ne.s32.totalorder %s42, %s45
      %p54 = scmp.eq.s32.totalorder %s37, 1
      %p55 = por %p53, %p54
      %p56 = scmp.ne.s32.totalorder %s45, %s46
      %p57 = scmp.eq.s32.totalorder %s37, 0
      %p58 = por %p56, %p57
      %p59 = scmp.ne.s32.totalorder %s45, %s46
      %p60 = scmp.eq.s32.totalorder %s38, 1
      %p61 = por %p59, %p60
      %p63 = scmp.ne.s32.totalorder %s46, %s62
      %p64 = scmp.eq.s32.totalorder %s38, 0
      %p65 = por %p63, %p64
      %s66 = ssub.s32 %s32, %s39
      %p67 = scmp.eq.s32.totalorder %s66, 0
      %s69 = sadd.s32 %s68, 1
      %s70 = scalar_select %p67, %s68, %s69
      %p73 = pneg %p67
      %p74 = scmp.eq.s32.totalorder %s32, 1
      %p75 = por %p73, %p74
      %p76 = scmp.ne.s32.totalorder %s68, %s71
      %p77 = scmp.eq.s32.totalorder %s32, 0
      %p78 = por %p76, %p77
      %p79 = scmp.ne.s32.totalorder %s68, %s71
      %p80 = scmp.eq.s32.totalorder %s37, 1
      %p81 = por %p79, %p80
      %p82 = scmp.ne.s32.totalorder %s71, %s72
      %p83 = scmp.eq.s32.totalorder %s37, 0
      %p84 = por %p82, %p83
      %p85 = scmp.ne.s32.totalorder %s71, %s72
      %p86 = scmp.eq.s32.totalorder %s38, 1
      %p87 = por %p85, %p86
      %p89 = scmp.ne.s32.totalorder %s72, %s88
      %p90 = scmp.eq.s32.totalorder %s38, 0
      %p91 = por %p89, %p90
      %s93 = sadd.s32 %s92, 1
      %p96 = scmp.eq.s32.totalorder %s32, 1
      %p97 = scmp.ne.s32.totalorder %s92, %s94
      %p98 = scmp.eq.s32.totalorder %s32, 0
      %p99 = por %p97, %p98
      %p100 = scmp.ne.s32.totalorder %s92, %s94
      %p101 = scmp.eq.s32.totalorder %s37, 1
      %p102 = por %p100, %p101
      %p103 = scmp.ne.s32.totalorder %s94, %s95
      %p104 = scmp.eq.s32.totalorder %s37, 0
      %p105 = por %p103, %p104
      %p106 = scmp.ne.s32.totalorder %s94, %s95
      %p107 = scmp.eq.s32.totalorder %s38, 1
      %p108 = por %p106, %p107
      %p110 = scmp.ne.s32.totalorder %s95, %s109
      %p111 = scmp.eq.s32.totalorder %s38, 0
      %p112 = por %p110, %p111
      %s114 = sadd.s32 %s113, 1
      %p117 = scmp.eq.s32.totalorder %s32, 1
      %p118 = scmp.ne.s32.totalorder %s113, %s115
      %p119 = scmp.eq.s32.totalorder %s32, 0
      %p120 = por %p118, %p119
      %p121 = scmp.ne.s32.totalorder %s113, %s115
      %p122 = scmp.eq.s32.totalorder %s37, 1
      %p123 = por %p121, %p122
      %p124 = scmp.ne.s32.totalorder %s115, %s116
      %p125 = scmp.eq.s32.totalorder %s37, 0
      %p126 = por %p124, %p125
      %p127 = scmp.ne.s32.totalorder %s115, %s116
      %p128 = scmp.eq.s32.totalorder %s38, 1
      %p129 = por %p127, %p128
      %p131 = scmp.ne.s32.totalorder %s116, %s130
      %p132 = scmp.eq.s32.totalorder %s38, 0
      %p133 = por %p131, %p132
      %s135 = sadd.s32 %s134, 1
      %p138 = scmp.eq.s32.totalorder %s32, 1
      %p139 = scmp.ne.s32.totalorder %s134, %s136
      %p140 = scmp.eq.s32.totalorder %s32, 0
      %p141 = por %p139, %p140
      %p142 = scmp.ne.s32.totalorder %s134, %s136
      %p143 = scmp.eq.s32.totalorder %s37, 1
      %p144 = por %p142, %p143
      %p145 = scmp.ne.s32.totalorder %s136, %s137
      %p146 = scmp.eq.s32.totalorder %s37, 0
      %p147 = por %p145, %p146
      %p148 = scmp.ne.s32.totalorder %s136, %s137
      %p149 = scmp.eq.s32.totalorder %s38, 1
      %p150 = por %p148, %p149
      %p152 = scmp.ne.s32.totalorder %s137, %s151
      %p153 = scmp.eq.s32.totalorder %s38, 0
      %p154 = por %p152, %p153
      %s156 = sadd.s32 %s155, 1
      %p159 = scmp.eq.s32.totalorder %s32, 1
      %p160 = scmp.ne.s32.totalorder %s155, %s157
      %p161 = scmp.eq.s32.totalorder %s32, 0
      %p162 = por %p160, %p161
      %p163 = scmp.ne.s32.totalorder %s155, %s157
      %p164 = scmp.eq.s32.totalorder %s37, 1
      %p165 = por %p163, %p164
      %p166 = scmp.ne.s32.totalorder %s157, %s158
      %p167 = scmp.eq.s32.totalorder %s37, 0
      %p168 = por %p166, %p167
      %p169 = scmp.ne.s32.totalorder %s157, %s158
      %p170 = scmp.eq.s32.totalorder %s38, 1
      %p171 = por %p169, %p170
      %p173 = scmp.ne.s32.totalorder %s158, %s172
      %p174 = scmp.eq.s32.totalorder %s38, 0
      %p175 = por %p173, %p174
      %s177 = sadd.s32 %s176, 1
      %p180 = scmp.eq.s32.totalorder %s32, 1
      %p181 = scmp.ne.s32.totalorder %s176, %s178
      %p182 = scmp.eq.s32.totalorder %s32, 0
      %p183 = por %p181, %p182
      %p184 = scmp.ne.s32.totalorder %s176, %s178
      %p185 = scmp.eq.s32.totalorder %s37, 1
      %p186 = por %p184, %p185
      %p187 = scmp.ne.s32.totalorder %s178, %s179
      %p188 = scmp.eq.s32.totalorder %s37, 0
      %p189 = por %p187, %p188
      %p190 = scmp.ne.s32.totalorder %s178, %s179
      %p191 = scmp.eq.s32.totalorder %s38, 1
      %p192 = por %p190, %p191
      %p194 = scmp.ne.s32.totalorder %s179, %s193
      %p195 = scmp.eq.s32.totalorder %s38, 0
      %p196 = por %p194, %p195
      %s198 = sadd.s32 %s197, 1
      %p201 = scmp.eq.s32.totalorder %s32, 1
      %p202 = scmp.ne.s32.totalorder %s197, %s199
      %p203 = scmp.eq.s32.totalorder %s32, 0
      %p204 = por %p202, %p203
      %p205 = scmp.ne.s32.totalorder %s197, %s199
      %p206 = scmp.eq.s32.totalorder %s37, 1
      %p207 = por %p205, %p206
      %p208 = scmp.ne.s32.totalorder %s199, %s200
      %p209 = scmp.eq.s32.totalorder %s37, 0
      %p210 = por %p208, %p209
      %p211 = scmp.ne.s32.totalorder %s199, %s200
      %p212 = scmp.eq.s32.totalorder %s38, 1
      %p213 = por %p211, %p212
      %p215 = scmp.ne.s32.totalorder %s200, %s214
      %p216 = scmp.eq.s32.totalorder %s38, 0
      %p217 = por %p215, %p216
      %s219 = sadd.s32 %s218, 1
      %p222 = scmp.eq.s32.totalorder %s32, 1
      %p223 = scmp.ne.s32.totalorder %s218, %s220
      %p224 = scmp.eq.s32.totalorder %s32, 0
      %p225 = por %p223, %p224
      %p226 = scmp.ne.s32.totalorder %s218, %s220
      %p227 = scmp.eq.s32.totalorder %s37, 1
      %p228 = por %p226, %p227
      %p229 = scmp.ne.s32.totalorder %s220, %s221
      %p230 = scmp.eq.s32.totalorder %s37, 0
      %p231 = por %p229, %p230
      %p232 = scmp.ne.s32.totalorder %s220, %s221
      %p233 = scmp.eq.s32.totalorder %s38, 1
      %p234 = por %p232, %p233
      %p236 = scmp.ne.s32.totalorder %s221, %s235
      %p237 = scmp.eq.s32.totalorder %s38, 0
      %p238 = por %p236, %p237
      %s240 = sadd.s32 %s239, 1
      %p243 = scmp.eq.s32.totalorder %s32, 1
      %p244 = scmp.ne.s32.totalorder %s239, %s241
      %p245 = scmp.eq.s32.totalorder %s32, 0
      %p246 = por %p244, %p245
      %p247 = scmp.ne.s32.totalorder %s239, %s241
      %p248 = scmp.eq.s32.totalorder %s37, 1
      %p249 = por %p247, %p248
      %p250 = scmp.ne.s32.totalorder %s241, %s242
      %p251 = scmp.eq.s32.totalorder %s37, 0
      %p252 = por %p250, %p251
      %p253 = scmp.ne.s32.totalorder %s241, %s242
      %p254 = scmp.eq.s32.totalorder %s38, 1
      %p255 = por %p253, %p254
      %p257 = scmp.ne.s32.totalorder %s242, %s256
      %p258 = scmp.eq.s32.totalorder %s38, 0
      %p259 = por %p257, %p258
      %s261 = sadd.s32 %s260, 1
      %p264 = scmp.eq.s32.totalorder %s32, 1
      %p265 = scmp.ne.s32.totalorder %s260, %s262
      %p266 = scmp.eq.s32.totalorder %s32, 0
      %p267 = por %p265, %p266
      %p268 = scmp.ne.s32.totalorder %s260, %s262
      %p269 = scmp.eq.s32.totalorder %s37, 1
      %p270 = por %p268, %p269
      %p271 = scmp.ne.s32.totalorder %s262, %s263
      %p272 = scmp.eq.s32.totalorder %s37, 0
      %p273 = por %p271, %p272
      %p274 = scmp.ne.s32.totalorder %s262, %s263
      %p275 = scmp.eq.s32.totalorder %s38, 1
      %p276 = por %p274, %p275
      %p278 = scmp.ne.s32.totalorder %s263, %s277
      %p279 = scmp.eq.s32.totalorder %s38, 0
      %p280 = por %p278, %p279
      %s282 = sadd.s32 %s281, 1
      %p285 = scmp.eq.s32.totalorder %s32, 1
      %p286 = scmp.ne.s32.totalorder %s281, %s283
      %p287 = scmp.eq.s32.totalorder %s32, 0
      %p288 = por %p286, %p287
      %p289 = scmp.ne.s32.totalorder %s281, %s283
      %p290 = scmp.eq.s32.totalorder %s37, 1
      %p291 = por %p289, %p290
      %p292 = scmp.ne.s32.totalorder %s283, %s284
      %p293 = scmp.eq.s32.totalorder %s37, 0
      %p294 = por %p292, %p293
      %p295 = scmp.ne.s32.totalorder %s283, %s284
      %p296 = scmp.eq.s32.totalorder %s38, 1
      %p297 = por %p295, %p296
      %p299 = scmp.ne.s32.totalorder %s284, %s298
      %p300 = scmp.eq.s32.totalorder %s38, 0
      %p301 = por %p299, %p300
      %s303 = sadd.s32 %s302, 1
      %p306 = scmp.eq.s32.totalorder %s32, 1
      %p307 = scmp.ne.s32.totalorder %s302, %s304
      %p308 = scmp.eq.s32.totalorder %s32, 0
      %p309 = por %p307, %p308
      %p310 = scmp.ne.s32.totalorder %s302, %s304
      %p311 = scmp.eq.s32.totalorder %s37, 1
      %p312 = por %p310, %p311
      %p313 = scmp.ne.s32.totalorder %s304, %s305
      %p314 = scmp.eq.s32.totalorder %s37, 0
      %p315 = por %p313, %p314
      %p316 = scmp.ne.s32.totalorder %s304, %s305
      %p317 = scmp.eq.s32.totalorder %s38, 1
      %p318 = por %p316, %p317
      %p320 = scmp.ne.s32.totalorder %s305, %s319
      %p321 = scmp.eq.s32.totalorder %s38, 0
      %p322 = por %p320, %p321
      %s324 = sadd.s32 %s323, 1
      %p327 = scmp.eq.s32.totalorder %s32, 1
      %p328 = scmp.ne.s32.totalorder %s323, %s325
      %p329 = scmp.eq.s32.totalorder %s32, 0
      %p330 = por %p328, %p329
      %p331 = scmp.ne.s32.totalorder %s323, %s325
      %p332 = scmp.eq.s32.totalorder %s37, 1
      %p333 = por %p331, %p332
      %p334 = scmp.ne.s32.totalorder %s325, %s326
      %p335 = scmp.eq.s32.totalorder %s37, 0
      %p336 = por %p334, %p335
      %p337 = scmp.ne.s32.totalorder %s325, %s326
      %p338 = scmp.eq.s32.totalorder %s38, 1
      %p339 = por %p337, %p338
      %p341 = scmp.ne.s32.totalorder %s326, %s340
      %p342 = scmp.eq.s32.totalorder %s38, 0
      %p343 = por %p341, %p342
      %s344 = ssub.s32 %s32, %s39
      %p345 = scmp.eq.s32.totalorder %s344, 0
      %s347 = sadd.s32 %s346, 1
      %s348 = scalar_select %p345, %s346, %s347
      %p351 = pneg %p345
      %p352 = scmp.eq.s32.totalorder %s32, 1
      %p353 = por %p351, %p352
      %p354 = scmp.ne.s32.totalorder %s346, %s349
      %p355 = scmp.eq.s32.totalorder %s32, 0
      %p356 = por %p354, %p355
      %p357 = scmp.ne.s32.totalorder %s346, %s349
      %p358 = scmp.eq.s32.totalorder %s37, 1
      %p359 = por %p357, %p358
      %p360 = scmp.ne.s32.totalorder %s349, %s350
      %p361 = scmp.eq.s32.totalorder %s37, 0
      %p362 = por %p360, %p361
      %p363 = scmp.ne.s32.totalorder %s349, %s350
      %p364 = scmp.eq.s32.totalorder %s38, 1
      %p365 = por %p363, %p364
      %p367 = scmp.ne.s32.totalorder %s350, %s366
      %p368 = scmp.eq.s32.totalorder %s38, 0
      %p369 = por %p367, %p368
      %p370 = scmp.le.s32.totalorder 1, %s32
      %p371 = scmp.lt.s32.totalorder %s32, 3
      %p372 = pnand %p370, %p371
      %p373 = pneg %p372
      // Predicated region
      $region9: #{tpu_custom_call.1} parent=5 // pred_check
        _
      $region10: #{tpu_custom_call.1} parent=5 // pred_check_branch
        %375 = sbr.rel (%p372) target = $region12
      $region11: #{tpu_custom_call.1} parent=5 // pred_region
        %s376 = ssub.s32 %s32, 1
        // Predicated region
        $region13: #{tpu_custom_call.1} parent=11 // pred_check
          %p377 = pneg %p105
        $region14: #{tpu_custom_call.1} parent=11 // pred_check_branch
          %379 = sbr.rel (%p377) target = $region16
        $region15: #{tpu_custom_call.1} parent=11 // pred_region
          %s381 = ssub.s32 16, 16
          %382 = vsyncadd [#allocation6], %s381
          %s384 = sshll.u32 [#allocation7], 4
          %s385 = int_to_ptr.vmem [resolvable:$true] %s384
          %387 = dma.hbm_to_vmem [thread:$0]  %s2, 16, %s385, [#allocation6]
        $region16: #{tpu_custom_call.1} parent=11 // pred_fallthru
          _
        // Predicated region
        $region17: #{tpu_custom_call.1} parent=11 // pred_check
          %p388 = pneg %p126
        $region18: #{tpu_custom_call.1} parent=11 // pred_check_branch
          %390 = sbr.rel (%p388) target = $region20
        $region19: #{tpu_custom_call.1} parent=11 // pred_region
          %s392 = ssub.s32 16, 16
          %393 = vsyncadd [#allocation9], %s392
          %s395 = sshll.u32 [#allocation8], 4
          %s396 = int_to_ptr.vmem [resolvable:$true] %s395
          %398 = dma.hbm_to_vmem [thread:$0]  %s3, 16, %s396, [#allocation9]
        $region20: #{tpu_custom_call.1} parent=11 // pred_fallthru
          _
        // Predicated region
        $region21: #{tpu_custom_call.1} parent=11 // pred_check
          %p399 = pneg %p147
        $region22: #{tpu_custom_call.1} parent=11 // pred_check_branch
          %401 = sbr.rel (%p399) target = $region24
        $region23: #{tpu_custom_call.1} parent=11 // pred_region
          %s403 = ssub.s32 3072, 3072
          %404 = vsyncadd [#allocation9], %s403
          %s405 = sshll.u32 [#allocation10], 4
          %s406 = int_to_ptr.vmem [resolvable:$true] %s405
          %411 = dma.hbm_to_vmem [thread:$0]  %s4, 3072, %s406, [#allocation9], 192, 192, 12
        $region24: #{tpu_custom_call.1} parent=11 // pred_fallthru
          _
        // Predicated region
        $region25: #{tpu_custom_call.1} parent=11 // pred_check
          %p412 = pneg %p168
        $region26: #{tpu_custom_call.1} parent=11 // pred_check_branch
          %414 = sbr.rel (%p412) target = $region28
        $region27: #{tpu_custom_call.1} parent=11 // pred_region
          _
        $region28: #{tpu_custom_call.1} parent=11 // pred_fallthru
          _
        // Predicated region
        $region29: #{tpu_custom_call.1} parent=11 // pred_check
          %p415 = pneg %p189
        $region30: #{tpu_custom_call.1} parent=11 // pred_check_branch
          %417 = sbr.rel (%p415) target = $region32
        $region31: #{tpu_custom_call.1} parent=11 // pred_region
          %s419 = ssub.s32 1024, 1024
          %420 = vsyncadd [#allocation12], %s419
          %s421 = sshll.u32 [#allocation11], 4
          %s422 = int_to_ptr.vmem [resolvable:$true] %s421
          %427 = dma.hbm_to_vmem [thread:$0]  %s6, 1024, %s422, [#allocation12], 64, 64, 4
        $region32: #{tpu_custom_call.1} parent=11 // pred_fallthru
          _
        // Predicated region
        $region33: #{tpu_custom_call.1} parent=11 // pred_check
          %p428 = pneg %p210
        $region34: #{tpu_custom_call.1} parent=11 // pred_check_branch
          %430 = sbr.rel (%p428) target = $region36
        $region35: #{tpu_custom_call.1} parent=11 // pred_region
          _
        $region36: #{tpu_custom_call.1} parent=11 // pred_fallthru
          _
        // Predicated region
        $region37: #{tpu_custom_call.1} parent=11 // pred_check
          %p431 = pneg %p231
        $region38: #{tpu_custom_call.1} parent=11 // pred_check_branch
          %433 = sbr.rel (%p431) target = $region40
        $region39: #{tpu_custom_call.1} parent=11 // pred_region
          _
        $region40: #{tpu_custom_call.1} parent=11 // pred_fallthru
          _
        // Predicated region
        $region41: #{tpu_custom_call.1} parent=11 // pred_check
          %p434 = pneg %p252
        $region42: #{tpu_custom_call.1} parent=11 // pred_check_branch
          %436 = sbr.rel (%p434) target = $region44
        $region43: #{tpu_custom_call.1} parent=11 // pred_region
          _
        $region44: #{tpu_custom_call.1} parent=11 // pred_fallthru
          _
        // Predicated region
        $region45: #{tpu_custom_call.1} parent=11 // pred_check
          %p437 = pneg %p273
        $region46: #{tpu_custom_call.1} parent=11 // pred_check_branch
          %439 = sbr.rel (%p437) target = $region48
        $region47: #{tpu_custom_call.1} parent=11 // pred_region
          %s441 = ssub.s32 4096, 4096
          %442 = vsyncadd [#allocation12], %s441
          %s443 = sshll.u32 [#allocation13], 4
          %s444 = int_to_ptr.vmem [resolvable:$true] %s443
          %449 = dma.hbm_to_vmem [thread:$0]  %s10, 4096, %s444, [#allocation12], 256, 256, 16
        $region48: #{tpu_custom_call.1} parent=11 // pred_fallthru
          _
        // Predicated region
        $region49: #{tpu_custom_call.1} parent=11 // pred_check
          %p450 = pneg %p294
        $region50: #{tpu_custom_call.1} parent=11 // pred_check_branch
          %452 = sbr.rel (%p450) target = $region52
        $region51: #{tpu_custom_call.1} parent=11 // pred_region
          _
        $region52: #{tpu_custom_call.1} parent=11 // pred_fallthru
          _
        // Predicated region
        $region53: #{tpu_custom_call.1} parent=11 // pred_check
          %p453 = pneg %p315
        $region54: #{tpu_custom_call.1} parent=11 // pred_check_branch
          %455 = sbr.rel (%p453) target = $region56
        $region55: #{tpu_custom_call.1} parent=11 // pred_region
          %s457 = ssub.s32 4096, 4096
          %458 = vsyncadd [#allocation15], %s457
          %s459 = sshll.u32 [#allocation14], 4
          %s460 = int_to_ptr.vmem [resolvable:$true] %s459
          %465 = dma.hbm_to_vmem [thread:$0]  %s12, 4096, %s460, [#allocation15], 64, 64, 4
        $region56: #{tpu_custom_call.1} parent=11 // pred_fallthru
          _
        // Predicated region
        $region57: #{tpu_custom_call.1} parent=11 // pred_check
          %p466 = pneg %p336
        $region58: #{tpu_custom_call.1} parent=11 // pred_check_branch
          %468 = sbr.rel (%p466) target = $region60
        $region59: #{tpu_custom_call.1} parent=11 // pred_region
          _
        $region60: #{tpu_custom_call.1} parent=11 // pred_fallthru
          _
      $region12: #{tpu_custom_call.1} parent=5 // pred_fallthru
        _
      %p469 = scmp.lt.s32.totalorder %s32, 2
      // Predicated region
      $region61: #{tpu_custom_call.1} parent=5 // pred_check
        %p470 = pneg %p469
      $region62: #{tpu_custom_call.1} parent=5 // pred_check_branch
        %472 = sbr.rel (%p470) target = $region64
      $region63: #{tpu_custom_call.1} parent=5 // pred_region
        // Predicated region
        $region65: #{tpu_custom_call.1} parent=63 // pred_check
          %p473 = pneg %p52
        $region66: #{tpu_custom_call.1} parent=63 // pred_check_branch
          %475 = sbr.rel (%p473) target = $region68
        $region67: #{tpu_custom_call.1} parent=63 // pred_region
          %s476 = sand.u32 %s42, 1
          %s477 = scalar_lea.sflag [#allocation3], %s476
          %s478 = sand.u32 %s42, 1
          %s479 = smul.addr %s478, 8
          %s480 = scalar_lea.vmem [#allocation2], %s479
          %s482 = ssub.s32 128, 128
          %483 = vsyncadd %s477, %s482
          %s484 = smul.addr %s32, 128
          %s485 = scalar_lea.hbm %s0, %s484
          %s487 = sshll.u32 %s480, 4
          %s488 = int_to_ptr.vmem [resolvable:$true] %s487
          %490 = dma.hbm_to_vmem [thread:$0]  %s485, 128, %s488, %s477
        $region68: #{tpu_custom_call.1} parent=63 // pred_fallthru
          _
        // Predicated region
        $region69: #{tpu_custom_call.1} parent=63 // pred_check
          %p491 = pneg %p78
        $region70: #{tpu_custom_call.1} parent=63 // pred_check_branch
          %493 = sbr.rel (%p491) target = $region72
        $region71: #{tpu_custom_call.1} parent=63 // pred_region
          %s494 = sand.u32 %s32, 1
          %s495 = scalar_lea.sflag [#allocation6], %s494
          %s496 = sand.u32 %s68, 1
          %s497 = smul.addr %s496, 8
          %s498 = scalar_lea.vmem [#allocation5], %s497
          %s500 = ssub.s32 128, 128
          %501 = vsyncadd %s495, %s500
          %s502 = smul.addr %s32, 128
          %s503 = scalar_lea.hbm %s1, %s502
          %s505 = sshll.u32 %s498, 4
          %s506 = int_to_ptr.vmem [resolvable:$true] %s505
          %508 = dma.hbm_to_vmem [thread:$0]  %s503, 128, %s506, %s495
        $region72: #{tpu_custom_call.1} parent=63 // pred_fallthru
          _
      $region64: #{tpu_custom_call.1} parent=5 // pred_fallthru
        _
      %p509 = scmp.le.s32.totalorder 1, %s32
      %p510 = scmp.lt.s32.totalorder %s32, 3
      %p511 = pnand %p509, %p510
      %p512 = pneg %p511
      // Predicated region
      $region73: #{tpu_custom_call.1} parent=5 // pred_check
        _
      $region74: #{tpu_custom_call.1} parent=5 // pred_check_branch
        %514 = sbr.rel (%p511) target = $region76
      $region75: #{tpu_custom_call.1} parent=5 // pred_region
        %s515 = ssub.s32 %s32, 1
        %s516 = sand.u32 %s45, 1
        %s517 = scalar_lea.sflag [#allocation3], %s516
        %s518 = sand.u32 %s45, 1
        %s519 = smul.addr %s518, 8
        %s520 = scalar_lea.vmem [#allocation2], %s519
        // Predicated region
        $region77: #{tpu_custom_call.1} parent=75 // pred_check
          %p521 = pneg %p58
        $region78: #{tpu_custom_call.1} parent=75 // pred_check_branch
          %523 = sbr.rel (%p521) target = $region80
        $region79: #{tpu_custom_call.1} parent=75 // pred_region
          %524 = dma.done %s517, 128
        $region80: #{tpu_custom_call.1} parent=75 // pred_fallthru
          _
        %s525 = sand.u32 %s37, 1
        %s526 = scalar_lea.sflag [#allocation6], %s525
        %s527 = sand.u32 %s71, 1
        %s528 = smul.addr %s527, 8
        %s529 = scalar_lea.vmem [#allocation5], %s528
        // Predicated region
        $region81: #{tpu_custom_call.1} parent=75 // pred_check
          %p530 = pneg %p84
        $region82: #{tpu_custom_call.1} parent=75 // pred_check_branch
          %532 = sbr.rel (%p530) target = $region84
        $region83: #{tpu_custom_call.1} parent=75 // pred_region
          %533 = dma.done %s526, 128
        $region84: #{tpu_custom_call.1} parent=75 // pred_fallthru
          _
        // Predicated region
        $region85: #{tpu_custom_call.1} parent=75 // pred_check
          %p534 = pneg %p105
        $region86: #{tpu_custom_call.1} parent=75 // pred_check_branch
          %536 = sbr.rel (%p534) target = $region88
        $region87: #{tpu_custom_call.1} parent=75 // pred_region
          %537 = dma.done [#allocation6], 16
        $region88: #{tpu_custom_call.1} parent=75 // pred_fallthru
          _
        // Predicated region
        $region89: #{tpu_custom_call.1} parent=75 // pred_check
          %p538 = pneg %p126
        $region90: #{tpu_custom_call.1} parent=75 // pred_check_branch
          %540 = sbr.rel (%p538) target = $region92
        $region91: #{tpu_custom_call.1} parent=75 // pred_region
          %541 = dma.done [#allocation9], 16
        $region92: #{tpu_custom_call.1} parent=75 // pred_fallthru
          _
        // Predicated region
        $region93: #{tpu_custom_call.1} parent=75 // pred_check
          %p542 = pneg %p147
        $region94: #{tpu_custom_call.1} parent=75 // pred_check_branch
          %544 = sbr.rel (%p542) target = $region96
        $region95: #{tpu_custom_call.1} parent=75 // pred_region
          %545 = dma.done [#allocation9], 3072
        $region96: #{tpu_custom_call.1} parent=75 // pred_fallthru
          _
        // Predicated region
        $region97: #{tpu_custom_call.1} parent=75 // pred_check
          %p546 = pneg %p189
        $region98: #{tpu_custom_call.1} parent=75 // pred_check_branch
          %548 = sbr.rel (%p546) target = $region100
        $region99: #{tpu_custom_call.1} parent=75 // pred_region
          %549 = dma.done [#allocation12], 1024
        $region100: #{tpu_custom_call.1} parent=75 // pred_fallthru
          _
        // Predicated region
        $region101: #{tpu_custom_call.1} parent=75 // pred_check
          %p550 = pneg %p273
        $region102: #{tpu_custom_call.1} parent=75 // pred_check_branch
          %552 = sbr.rel (%p550) target = $region104
        $region103: #{tpu_custom_call.1} parent=75 // pred_region
          %553 = dma.done [#allocation12], 4096
        $region104: #{tpu_custom_call.1} parent=75 // pred_fallthru
          _
        // Predicated region
        $region105: #{tpu_custom_call.1} parent=75 // pred_check
          %p554 = pneg %p315
        $region106: #{tpu_custom_call.1} parent=75 // pred_check_branch
          %556 = sbr.rel (%p554) target = $region108
        $region107: #{tpu_custom_call.1} parent=75 // pred_region
          %557 = dma.done [#allocation15], 4096
        $region108: #{tpu_custom_call.1} parent=75 // pred_fallthru
          _
        %s558 = sand.u32 %s45, 1
        %s559 = scalar_lea.sflag [#allocation3], %s558
        %s560 = sand.u32 %s45, 1
        %s561 = smul.addr %s560, 8
        %s562 = scalar_lea.vmem [#allocation2], %s561
        %p563 = pneg %p58
        %p564 = pneg %p55
        %s565 = sand.u32 %s37, 1
        %s566 = scalar_lea.sflag [#allocation6], %s565
        %s567 = sand.u32 %s71, 1
        %s568 = smul.addr %s567, 8
        %s569 = scalar_lea.vmem [#allocation5], %s568
        %p570 = pneg %p84
        %p571 = pneg %p81
        %p572 = pneg %p105
        %p573 = pneg %p102
        %p574 = pneg %p126
        %p575 = pneg %p123
        %p576 = pneg %p147
        %p577 = pneg %p144
        %p578 = pneg %p168
        %p579 = pneg %p165
        %p580 = pneg %p189
        %p581 = pneg %p186
        %p582 = pneg %p210
        %p583 = pneg %p207
        %p584 = pneg %p231
        %p585 = pneg %p228
        %p586 = pneg %p252
        %p587 = pneg %p249
        %p588 = pneg %p273
        %p589 = pneg %p270
        %p590 = pneg %p294
        %p591 = pneg %p291
        %p592 = pneg %p315
        %p593 = pneg %p312
        %p594 = pneg %p336
        %p595 = pneg %p333
        %p596 = pneg %p362
        %p597 = pneg %p359
        %s598 = sand.u32 %s349, 1
        %s599 = scalar_lea.sflag [#allocation4], %s598
        %s600 = sand.u32 %s349, 1
        %s601 = smul.addr %s600, 8
        %s602 = scalar_lea.vmem [#allocation16], %s601
        %v604 = vld [vmem:[%s520] sm:$0xff]
        %v605 = vld [vmem:[%s529] sm:$0xff]
        %v606 = vadd.f32 %v604, %v605
        %v607 = vld [vmem:[#allocation7] sm:$0x1]
        %v608 = vld [vmem:[#allocation8] sm:$0x1]
        %609 = vadd.xlane.f32.xlu0 %v606
        %v610 = vpop.xlane.xlu0 %609
        %v611 = vrcp.pop 128.0
        %v612 = vmul.f32 %v610, %v611
        %v613 = vsub.f32 %v606, %v612
        %v614 = vmul.f32 %v613, %v613
        %615 = vadd.xlane.f32.xlu0 %v614
        %v616 = vpop.xlane.xlu0 %615
        %v617 = vmul.f32 %v616, %v611
        %v618 = vadd.f32 %v617, 1e-05
        %v619 = vrsqrt.pop %v618
        %v620 = vmul.f32 %v613, %v619
        %v622 = vlaneseq
        %v623 = vshrl.u32 %v622, 7
        %v624 = vsub.s32 0, %v623
        %v625 = vrot.slane %v607, %v624
        %v627 = vmul.f32 %v620, %v625
        %v629 = vlaneseq
        %v630 = vshrl.u32 %v629, 7
        %v631 = vsub.s32 0, %v630
        %v632 = vrot.slane %v608, %v631
        %v634 = vadd.f32 %v627, %v632
        %v635 = vpack.c.bf16 %v634, %v634
        %v636 = vld [vmem:[#allocation10] sm:$0xff]
        %v637 = vld [vmem:[#allocation10 + $0x8] sm:$0xf]
        %v638 = vld [vmem:[#allocation10 + $0xc] sm:$0xff]
        %v639 = vld [vmem:[#allocation10 + $0x14] sm:$0xf]
        %v640 = vld [vmem:[#allocation10 + $0x18] sm:$0xff]
        %v641 = vld [vmem:[#allocation10 + $0x20] sm:$0xf]
        %v642 = vld [vmem:[#allocation10 + $0x24] sm:$0xff]
        %v643 = vld [vmem:[#allocation10 + $0x2c] sm:$0xf]
        %v644 = vld [vmem:[#allocation10 + $0x30] sm:$0xff]
        %v645 = vld [vmem:[#allocation10 + $0x38] sm:$0xf]
        %v646 = vld [vmem:[#allocation10 + $0x3c] sm:$0xff]
        %v647 = vld [vmem:[#allocation10 + $0x44] sm:$0xf]
        %v648 = vld [vmem:[#allocation10 + $0x48] sm:$0xff]
        %v649 = vld [vmem:[#allocation10 + $0x50] sm:$0xf]
        %v650 = vld [vmem:[#allocation10 + $0x54] sm:$0xff]
        %v651 = vld [vmem:[#allocation10 + $0x5c] sm:$0xf]
        %v652 = vld [vmem:[#allocation10 + $0x60] sm:$0xff]
        %v653 = vld [vmem:[#allocation10 + $0x68] sm:$0xf]
        %v654 = vld [vmem:[#allocation10 + $0x6c] sm:$0xff]
        %v655 = vld [vmem:[#allocation10 + $0x74] sm:$0xf]
        %v656 = vld [vmem:[#allocation10 + $0x78] sm:$0xff]
        %v657 = vld [vmem:[#allocation10 + $0x80] sm:$0xf]
        %v658 = vld [vmem:[#allocation10 + $0x84] sm:$0xff]
        %v659 = vld [vmem:[#allocation10 + $0x8c] sm:$0xf]
        %v660 = vld [vmem:[#allocation10 + $0x90] sm:$0xff]
        %v661 = vld [vmem:[#allocation10 + $0x98] sm:$0xf]
        %v662 = vld [vmem:[#allocation10 + $0x9c] sm:$0xff]
        %v663 = vld [vmem:[#allocation10 + $0xa4] sm:$0xf]
        %v664 = vld [vmem:[#allocation10 + $0xa8] sm:$0xff]
        %v665 = vld [vmem:[#allocation10 + $0xb0] sm:$0xf]
        %v666 = vld [vmem:[#allocation10 + $0xb4] sm:$0xff]
        %v667 = vld [vmem:[#allocation10 + $0xbc] sm:$0xf]
        %v668 = vld [vmem:[%s5] sm:$0x7]
        %v670 = vlaneseq
        %v671 = vshrl.u32 %v670, 7
        %v672 = vsub.s32 0, %v671
        %v673 = vrot.slane %v668, %v672
        %v674 = vlaneseq
        %v675 = vshrl.u32 %v674, 7
        %v676 = vsub.s32 1, %v675
        %v677 = vrot.slane %v668, %v676
        %v678 = vlaneseq
        %v679 = vshrl.u32 %v678, 7
        %v680 = vsub.s32 2, %v679
        %v681 = vrot.slane %v668, %v680
        %v717 = vunpack.c.l.b16 %v636
        %v718 = vunpack.c.h.b16 %v636
        %v719 = vunpack.c.l.b16 %v637
        %v720 = vunpack.c.l.b16 %v638
        %v721 = vunpack.c.h.b16 %v638
        %v722 = vunpack.c.l.b16 %v639
        %v723 = vunpack.c.l.b16 %v640
        %v724 = vunpack.c.h.b16 %v640
        %v725 = vunpack.c.l.b16 %v641
        %v726 = vunpack.c.l.b16 %v642
        %v727 = vunpack.c.h.b16 %v642
        %v728 = vunpack.c.l.b16 %v643
        %v729 = vunpack.c.l.b16 %v644
        %v730 = vunpack.c.h.b16 %v644
        %v731 = vunpack.c.l.b16 %v645
        %v732 = vunpack.c.l.b16 %v646
        %v733 = vunpack.c.h.b16 %v646
        %v734 = vunpack.c.l.b16 %v647
        %v735 = vunpack.c.l.b16 %v648
        %v736 = vunpack.c.h.b16 %v648
        %v737 = vunpack.c.l.b16 %v649
        %v738 = vunpack.c.l.b16 %v650
        %v739 = vunpack.c.h.b16 %v650
        %v740 = vunpack.c.l.b16 %v651
        %v741 = vunpack.c.l.b16 %v652
        %v742 = vunpack.c.h.b16 %v652
        %v743 = vunpack.c.l.b16 %v653
        %v744 = vunpack.c.l.b16 %v654
        %v745 = vunpack.c.h.b16 %v654
        %v746 = vunpack.c.l.b16 %v655
        %v747 = vunpack.c.l.b16 %v656
        %v748 = vunpack.c.h.b16 %v656
        %v749 = vunpack.c.l.b16 %v657
        %v750 = vunpack.c.l.b16 %v658
        %v751 = vunpack.c.h.b16 %v658
        %v752 = vunpack.c.l.b16 %v659
        %v753 = vunpack.c.l.b16 %v660
        %v754 = vunpack.c.h.b16 %v660
        %v755 = vunpack.c.l.b16 %v661
        %v756 = vunpack.c.l.b16 %v662
        %v757 = vunpack.c.h.b16 %v662
        %v758 = vunpack.c.l.b16 %v663
        %v759 = vunpack.c.l.b16 %v664
        %v760 = vunpack.c.h.b16 %v664
        %v761 = vunpack.c.l.b16 %v665
        %v762 = vunpack.c.l.b16 %v666
        %v763 = vunpack.c.h.b16 %v666
        %v764 = vunpack.c.l.b16 %v667
        %v765 = vpack.c.b16 %v720, %v717
        %v766 = vpack.c.b16 %v721, %v718
        %v767 = vpack.c.b16 %v722, %v719
        %v768 = vpack.c.b16 %v726, %v723
        %v769 = vpack.c.b16 %v727, %v724
        %v770 = vpack.c.b16 %v728, %v725
        %v771 = vpack.c.b16 %v732, %v729
        %v772 = vpack.c.b16 %v733, %v730
        %v773 = vpack.c.b16 %v734, %v731
        %v774 = vpack.c.b16 %v738, %v735
        %v775 = vpack.c.b16 %v739, %v736
        %v776 = vpack.c.b16 %v740, %v737
        %v777 = vpack.c.b16 %v744, %v741
        %v778 = vpack.c.b16 %v745, %v742
        %v779 = vpack.c.b16 %v746, %v743
        %v780 = vpack.c.b16 %v750, %v747
        %v781 = vpack.c.b16 %v751, %v748
        %v782 = vpack.c.b16 %v752, %v749
        %v783 = vpack.c.b16 %v756, %v753
        %v784 = vpack.c.b16 %v757, %v754
        %v785 = vpack.c.b16 %v758, %v755
        %v786 = vpack.c.b16 %v762, %v759
        %v787 = vpack.c.b16 %v763, %v760
        %v788 = vpack.c.b16 %v764, %v761
        %813 = vmatprep.subr.bf16.mxu0 %v787
        %814 = vmatpush1.bf16.msra.mxu0 %v786
        %815 = vmatprep.subr.bf16.mxu0 %v784
        %816 = vmatpush1.bf16.msra.mxu0 %v783
        %817 = vmatprep.subr.bf16.mxu0 %v781
        %818 = vmatpush1.bf16.msra.mxu0 %v780
        %819 = vmatprep.subr.bf16.mxu0 %v778
        %820 = vmatpush1.bf16.msra.mxu0 %v777
        %821 = vmatprep.subr.bf16.mxu0 %v775
        %822 = vmatpush1.bf16.msra.mxu0 %v774
        %823 = vmatprep.subr.bf16.mxu0 %v772
        %824 = vmatpush1.bf16.msra.mxu0 %v771
        %825 = vmatprep.subr.bf16.mxu0 %v769
        %826 = vmatpush1.bf16.msra.mxu0 %v768
        %827 = vmatprep.subr.bf16.mxu0 %v766
        %828 = vmatpush1.bf16.msra.mxu0 %v765
        %829 = vmatprep.subr.bf16.mxu0 0
        %830 = vmatpush2.bf16.msra.mxu0 0
        %831 = vmatprep.subr.bf16.mxu0 0
        %832 = vmatpush2.bf16.msra.mxu0 0
        %833 = vmatprep.subr.bf16.mxu0 0
        %834 = vmatpush2.bf16.msra.mxu0 0
        %835 = vmatprep.subr.bf16.mxu0 0
        %836 = vmatpush2.bf16.msra.mxu0 0
        %837 = vmatprep.subr.bf16.mxu0 0
        %838 = vmatpush2.bf16.msra.mxu0 0
        %839 = vmatprep.subr.bf16.mxu0 0
        %840 = vmatpush2.bf16.msra.mxu0 0
        %841 = vmatprep.subr.bf16.mxu0 0
        %842 = vmatpush2.bf16.msra.mxu0 0
        %843 = vmatprep.subr.bf16.mxu0 0
        %844 = vmatpush2.bf16.msra.mxu0 0
        %845 = vmatprep.mubr.bf16.mxu0 0
        %846 = vmatmul.mubr.bf16.gmra.mxu0 %v635
        %v847 = vpop.f32.mrf.mxu0
        %v848 = vadd.f32 %v673, %v847
        %v849 = vpop.f32.mrf.mxu0
        %v850 = vadd.f32 %v677, %v849
        %v851 = vpop.f32.mrf.mxu0
        %v852 = vpop.f32.mrf.mxu0
        %853 = vdwg.mxu0
        %854 = vmatprep.subr.bf16.mxu0 0
        %855 = vmatpush1.bf16.msra.mxu0 %v788
        %856 = vmatprep.subr.bf16.mxu0 0
        %857 = vmatpush1.bf16.msra.mxu0 %v785
        %858 = vmatprep.subr.bf16.mxu0 0
        %859 = vmatpush1.bf16.msra.mxu0 %v782
        %860 = vmatprep.subr.bf16.mxu0 0
        %861 = vmatpush1.bf16.msra.mxu0 %v779
        %862 = vmatprep.subr.bf16.mxu0 0
        %863 = vmatpush1.bf16.msra.mxu0 %v776
        %864 = vmatprep.subr.bf16.mxu0 0
        %865 = vmatpush1.bf16.msra.mxu0 %v773
        %866 = vmatprep.subr.bf16.mxu0 0
        %867 = vmatpush1.bf16.msra.mxu0 %v770
        %868 = vmatprep.subr.bf16.mxu0 0
        %869 = vmatpush1.bf16.msra.mxu0 %v767
        %870 = vmatprep.subr.bf16.mxu0 0
        %871 = vmatpush2.bf16.msra.mxu0 0
        %872 = vmatprep.subr.bf16.mxu0 0
        %873 = vmatpush2.bf16.msra.mxu0 0
        %874 = vmatprep.subr.bf16.mxu0 0
        %875 = vmatpush2.bf16.msra.mxu0 0
        %876 = vmatprep.subr.bf16.mxu0 0
        %877 = vmatpush2.bf16.msra.mxu0 0
        %878 = vmatprep.subr.bf16.mxu0 0
        %879 = vmatpush2.bf16.msra.mxu0 0
        %880 = vmatprep.subr.bf16.mxu0 0
        %881 = vmatpush2.bf16.msra.mxu0 0
        %882 = vmatprep.subr.bf16.mxu0 0
        %883 = vmatpush2.bf16.msra.mxu0 0
        %884 = vmatprep.subr.bf16.mxu0 0
        %885 = vmatpush2.bf16.msra.mxu0 0
        %886 = vmatprep.mubr.bf16.mxu0 0
        %887 = vmatmul.mubr.bf16.gmra.mxu0 %v635
        %v888 = vpop.f32.mrf.mxu0
        %v889 = vadd.f32 %v681, %v888
        %v890 = vpop.f32.mrf.mxu0
        %v891 = vpop.f32.mrf.mxu0
        %v892 = vpop.f32.mrf.mxu0
        %893 = vdwg.mxu0
        %v894 = vlaneseq
        %v895 = vshrl.u32 %v894, 7
        %v896 = vlaneseq
        %v897 = vand.u32 %v896, 127
        %vm898 = vcmp.gt.s32.totalorder %v897, %v895
        %v899 = vsel %vm898, -1e+30, 0.0
        %v900 = vpack.c.bf16 %v848, %v848
        %v901 = vpack.c.bf16 %v850, %v850
        %v902 = vpack.c.bf16 %v889, %v889
        %vm903 = vcmask 130048
        %v905 = vsel %vm903, %v900, 0
        %v908 = vsel %vm903, %v901, 0
        %910 = vmatprep.subr.bf16.mxu0 0
        %911 = vmatpush1.bf16.xpose.msra.mxu0 0
        %912 = vmatprep.subr.bf16.mxu0 0
        %913 = vmatpush1.bf16.xpose.msra.mxu0 0
        %914 = vmatprep.subr.bf16.mxu0 0
        %915 = vmatpush1.bf16.xpose.msra.mxu0 0
        %916 = vmatprep.subr.bf16.mxu0 0
        %917 = vmatpush1.bf16.xpose.msra.mxu0 0
        %918 = vmatprep.subr.bf16.mxu0 0
        %919 = vmatpush1.bf16.xpose.msra.mxu0 0
        %920 = vmatprep.subr.bf16.mxu0 0
        %921 = vmatpush1.bf16.xpose.msra.mxu0 0
        %922 = vmatprep.subr.bf16.mxu0 0
        %923 = vmatpush1.bf16.xpose.msra.mxu0 0
        %924 = vmatprep.subr.bf16.mxu0 0
        %925 = vmatpush1.bf16.xpose.msra.mxu0 %v908
        %926 = vmatprep.subr.bf16.mxu0 0
        %927 = vmatpush2.bf16.xpose.msra.mxu0 0
        %928 = vmatprep.subr.bf16.mxu0 0
        %929 = vmatpush2.bf16.xpose.msra.mxu0 0
        %930 = vmatprep.subr.bf16.mxu0 0
        %931 = vmatpush2.bf16.xpose.msra.mxu0 0
        %932 = vmatprep.subr.bf16.mxu0 0
        %933 = vmatpush2.bf16.xpose.msra.mxu0 0
        %934 = vmatprep.subr.bf16.mxu0 0
        %935 = vmatpush2.bf16.xpose.msra.mxu0 0
        %936 = vmatprep.subr.bf16.mxu0 0
        %937 = vmatpush2.bf16.xpose.msra.mxu0 0
        %938 = vmatprep.subr.bf16.mxu0 0
        %939 = vmatpush2.bf16.xpose.msra.mxu0 0
        %940 = vmatprep.subr.bf16.mxu0 0
        %941 = vmatpush2.bf16.xpose.msra.mxu0 0
        %942 = vmatprep.mubr.bf16.mxu0 0
        %943 = vmatmul.mubr.bf16.gmra.mxu0 %v905
        %v944 = vpop.f32.mrf.mxu0
        %v945 = vadd.f32 %v899, %v944
        %v946 = vpop.f32.mrf.mxu0
        %v947 = vpop.f32.mrf.mxu0
        %v948 = vpop.f32.mrf.mxu0
        %949 = vdwg.mxu0
        %vm950 = vcmask 64512
        %v951 = vsel %vm950, %v945, -inf
        %952 = vmax.xlane.f32.xlu0 %v951
        %v953 = vpop.xlane.xlu0 %952
        %v954 = vsub.f32 %v945, %v953
        %v955 = vmul.f32 %v954, 1.442695
        %v956 = vpow.pop %v955
        %v957 = vsel %vm950, %v956, 0.0
        %958 = vadd.xlane.f32.xlu0 %v957
        %v959 = vpop.xlane.xlu0 %958
        %v960 = vrcp.pop %v959
        %v961 = vmul.f32 %v956, %v960
        %v962 = vpack.c.bf16 %v961, %v961
        %v964 = vsel %vm950, %v962, 0
        %vm966 = vcmask 1043456
        %v968 = vsel %vm966, %v902, 0
        %970 = vmatprep.subr.bf16.mxu0 0
        %971 = vmatpush1.bf16.msra.mxu0 0
        %972 = vmatprep.subr.bf16.mxu0 0
        %973 = vmatpush1.bf16.msra.mxu0 0
        %974 = vmatprep.subr.bf16.mxu0 0
        %975 = vmatpush1.bf16.msra.mxu0 0
        %976 = vmatprep.subr.bf16.mxu0 0
        %977 = vmatpush1.bf16.msra.mxu0 0
        %978 = vmatprep.subr.bf16.mxu0 0
        %979 = vmatpush1.bf16.msra.mxu0 0
        %980 = vmatprep.subr.bf16.mxu0 0
        %981 = vmatpush1.bf16.msra.mxu0 0
        %982 = vmatprep.subr.bf16.mxu0 0
        %983 = vmatpush1.bf16.msra.mxu0 0
        %984 = vmatprep.subr.bf16.mxu0 0
        %985 = vmatpush1.bf16.msra.mxu0 %v968
        %986 = vmatprep.subr.bf16.mxu0 0
        %987 = vmatpush2.bf16.msra.mxu0 0
        %988 = vmatprep.subr.bf16.mxu0 0
        %989 = vmatpush2.bf16.msra.mxu0 0
        %990 = vmatprep.subr.bf16.mxu0 0
        %991 = vmatpush2.bf16.msra.mxu0 0
        %992 = vmatprep.subr.bf16.mxu0 0
        %993 = vmatpush2.bf16.msra.mxu0 0
        %994 = vmatprep.subr.bf16.mxu0 0
        %995 = vmatpush2.bf16.msra.mxu0 0
        %996 = vmatprep.subr.bf16.mxu0 0
        %997 = vmatpush2.bf16.msra.mxu0 0
        %998 = vmatprep.subr.bf16.mxu0 0
        %999 = vmatpush2.bf16.msra.mxu0 0
        %1000 = vmatprep.subr.bf16.mxu0 0
        %1001 = vmatpush2.bf16.msra.mxu0 0
        %1002 = vmatprep.mubr.bf16.mxu0 0
        %1003 = vmatmul.mubr.bf16.gmra.mxu0 %v964
        %v1004 = vpop.f32.mrf.mxu0
        %v1005 = vadd.f32 0.0, %v1004
        %v1006 = vpop.f32.mrf.mxu0
        %v1007 = vpop.f32.mrf.mxu0
        %v1008 = vpop.f32.mrf.mxu0
        %1009 = vdwg.mxu0
        %v1010 = vpack.c.bf16 %v1005, %v1005
        %v1011 = vld [vmem:[#allocation11] sm:$0xf]
        %v1012 = vld [vmem:[#allocation11 + $0x4] sm:$0xf]
        %1014 = vrot.lane.b32.xlu0 %v900, 112
        %v1015 = vpop.permute.xlu0 %1014
        %1017 = vrot.lane.b32.xlu0 %v901, 112
        %v1018 = vpop.permute.xlu0 %1017
        %v1020 = vsel %vm903, %v1015, 0
        %v1023 = vsel %vm903, %v1018, 0
        %1025 = vmatprep.subr.bf16.mxu0 0
        %1026 = vmatpush1.bf16.xpose.msra.mxu0 0
        %1027 = vmatprep.subr.bf16.mxu0 0
        %1028 = vmatpush1.bf16.xpose.msra.mxu0 0
        %1029 = vmatprep.subr.bf16.mxu0 0
        %1030 = vmatpush1.bf16.xpose.msra.mxu0 0
        %1031 = vmatprep.subr.bf16.mxu0 0
        %1032 = vmatpush1.bf16.xpose.msra.mxu0 0
        %1033 = vmatprep.subr.bf16.mxu0 0
        %1034 = vmatpush1.bf16.xpose.msra.mxu0 0
        %1035 = vmatprep.subr.bf16.mxu0 0
        %1036 = vmatpush1.bf16.xpose.msra.mxu0 0
        %1037 = vmatprep.subr.bf16.mxu0 0
        %1038 = vmatpush1.bf16.xpose.msra.mxu0 0
        %1039 = vmatprep.subr.bf16.mxu0 0
        %1040 = vmatpush1.bf16.xpose.msra.mxu0 %v1023
        %1041 = vmatprep.subr.bf16.mxu0 0
        %1042 = vmatpush2.bf16.xpose.msra.mxu0 0
        %1043 = vmatprep.subr.bf16.mxu0 0
        %1044 = vmatpush2.bf16.xpose.msra.mxu0 0
        %1045 = vmatprep.subr.bf16.mxu0 0
        %1046 = vmatpush2.bf16.xpose.msra.mxu0 0
        %1047 = vmatprep.subr.bf16.mxu0 0
        %1048 = vmatpush2.bf16.xpose.msra.mxu0 0
        %1049 = vmatprep.subr.bf16.mxu0 0
        %1050 = vmatpush2.bf16.xpose.msra.mxu0 0
        %1051 = vmatprep.subr.bf16.mxu0 0
        %1052 = vmatpush2.bf16.xpose.msra.mxu0 0
        %1053 = vmatprep.subr.bf16.mxu0 0
        %1054 = vmatpush2.bf16.xpose.msra.mxu0 0
        %1055 = vmatprep.subr.bf16.mxu0 0
        %1056 = vmatpush2.bf16.xpose.msra.mxu0 0
        %1057 = vmatprep.mubr.bf16.mxu0 0
        %1058 = vmatmul.mubr.bf16.gmra.mxu0 %v1020
        %v1059 = vpop.f32.mrf.mxu0
        %v1060 = vadd.f32 %v899, %v1059
        %v1061 = vpop.f32.mrf.mxu0
        %v1062 = vpop.f32.mrf.mxu0
        %v1063 = vpop.f32.mrf.mxu0
        %1064 = vdwg.mxu0
        %v1065 = vsel %vm950, %v1060, -inf
        %1066 = vmax.xlane.f32.xlu0 %v1065
        %v1067 = vpop.xlane.xlu0 %1066
        %v1068 = vsub.f32 %v1060, %v1067
        %v1069 = vmul.f32 %v1068, 1.442695
        %v1070 = vpow.pop %v1069
        %v1071 = vsel %vm950, %v1070, 0.0
        %1072 = vadd.xlane.f32.xlu0 %v1071
        %v1073 = vpop.xlane.xlu0 %1072
        %v1074 = vrcp.pop %v1073
        %v1075 = vmul.f32 %v1070, %v1074
        %v1076 = vpack.c.bf16 %v1075, %v1075
        %1078 = vrot.lane.b32.xlu0 %v902, 112
        %v1079 = vpop.permute.xlu0 %1078
        %v1081 = vsel %vm950, %v1076, 0
        %v1084 = vsel %vm966, %v1079, 0
        %1086 = vmatprep.subr.bf16.mxu0 0
        %1087 = vmatpush1.bf16.msra.mxu0 0
        %1088 = vmatprep.subr.bf16.mxu0 0
        %1089 = vmatpush1.bf16.msra.mxu0 0
        %1090 = vmatprep.subr.bf16.mxu0 0
        %1091 = vmatpush1.bf16.msra.mxu0 0
        %1092 = vmatprep.subr.bf16.mxu0 0
        %1093 = vmatpush1.bf16.msra.mxu0 0
        %1094 = vmatprep.subr.bf16.mxu0 0
        %1095 = vmatpush1.bf16.msra.mxu0 0
        %1096 = vmatprep.subr.bf16.mxu0 0
        %1097 = vmatpush1.bf16.msra.mxu0 0
        %1098 = vmatprep.subr.bf16.mxu0 0
        %1099 = vmatpush1.bf16.msra.mxu0 0
        %1100 = vmatprep.subr.bf16.mxu0 0
        %1101 = vmatpush1.bf16.msra.mxu0 %v1084
        %1102 = vmatprep.subr.bf16.mxu0 0
        %1103 = vmatpush2.bf16.msra.mxu0 0
        %1104 = vmatprep.subr.bf16.mxu0 0
        %1105 = vmatpush2.bf16.msra.mxu0 0
        %1106 = vmatprep.subr.bf16.mxu0 0
        %1107 = vmatpush2.bf16.msra.mxu0 0
        %1108 = vmatprep.subr.bf16.mxu0 0
        %1109 = vmatpush2.bf16.msra.mxu0 0
        %1110 = vmatprep.subr.bf16.mxu0 0
        %1111 = vmatpush2.bf16.msra.mxu0 0
        %1112 = vmatprep.subr.bf16.mxu0 0
        %1113 = vmatpush2.bf16.msra.mxu0 0
        %1114 = vmatprep.subr.bf16.mxu0 0
        %1115 = vmatpush2.bf16.msra.mxu0 0
        %1116 = vmatprep.subr.bf16.mxu0 0
        %1117 = vmatpush2.bf16.msra.mxu0 0
        %1118 = vmatprep.mubr.bf16.mxu0 0
        %1119 = vmatmul.mubr.bf16.gmra.mxu0 %v1081
        %v1120 = vpop.f32.mrf.mxu0
        %v1121 = vadd.f32 0.0, %v1120
        %v1122 = vpop.f32.mrf.mxu0
        %v1123 = vpop.f32.mrf.mxu0
        %v1124 = vpop.f32.mrf.mxu0
        %1125 = vdwg.mxu0
        %v1126 = vpack.c.bf16 %v1121, %v1121
        %v1127 = vld [vmem:[#allocation11 + $0x8] sm:$0xf]
        %v1128 = vld [vmem:[#allocation11 + $0xc] sm:$0xf]
        %v1131 = vunpack.c.l.b16 %v1127
        %v1132 = vunpack.c.l.b16 %v1128
        %v1133 = vpack.c.b16 %v1132, %v1131
        %v1136 = vsel %vm903, %v1126, 0
        %1138 = vmatprep.subr.bf16.mxu0 0
        %1139 = vmatpush1.bf16.msra.mxu0 0
        %1140 = vmatprep.subr.bf16.mxu0 0
        %1141 = vmatpush1.bf16.msra.mxu0 0
        %1142 = vmatprep.subr.bf16.mxu0 0
        %1143 = vmatpush1.bf16.msra.mxu0 0
        %1144 = vmatprep.subr.bf16.mxu0 0
        %1145 = vmatpush1.bf16.msra.mxu0 0
        %1146 = vmatprep.subr.bf16.mxu0 0
        %1147 = vmatpush1.bf16.msra.mxu0 0
        %1148 = vmatprep.subr.bf16.mxu0 0
        %1149 = vmatpush1.bf16.msra.mxu0 0
        %1150 = vmatprep.subr.bf16.mxu0 0
        %1151 = vmatpush1.bf16.msra.mxu0 0
        %1152 = vmatprep.subr.bf16.mxu0 0
        %1153 = vmatpush1.bf16.msra.mxu0 %v1133
        %1154 = vmatprep.subr.bf16.mxu0 0
        %1155 = vmatpush2.bf16.msra.mxu0 0
        %1156 = vmatprep.subr.bf16.mxu0 0
        %1157 = vmatpush2.bf16.msra.mxu0 0
        %1158 = vmatprep.subr.bf16.mxu0 0
        %1159 = vmatpush2.bf16.msra.mxu0 0
        %1160 = vmatprep.subr.bf16.mxu0 0
        %1161 = vmatpush2.bf16.msra.mxu0 0
        %1162 = vmatprep.subr.bf16.mxu0 0
        %1163 = vmatpush2.bf16.msra.mxu0 0
        %1164 = vmatprep.subr.bf16.mxu0 0
        %1165 = vmatpush2.bf16.msra.mxu0 0
        %1166 = vmatprep.subr.bf16.mxu0 0
        %1167 = vmatpush2.bf16.msra.mxu0 0
        %1168 = vmatprep.subr.bf16.mxu0 0
        %1169 = vmatpush2.bf16.msra.mxu0 0
        %1170 = vmatprep.mubr.bf16.mxu0 0
        %1171 = vmatmul.mubr.bf16.gmra.mxu0 %v1136
        %v1172 = vpop.f32.mrf.mxu0
        %v1173 = vadd.f32 0.0, %v1172
        %v1174 = vpop.f32.mrf.mxu0
        %v1175 = vpop.f32.mrf.mxu0
        %v1176 = vpop.f32.mrf.mxu0
        %1177 = vdwg.mxu0
        %v1180 = vunpack.c.l.b16 %v1011
        %v1181 = vunpack.c.l.b16 %v1012
        %v1182 = vpack.c.b16 %v1181, %v1180
        %v1185 = vsel %vm903, %v1010, 0
        %1187 = vmatprep.subr.bf16.mxu0 0
        %1188 = vmatpush1.bf16.msra.mxu0 0
        %1189 = vmatprep.subr.bf16.mxu0 0
        %1190 = vmatpush1.bf16.msra.mxu0 0
        %1191 = vmatprep.subr.bf16.mxu0 0
        %1192 = vmatpush1.bf16.msra.mxu0 0
        %1193 = vmatprep.subr.bf16.mxu0 0
        %1194 = vmatpush1.bf16.msra.mxu0 0
        %1195 = vmatprep.subr.bf16.mxu0 0
        %1196 = vmatpush1.bf16.msra.mxu0 0
        %1197 = vmatprep.subr.bf16.mxu0 0
        %1198 = vmatpush1.bf16.msra.mxu0 0
        %1199 = vmatprep.subr.bf16.mxu0 0
        %1200 = vmatpush1.bf16.msra.mxu0 0
        %1201 = vmatprep.subr.bf16.mxu0 0
        %1202 = vmatpush1.bf16.msra.mxu0 %v1182
        %1203 = vmatprep.subr.bf16.mxu0 0
        %1204 = vmatpush2.bf16.msra.mxu0 0
        %1205 = vmatprep.subr.bf16.mxu0 0
        %1206 = vmatpush2.bf16.msra.mxu0 0
        %1207 = vmatprep.subr.bf16.mxu0 0
        %1208 = vmatpush2.bf16.msra.mxu0 0
        %1209 = vmatprep.subr.bf16.mxu0 0
        %1210 = vmatpush2.bf16.msra.mxu0 0
        %1211 = vmatprep.subr.bf16.mxu0 0
        %1212 = vmatpush2.bf16.msra.mxu0 0
        %1213 = vmatprep.subr.bf16.mxu0 0
        %1214 = vmatpush2.bf16.msra.mxu0 0
        %1215 = vmatprep.subr.bf16.mxu0 0
        %1216 = vmatpush2.bf16.msra.mxu0 0
        %1217 = vmatprep.subr.bf16.mxu0 0
        %1218 = vmatpush2.bf16.msra.mxu0 0
        %1219 = vmatprep.mubr.bf16.mxu0 0
        %1220 = vmatmul.mubr.bf16.gmra.mxu0 %v1185
        %v1221 = vpop.f32.mrf.mxu0
        %v1222 = vadd.f32 %v1173, %v1221
        %v1223 = vpop.f32.mrf.mxu0
        %v1224 = vpop.f32.mrf.mxu0
        %v1225 = vpop.f32.mrf.mxu0
        %1226 = vdwg.mxu0
        %1227 = vrot.lane.b32.xlu0 %v900, 96
        %v1228 = vpop.permute.xlu0 %1227
        %1229 = vrot.lane.b32.xlu0 %v901, 96
        %v1230 = vpop.permute.xlu0 %1229
        %v1232 = vsel %vm903, %v1228, 0
        %v1235 = vsel %vm903, %v1230, 0
        %1237 = vmatprep.subr.bf16.mxu0 0
        %1238 = vmatpush1.bf16.xpose.msra.mxu0 0
        %1239 = vmatprep.subr.bf16.mxu0 0
        %1240 = vmatpush1.bf16.xpose.msra.mxu0 0
        %1241 = vmatprep.subr.bf16.mxu0 0
        %1242 = vmatpush1.bf16.xpose.msra.mxu0 0
        %1243 = vmatprep.subr.bf16.mxu0 0
        %1244 = vmatpush1.bf16.xpose.msra.mxu0 0
        %1245 = vmatprep.subr.bf16.mxu0 0
        %1246 = vmatpush1.bf16.xpose.msra.mxu0 0
        %1247 = vmatprep.subr.bf16.mxu0 0
        %1248 = vmatpush1.bf16.xpose.msra.mxu0 0
        %1249 = vmatprep.subr.bf16.mxu0 0
        %1250 = vmatpush1.bf16.xpose.msra.mxu0 0
        %1251 = vmatprep.subr.bf16.mxu0 0
        %1252 = vmatpush1.bf16.xpose.msra.mxu0 %v1235
        %1253 = vmatprep.subr.bf16.mxu0 0
        %1254 = vmatpush2.bf16.xpose.msra.mxu0 0
        %1255 = vmatprep.subr.bf16.mxu0 0
        %1256 = vmatpush2.bf16.xpose.msra.mxu0 0
        %1257 = vmatprep.subr.bf16.mxu0 0
        %1258 = vmatpush2.bf16.xpose.msra.mxu0 0
        %1259 = vmatprep.subr.bf16.mxu0 0
        %1260 = vmatpush2.bf16.xpose.msra.mxu0 0
        %1261 = vmatprep.subr.bf16.mxu0 0
        %1262 = vmatpush2.bf16.xpose.msra.mxu0 0
        %1263 = vmatprep.subr.bf16.mxu0 0
        %1264 = vmatpush2.bf16.xpose.msra.mxu0 0
        %1265 = vmatprep.subr.bf16.mxu0 0
        %1266 = vmatpush2.bf16.xpose.msra.mxu0 0
        %1267 = vmatprep.subr.bf16.mxu0 0
        %1268 = vmatpush2.bf16.xpose.msra.mxu0 0
        %1269 = vmatprep.mubr.bf16.mxu0 0
        %1270 = vmatmul.mubr.bf16.gmra.mxu0 %v1232
        %v1271 = vpop.f32.mrf.mxu0
        %v1272 = vadd.f32 %v899, %v1271
        %v1273 = vpop.f32.mrf.mxu0
        %v1274 = vpop.f32.mrf.mxu0
        %v1275 = vpop.f32.mrf.mxu0
        %1276 = vdwg.mxu0
        %v1277 = vsel %vm950, %v1272, -inf
        %1278 = vmax.xlane.f32.xlu0 %v1277
        %v1279 = vpop.xlane.xlu0 %1278
        %v1280 = vsub.f32 %v1272, %v1279
        %v1281 = vmul.f32 %v1280, 1.442695
        %v1282 = vpow.pop %v1281
        %v1283 = vsel %vm950, %v1282, 0.0
        %1284 = vadd.xlane.f32.xlu0 %v1283
        %v1285 = vpop.xlane.xlu0 %1284
        %v1286 = vrcp.pop %v1285
        %v1287 = vmul.f32 %v1282, %v1286
        %v1288 = vpack.c.bf16 %v1287, %v1287
        %1289 = vrot.lane.b32.xlu0 %v902, 96
        %v1290 = vpop.permute.xlu0 %1289
        %v1292 = vsel %vm950, %v1288, 0
        %v1295 = vsel %vm966, %v1290, 0
        %1297 = vmatprep.subr.bf16.mxu0 0
        %1298 = vmatpush1.bf16.msra.mxu0 0
        %1299 = vmatprep.subr.bf16.mxu0 0
        %1300 = vmatpush1.bf16.msra.mxu0 0
        %1301 = vmatprep.subr.bf16.mxu0 0
        %1302 = vmatpush1.bf16.msra.mxu0 0
        %1303 = vmatprep.subr.bf16.mxu0 0
        %1304 = vmatpush1.bf16.msra.mxu0 0
        %1305 = vmatprep.subr.bf16.mxu0 0
        %1306 = vmatpush1.bf16.msra.mxu0 0
        %1307 = vmatprep.subr.bf16.mxu0 0
        %1308 = vmatpush1.bf16.msra.mxu0 0
        %1309 = vmatprep.subr.bf16.mxu0 0
        %1310 = vmatpush1.bf16.msra.mxu0 0
        %1311 = vmatprep.subr.bf16.mxu0 0
        %1312 = vmatpush1.bf16.msra.mxu0 %v1295
        %1313 = vmatprep.subr.bf16.mxu0 0
        %1314 = vmatpush2.bf16.msra.mxu0 0
        %1315 = vmatprep.subr.bf16.mxu0 0
        %1316 = vmatpush2.bf16.msra.mxu0 0
        %1317 = vmatprep.subr.bf16.mxu0 0
        %1318 = vmatpush2.bf16.msra.mxu0 0
        %1319 = vmatprep.subr.bf16.mxu0 0
        %1320 = vmatpush2.bf16.msra.mxu0 0
        %1321 = vmatprep.subr.bf16.mxu0 0
        %1322 = vmatpush2.bf16.msra.mxu0 0
        %1323 = vmatprep.subr.bf16.mxu0 0
        %1324 = vmatpush2.bf16.msra.mxu0 0
        %1325 = vmatprep.subr.bf16.mxu0 0
        %1326 = vmatpush2.bf16.msra.mxu0 0
        %1327 = vmatprep.subr.bf16.mxu0 0
        %1328 = vmatpush2.bf16.msra.mxu0 0
        %1329 = vmatprep.mubr.bf16.mxu0 0
        %1330 = vmatmul.mubr.bf16.gmra.mxu0 %v1292
        %v1331 = vpop.f32.mrf.mxu0
        %v1332 = vadd.f32 0.0, %v1331
        %v1333 = vpop.f32.mrf.mxu0
        %v1334 = vpop.f32.mrf.mxu0
        %v1335 = vpop.f32.mrf.mxu0
        %1336 = vdwg.mxu0
        %v1337 = vpack.c.bf16 %v1332, %v1332
        %v1338 = vld [vmem:[#allocation11 + $0x10] sm:$0xf]
        %v1339 = vld [vmem:[#allocation11 + $0x14] sm:$0xf]
        %v1342 = vunpack.c.l.b16 %v1338
        %v1343 = vunpack.c.l.b16 %v1339
        %v1344 = vpack.c.b16 %v1343, %v1342
        %v1347 = vsel %vm903, %v1337, 0
        %1349 = vmatprep.subr.bf16.mxu0 0
        %1350 = vmatpush1.bf16.msra.mxu0 0
        %1351 = vmatprep.subr.bf16.mxu0 0
        %1352 = vmatpush1.bf16.msra.mxu0 0
        %1353 = vmatprep.subr.bf16.mxu0 0
        %1354 = vmatpush1.bf16.msra.mxu0 0
        %1355 = vmatprep.subr.bf16.mxu0 0
        %1356 = vmatpush1.bf16.msra.mxu0 0
        %1357 = vmatprep.subr.bf16.mxu0 0
        %1358 = vmatpush1.bf16.msra.mxu0 0
        %1359 = vmatprep.subr.bf16.mxu0 0
        %1360 = vmatpush1.bf16.msra.mxu0 0
        %1361 = vmatprep.subr.bf16.mxu0 0
        %1362 = vmatpush1.bf16.msra.mxu0 0
        %1363 = vmatprep.subr.bf16.mxu0 0
        %1364 = vmatpush1.bf16.msra.mxu0 %v1344
        %1365 = vmatprep.subr.bf16.mxu0 0
        %1366 = vmatpush2.bf16.msra.mxu0 0
        %1367 = vmatprep.subr.bf16.mxu0 0
        %1368 = vmatpush2.bf16.msra.mxu0 0
        %1369 = vmatprep.subr.bf16.mxu0 0
        %1370 = vmatpush2.bf16.msra.mxu0 0
        %1371 = vmatprep.subr.bf16.mxu0 0
        %1372 = vmatpush2.bf16.msra.mxu0 0
        %1373 = vmatprep.subr.bf16.mxu0 0
        %1374 = vmatpush2.bf16.msra.mxu0 0
        %1375 = vmatprep.subr.bf16.mxu0 0
        %1376 = vmatpush2.bf16.msra.mxu0 0
        %1377 = vmatprep.subr.bf16.mxu0 0
        %1378 = vmatpush2.bf16.msra.mxu0 0
        %1379 = vmatprep.subr.bf16.mxu0 0
        %1380 = vmatpush2.bf16.msra.mxu0 0
        %1381 = vmatprep.mubr.bf16.mxu0 0
        %1382 = vmatmul.mubr.bf16.gmra.mxu0 %v1347
        %v1383 = vpop.f32.mrf.mxu0
        %v1384 = vadd.f32 0.0, %v1383
        %v1385 = vpop.f32.mrf.mxu0
        %v1386 = vpop.f32.mrf.mxu0
        %v1387 = vpop.f32.mrf.mxu0
        %1388 = vdwg.mxu0
        %v1389 = vadd.f32 %v1222, %v1384
        %1390 = vrot.lane.b32.xlu0 %v900, 80
        %v1391 = vpop.permute.xlu0 %1390
        %1392 = vrot.lane.b32.xlu0 %v901, 80
        %v1393 = vpop.permute.xlu0 %1392
        %v1395 = vsel %vm903, %v1391, 0
        %v1398 = vsel %vm903, %v1393, 0
        %1400 = vmatprep.subr.bf16.mxu0 0
        %1401 = vmatpush1.bf16.xpose.msra.mxu0 0
        %1402 = vmatprep.subr.bf16.mxu0 0
        %1403 = vmatpush1.bf16.xpose.msra.mxu0 0
        %1404 = vmatprep.subr.bf16.mxu0 0
        %1405 = vmatpush1.bf16.xpose.msra.mxu0 0
        %1406 = vmatprep.subr.bf16.mxu0 0
        %1407 = vmatpush1.bf16.xpose.msra.mxu0 0
        %1408 = vmatprep.subr.bf16.mxu0 0
        %1409 = vmatpush1.bf16.xpose.msra.mxu0 0
        %1410 = vmatprep.subr.bf16.mxu0 0
        %1411 = vmatpush1.bf16.xpose.msra.mxu0 0
        %1412 = vmatprep.subr.bf16.mxu0 0
        %1413 = vmatpush1.bf16.xpose.msra.mxu0 0
        %1414 = vmatprep.subr.bf16.mxu0 0
        %1415 = vmatpush1.bf16.xpose.msra.mxu0 %v1398
        %1416 = vmatprep.subr.bf16.mxu0 0
        %1417 = vmatpush2.bf16.xpose.msra.mxu0 0
        %1418 = vmatprep.subr.bf16.mxu0 0
        %1419 = vmatpush2.bf16.xpose.msra.mxu0 0
        %1420 = vmatprep.subr.bf16.mxu0 0
        %1421 = vmatpush2.bf16.xpose.msra.mxu0 0
        %1422 = vmatprep.subr.bf16.mxu0 0
        %1423 = vmatpush2.bf16.xpose.msra.mxu0 0
        %1424 = vmatprep.subr.bf16.mxu0 0
        %1425 = vmatpush2.bf16.xpose.msra.mxu0 0
        %1426 = vmatprep.subr.bf16.mxu0 0
        %1427 = vmatpush2.bf16.xpose.msra.mxu0 0
        %1428 = vmatprep.subr.bf16.mxu0 0
        %1429 = vmatpush2.bf16.xpose.msra.mxu0 0
        %1430 = vmatprep.subr.bf16.mxu0 0
        %1431 = vmatpush2.bf16.xpose.msra.mxu0 0
        %1432 = vmatprep.mubr.bf16.mxu0 0
        %1433 = vmatmul.mubr.bf16.gmra.mxu0 %v1395
        %v1434 = vpop.f32.mrf.mxu0
        %v1435 = vadd.f32 %v899, %v1434
        %v1436 = vpop.f32.mrf.mxu0
        %v1437 = vpop.f32.mrf.mxu0
        %v1438 = vpop.f32.mrf.mxu0
        %1439 = vdwg.mxu0
        %v1440 = vsel %vm950, %v1435, -inf
        %1441 = vmax.xlane.f32.xlu0 %v1440
        %v1442 = vpop.xlane.xlu0 %1441
        %v1443 = vsub.f32 %v1435, %v1442
        %v1444 = vmul.f32 %v1443, 1.442695
        %v1445 = vpow.pop %v1444
        %v1446 = vsel %vm950, %v1445, 0.0
        %1447 = vadd.xlane.f32.xlu0 %v1446
        %v1448 = vpop.xlane.xlu0 %1447
        %v1449 = vrcp.pop %v1448
        %v1450 = vmul.f32 %v1445, %v1449
        %v1451 = vpack.c.bf16 %v1450, %v1450
        %1452 = vrot.lane.b32.xlu0 %v902, 80
        %v1453 = vpop.permute.xlu0 %1452
        %v1455 = vsel %vm950, %v1451, 0
        %v1458 = vsel %vm966, %v1453, 0
        %1460 = vmatprep.subr.bf16.mxu0 0
        %1461 = vmatpush1.bf16.msra.mxu0 0
        %1462 = vmatprep.subr.bf16.mxu0 0
        %1463 = vmatpush1.bf16.msra.mxu0 0
        %1464 = vmatprep.subr.bf16.mxu0 0
        %1465 = vmatpush1.bf16.msra.mxu0 0
        %1466 = vmatprep.subr.bf16.mxu0 0
        %1467 = vmatpush1.bf16.msra.mxu0 0
        %1468 = vmatprep.subr.bf16.mxu0 0
        %1469 = vmatpush1.bf16.msra.mxu0 0
        %1470 = vmatprep.subr.bf16.mxu0 0
        %1471 = vmatpush1.bf16.msra.mxu0 0
        %1472 = vmatprep.subr.bf16.mxu0 0
        %1473 = vmatpush1.bf16.msra.mxu0 0
        %1474 = vmatprep.subr.bf16.mxu0 0
        %1475 = vmatpush1.bf16.msra.mxu0 %v1458
        %1476 = vmatprep.subr.bf16.mxu0 0
        %1477 = vmatpush2.bf16.msra.mxu0 0
        %1478 = vmatprep.subr.bf16.mxu0 0
        %1479 = vmatpush2.bf16.msra.mxu0 0
        %1480 = vmatprep.subr.bf16.mxu0 0
        %1481 = vmatpush2.bf16.msra.mxu0 0
        %1482 = vmatprep.subr.bf16.mxu0 0
        %1483 = vmatpush2.bf16.msra.mxu0 0
        %1484 = vmatprep.subr.bf16.mxu0 0
        %1485 = vmatpush2.bf16.msra.mxu0 0
        %1486 = vmatprep.subr.bf16.mxu0 0
        %1487 = vmatpush2.bf16.msra.mxu0 0
        %1488 = vmatprep.subr.bf16.mxu0 0
        %1489 = vmatpush2.bf16.msra.mxu0 0
        %1490 = vmatprep.subr.bf16.mxu0 0
        %1491 = vmatpush2.bf16.msra.mxu0 0
        %1492 = vmatprep.mubr.bf16.mxu0 0
        %1493 = vmatmul.mubr.bf16.gmra.mxu0 %v1455
        %v1494 = vpop.f32.mrf.mxu0
        %v1495 = vadd.f32 0.0, %v1494
        %v1496 = vpop.f32.mrf.mxu0
        %v1497 = vpop.f32.mrf.mxu0
        %v1498 = vpop.f32.mrf.mxu0
        %1499 = vdwg.mxu0
        %v1500 = vpack.c.bf16 %v1495, %v1495
        %v1501 = vld [vmem:[#allocation11 + $0x18] sm:$0xf]
        %v1502 = vld [vmem:[#allocation11 + $0x1c] sm:$0xf]
        %v1505 = vunpack.c.l.b16 %v1501
        %v1506 = vunpack.c.l.b16 %v1502
        %v1507 = vpack.c.b16 %v1506, %v1505
        %v1510 = vsel %vm903, %v1500, 0
        %1512 = vmatprep.subr.bf16.mxu0 0
        %1513 = vmatpush1.bf16.msra.mxu0 0
        %1514 = vmatprep.subr.bf16.mxu0 0
        %1515 = vmatpush1.bf16.msra.mxu0 0
        %1516 = vmatprep.subr.bf16.mxu0 0
        %1517 = vmatpush1.bf16.msra.mxu0 0
        %1518 = vmatprep.subr.bf16.mxu0 0
        %1519 = vmatpush1.bf16.msra.mxu0 0
        %1520 = vmatprep.subr.bf16.mxu0 0
        %1521 = vmatpush1.bf16.msra.mxu0 0
        %1522 = vmatprep.subr.bf16.mxu0 0
        %1523 = vmatpush1.bf16.msra.mxu0 0
        %1524 = vmatprep.subr.bf16.mxu0 0
        %1525 = vmatpush1.bf16.msra.mxu0 0
        %1526 = vmatprep.subr.bf16.mxu0 0
        %1527 = vmatpush1.bf16.msra.mxu0 %v1507
        %1528 = vmatprep.subr.bf16.mxu0 0
        %1529 = vmatpush2.bf16.msra.mxu0 0
        %1530 = vmatprep.subr.bf16.mxu0 0
        %1531 = vmatpush2.bf16.msra.mxu0 0
        %1532 = vmatprep.subr.bf16.mxu0 0
        %1533 = vmatpush2.bf16.msra.mxu0 0
        %1534 = vmatprep.subr.bf16.mxu0 0
        %1535 = vmatpush2.bf16.msra.mxu0 0
        %1536 = vmatprep.subr.bf16.mxu0 0
        %1537 = vmatpush2.bf16.msra.mxu0 0
        %1538 = vmatprep.subr.bf16.mxu0 0
        %1539 = vmatpush2.bf16.msra.mxu0 0
        %1540 = vmatprep.subr.bf16.mxu0 0
        %1541 = vmatpush2.bf16.msra.mxu0 0
        %1542 = vmatprep.subr.bf16.mxu0 0
        %1543 = vmatpush2.bf16.msra.mxu0 0
        %1544 = vmatprep.mubr.bf16.mxu0 0
        %1545 = vmatmul.mubr.bf16.gmra.mxu0 %v1510
        %v1546 = vpop.f32.mrf.mxu0
        %v1547 = vadd.f32 0.0, %v1546
        %v1548 = vpop.f32.mrf.mxu0
        %v1549 = vpop.f32.mrf.mxu0
        %v1550 = vpop.f32.mrf.mxu0
        %1551 = vdwg.mxu0
        %v1552 = vadd.f32 %v1389, %v1547
        %1553 = vrot.lane.b32.xlu0 %v900, 64
        %v1554 = vpop.permute.xlu0 %1553
        %1555 = vrot.lane.b32.xlu0 %v901, 64
        %v1556 = vpop.permute.xlu0 %1555
        %v1558 = vsel %vm903, %v1554, 0
        %v1561 = vsel %vm903, %v1556, 0
        %1563 = vmatprep.subr.bf16.mxu0 0
        %1564 = vmatpush1.bf16.xpose.msra.mxu0 0
        %1565 = vmatprep.subr.bf16.mxu0 0
        %1566 = vmatpush1.bf16.xpose.msra.mxu0 0
        %1567 = vmatprep.subr.bf16.mxu0 0
        %1568 = vmatpush1.bf16.xpose.msra.mxu0 0
        %1569 = vmatprep.subr.bf16.mxu0 0
        %1570 = vmatpush1.bf16.xpose.msra.mxu0 0
        %1571 = vmatprep.subr.bf16.mxu0 0
        %1572 = vmatpush1.bf16.xpose.msra.mxu0 0
        %1573 = vmatprep.subr.bf16.mxu0 0
        %1574 = vmatpush1.bf16.xpose.msra.mxu0 0
        %1575 = vmatprep.subr.bf16.mxu0 0
        %1576 = vmatpush1.bf16.xpose.msra.mxu0 0
        %1577 = vmatprep.subr.bf16.mxu0 0
        %1578 = vmatpush1.bf16.xpose.msra.mxu0 %v1561
        %1579 = vmatprep.subr.bf16.mxu0 0
        %1580 = vmatpush2.bf16.xpose.msra.mxu0 0
        %1581 = vmatprep.subr.bf16.mxu0 0
        %1582 = vmatpush2.bf16.xpose.msra.mxu0 0
        %1583 = vmatprep.subr.bf16.mxu0 0
        %1584 = vmatpush2.bf16.xpose.msra.mxu0 0
        %1585 = vmatprep.subr.bf16.mxu0 0
        %1586 = vmatpush2.bf16.xpose.msra.mxu0 0
        %1587 = vmatprep.subr.bf16.mxu0 0
        %1588 = vmatpush2.bf16.xpose.msra.mxu0 0
        %1589 = vmatprep.subr.bf16.mxu0 0
        %1590 = vmatpush2.bf16.xpose.msra.mxu0 0
        %1591 = vmatprep.subr.bf16.mxu0 0
        %1592 = vmatpush2.bf16.xpose.msra.mxu0 0
        %1593 = vmatprep.subr.bf16.mxu0 0
        %1594 = vmatpush2.bf16.xpose.msra.mxu0 0
        %1595 = vmatprep.mubr.bf16.mxu0 0
        %1596 = vmatmul.mubr.bf16.gmra.mxu0 %v1558
        %v1597 = vpop.f32.mrf.mxu0
        %v1598 = vadd.f32 %v899, %v1597
        %v1599 = vpop.f32.mrf.mxu0
        %v1600 = vpop.f32.mrf.mxu0
        %v1601 = vpop.f32.mrf.mxu0
        %1602 = vdwg.mxu0
        %v1603 = vsel %vm950, %v1598, -inf
        %1604 = vmax.xlane.f32.xlu0 %v1603
        %v1605 = vpop.xlane.xlu0 %1604
        %v1606 = vsub.f32 %v1598, %v1605
        %v1607 = vmul.f32 %v1606, 1.442695
        %v1608 = vpow.pop %v1607
        %v1609 = vsel %vm950, %v1608, 0.0
        %1610 = vadd.xlane.f32.xlu0 %v1609
        %v1611 = vpop.xlane.xlu0 %1610
        %v1612 = vrcp.pop %v1611
        %v1613 = vmul.f32 %v1608, %v1612
        %v1614 = vpack.c.bf16 %v1613, %v1613
        %1615 = vrot.lane.b32.xlu0 %v902, 64
        %v1616 = vpop.permute.xlu0 %1615
        %v1618 = vsel %vm950, %v1614, 0
        %v1621 = vsel %vm966, %v1616, 0
        %1623 = vmatprep.subr.bf16.mxu0 0
        %1624 = vmatpush1.bf16.msra.mxu0 0
        %1625 = vmatprep.subr.bf16.mxu0 0
        %1626 = vmatpush1.bf16.msra.mxu0 0
        %1627 = vmatprep.subr.bf16.mxu0 0
        %1628 = vmatpush1.bf16.msra.mxu0 0
        %1629 = vmatprep.subr.bf16.mxu0 0
        %1630 = vmatpush1.bf16.msra.mxu0 0
        %1631 = vmatprep.subr.bf16.mxu0 0
        %1632 = vmatpush1.bf16.msra.mxu0 0
        %1633 = vmatprep.subr.bf16.mxu0 0
        %1634 = vmatpush1.bf16.msra.mxu0 0
        %1635 = vmatprep.subr.bf16.mxu0 0
        %1636 = vmatpush1.bf16.msra.mxu0 0
        %1637 = vmatprep.subr.bf16.mxu0 0
        %1638 = vmatpush1.bf16.msra.mxu0 %v1621
        %1639 = vmatprep.subr.bf16.mxu0 0
        %1640 = vmatpush2.bf16.msra.mxu0 0
        %1641 = vmatprep.subr.bf16.mxu0 0
        %1642 = vmatpush2.bf16.msra.mxu0 0
        %1643 = vmatprep.subr.bf16.mxu0 0
        %1644 = vmatpush2.bf16.msra.mxu0 0
        %1645 = vmatprep.subr.bf16.mxu0 0
        %1646 = vmatpush2.bf16.msra.mxu0 0
        %1647 = vmatprep.subr.bf16.mxu0 0
        %1648 = vmatpush2.bf16.msra.mxu0 0
        %1649 = vmatprep.subr.bf16.mxu0 0
        %1650 = vmatpush2.bf16.msra.mxu0 0
        %1651 = vmatprep.subr.bf16.mxu0 0
        %1652 = vmatpush2.bf16.msra.mxu0 0
        %1653 = vmatprep.subr.bf16.mxu0 0
        %1654 = vmatpush2.bf16.msra.mxu0 0
        %1655 = vmatprep.mubr.bf16.mxu0 0
        %1656 = vmatmul.mubr.bf16.gmra.mxu0 %v1618
        %v1657 = vpop.f32.mrf.mxu0
        %v1658 = vadd.f32 0.0, %v1657
        %v1659 = vpop.f32.mrf.mxu0
        %v1660 = vpop.f32.mrf.mxu0
        %v1661 = vpop.f32.mrf.mxu0
        %1662 = vdwg.mxu0
        %v1663 = vpack.c.bf16 %v1658, %v1658
        %v1664 = vld [vmem:[#allocation11 + $0x20] sm:$0xf]
        %v1665 = vld [vmem:[#allocation11 + $0x24] sm:$0xf]
        %v1668 = vunpack.c.l.b16 %v1664
        %v1669 = vunpack.c.l.b16 %v1665
        %v1670 = vpack.c.b16 %v1669, %v1668
        %v1673 = vsel %vm903, %v1663, 0
        %1675 = vmatprep.subr.bf16.mxu0 0
        %1676 = vmatpush1.bf16.msra.mxu0 0
        %1677 = vmatprep.subr.bf16.mxu0 0
        %1678 = vmatpush1.bf16.msra.mxu0 0
        %1679 = vmatprep.subr.bf16.mxu0 0
        %1680 = vmatpush1.bf16.msra.mxu0 0
        %1681 = vmatprep.subr.bf16.mxu0 0
        %1682 = vmatpush1.bf16.msra.mxu0 0
        %1683 = vmatprep.subr.bf16.mxu0 0
        %1684 = vmatpush1.bf16.msra.mxu0 0
        %1685 = vmatprep.subr.bf16.mxu0 0
        %1686 = vmatpush1.bf16.msra.mxu0 0
        %1687 = vmatprep.subr.bf16.mxu0 0
        %1688 = vmatpush1.bf16.msra.mxu0 0
        %1689 = vmatprep.subr.bf16.mxu0 0
        %1690 = vmatpush1.bf16.msra.mxu0 %v1670
        %1691 = vmatprep.subr.bf16.mxu0 0
        %1692 = vmatpush2.bf16.msra.mxu0 0
        %1693 = vmatprep.subr.bf16.mxu0 0
        %1694 = vmatpush2.bf16.msra.mxu0 0
        %1695 = vmatprep.subr.bf16.mxu0 0
        %1696 = vmatpush2.bf16.msra.mxu0 0
        %1697 = vmatprep.subr.bf16.mxu0 0
        %1698 = vmatpush2.bf16.msra.mxu0 0
        %1699 = vmatprep.subr.bf16.mxu0 0
        %1700 = vmatpush2.bf16.msra.mxu0 0
        %1701 = vmatprep.subr.bf16.mxu0 0
        %1702 = vmatpush2.bf16.msra.mxu0 0
        %1703 = vmatprep.subr.bf16.mxu0 0
        %1704 = vmatpush2.bf16.msra.mxu0 0
        %1705 = vmatprep.subr.bf16.mxu0 0
        %1706 = vmatpush2.bf16.msra.mxu0 0
        %1707 = vmatprep.mubr.bf16.mxu0 0
        %1708 = vmatmul.mubr.bf16.gmra.mxu0 %v1673
        %v1709 = vpop.f32.mrf.mxu0
        %v1710 = vadd.f32 0.0, %v1709
        %v1711 = vpop.f32.mrf.mxu0
        %v1712 = vpop.f32.mrf.mxu0
        %v1713 = vpop.f32.mrf.mxu0
        %1714 = vdwg.mxu0
        %v1715 = vadd.f32 %v1552, %v1710
        %1716 = vrot.lane.b32.xlu0 %v900, 48
        %v1717 = vpop.permute.xlu0 %1716
        %1718 = vrot.lane.b32.xlu0 %v901, 48
        %v1719 = vpop.permute.xlu0 %1718
        %v1721 = vsel %vm903, %v1717, 0
        %v1724 = vsel %vm903, %v1719, 0
        %1726 = vmatprep.subr.bf16.mxu0 0
        %1727 = vmatpush1.bf16.xpose.msra.mxu0 0
        %1728 = vmatprep.subr.bf16.mxu0 0
        %1729 = vmatpush1.bf16.xpose.msra.mxu0 0
        %1730 = vmatprep.subr.bf16.mxu0 0
        %1731 = vmatpush1.bf16.xpose.msra.mxu0 0
        %1732 = vmatprep.subr.bf16.mxu0 0
        %1733 = vmatpush1.bf16.xpose.msra.mxu0 0
        %1734 = vmatprep.subr.bf16.mxu0 0
        %1735 = vmatpush1.bf16.xpose.msra.mxu0 0
        %1736 = vmatprep.subr.bf16.mxu0 0
        %1737 = vmatpush1.bf16.xpose.msra.mxu0 0
        %1738 = vmatprep.subr.bf16.mxu0 0
        %1739 = vmatpush1.bf16.xpose.msra.mxu0 0
        %1740 = vmatprep.subr.bf16.mxu0 0
        %1741 = vmatpush1.bf16.xpose.msra.mxu0 %v1724
        %1742 = vmatprep.subr.bf16.mxu0 0
        %1743 = vmatpush2.bf16.xpose.msra.mxu0 0
        %1744 = vmatprep.subr.bf16.mxu0 0
        %1745 = vmatpush2.bf16.xpose.msra.mxu0 0
        %1746 = vmatprep.subr.bf16.mxu0 0
        %1747 = vmatpush2.bf16.xpose.msra.mxu0 0
        %1748 = vmatprep.subr.bf16.mxu0 0
        %1749 = vmatpush2.bf16.xpose.msra.mxu0 0
        %1750 = vmatprep.subr.bf16.mxu0 0
        %1751 = vmatpush2.bf16.xpose.msra.mxu0 0
        %1752 = vmatprep.subr.bf16.mxu0 0
        %1753 = vmatpush2.bf16.xpose.msra.mxu0 0
        %1754 = vmatprep.subr.bf16.mxu0 0
        %1755 = vmatpush2.bf16.xpose.msra.mxu0 0
        %1756 = vmatprep.subr.bf16.mxu0 0
        %1757 = vmatpush2.bf16.xpose.msra.mxu0 0
        %1758 = vmatprep.mubr.bf16.mxu0 0
        %1759 = vmatmul.mubr.bf16.gmra.mxu0 %v1721
        %v1760 = vpop.f32.mrf.mxu0
        %v1761 = vadd.f32 %v899, %v1760
        %v1762 = vpop.f32.mrf.mxu0
        %v1763 = vpop.f32.mrf.mxu0
        %v1764 = vpop.f32.mrf.mxu0
        %1765 = vdwg.mxu0
        %v1766 = vsel %vm950, %v1761, -inf
        %1767 = vmax.xlane.f32.xlu0 %v1766
        %v1768 = vpop.xlane.xlu0 %1767
        %v1769 = vsub.f32 %v1761, %v1768
        %v1770 = vmul.f32 %v1769, 1.442695
        %v1771 = vpow.pop %v1770
        %v1772 = vsel %vm950, %v1771, 0.0
        %1773 = vadd.xlane.f32.xlu0 %v1772
        %v1774 = vpop.xlane.xlu0 %1773
        %v1775 = vrcp.pop %v1774
        %v1776 = vmul.f32 %v1771, %v1775
        %v1777 = vpack.c.bf16 %v1776, %v1776
        %1778 = vrot.lane.b32.xlu0 %v902, 48
        %v1779 = vpop.permute.xlu0 %1778
        %v1781 = vsel %vm950, %v1777, 0
        %v1784 = vsel %vm966, %v1779, 0
        %1786 = vmatprep.subr.bf16.mxu0 0
        %1787 = vmatpush1.bf16.msra.mxu0 0
        %1788 = vmatprep.subr.bf16.mxu0 0
        %1789 = vmatpush1.bf16.msra.mxu0 0
        %1790 = vmatprep.subr.bf16.mxu0 0
        %1791 = vmatpush1.bf16.msra.mxu0 0
        %1792 = vmatprep.subr.bf16.mxu0 0
        %1793 = vmatpush1.bf16.msra.mxu0 0
        %1794 = vmatprep.subr.bf16.mxu0 0
        %1795 = vmatpush1.bf16.msra.mxu0 0
        %1796 = vmatprep.subr.bf16.mxu0 0
        %1797 = vmatpush1.bf16.msra.mxu0 0
        %1798 = vmatprep.subr.bf16.mxu0 0
        %1799 = vmatpush1.bf16.msra.mxu0 0
        %1800 = vmatprep.subr.bf16.mxu0 0
        %1801 = vmatpush1.bf16.msra.mxu0 %v1784
        %1802 = vmatprep.subr.bf16.mxu0 0
        %1803 = vmatpush2.bf16.msra.mxu0 0
        %1804 = vmatprep.subr.bf16.mxu0 0
        %1805 = vmatpush2.bf16.msra.mxu0 0
        %1806 = vmatprep.subr.bf16.mxu0 0
        %1807 = vmatpush2.bf16.msra.mxu0 0
        %1808 = vmatprep.subr.bf16.mxu0 0
        %1809 = vmatpush2.bf16.msra.mxu0 0
        %1810 = vmatprep.subr.bf16.mxu0 0
        %1811 = vmatpush2.bf16.msra.mxu0 0
        %1812 = vmatprep.subr.bf16.mxu0 0
        %1813 = vmatpush2.bf16.msra.mxu0 0
        %1814 = vmatprep.subr.bf16.mxu0 0
        %1815 = vmatpush2.bf16.msra.mxu0 0
        %1816 = vmatprep.subr.bf16.mxu0 0
        %1817 = vmatpush2.bf16.msra.mxu0 0
        %1818 = vmatprep.mubr.bf16.mxu0 0
        %1819 = vmatmul.mubr.bf16.gmra.mxu0 %v1781
        %v1820 = vpop.f32.mrf.mxu0
        %v1821 = vadd.f32 0.0, %v1820
        %v1822 = vpop.f32.mrf.mxu0
        %v1823 = vpop.f32.mrf.mxu0
        %v1824 = vpop.f32.mrf.mxu0
        %1825 = vdwg.mxu0
        %v1826 = vpack.c.bf16 %v1821, %v1821
        %v1827 = vld [vmem:[#allocation11 + $0x28] sm:$0xf]
        %v1828 = vld [vmem:[#allocation11 + $0x2c] sm:$0xf]
        %v1831 = vunpack.c.l.b16 %v1827
        %v1832 = vunpack.c.l.b16 %v1828
        %v1833 = vpack.c.b16 %v1832, %v1831
        %v1836 = vsel %vm903, %v1826, 0
        %1838 = vmatprep.subr.bf16.mxu0 0
        %1839 = vmatpush1.bf16.msra.mxu0 0
        %1840 = vmatprep.subr.bf16.mxu0 0
        %1841 = vmatpush1.bf16.msra.mxu0 0
        %1842 = vmatprep.subr.bf16.mxu0 0
        %1843 = vmatpush1.bf16.msra.mxu0 0
        %1844 = vmatprep.subr.bf16.mxu0 0
        %1845 = vmatpush1.bf16.msra.mxu0 0
        %1846 = vmatprep.subr.bf16.mxu0 0
        %1847 = vmatpush1.bf16.msra.mxu0 0
        %1848 = vmatprep.subr.bf16.mxu0 0
        %1849 = vmatpush1.bf16.msra.mxu0 0
        %1850 = vmatprep.subr.bf16.mxu0 0
        %1851 = vmatpush1.bf16.msra.mxu0 0
        %1852 = vmatprep.subr.bf16.mxu0 0
        %1853 = vmatpush1.bf16.msra.mxu0 %v1833
        %1854 = vmatprep.subr.bf16.mxu0 0
        %1855 = vmatpush2.bf16.msra.mxu0 0
        %1856 = vmatprep.subr.bf16.mxu0 0
        %1857 = vmatpush2.bf16.msra.mxu0 0
        %1858 = vmatprep.subr.bf16.mxu0 0
        %1859 = vmatpush2.bf16.msra.mxu0 0
        %1860 = vmatprep.subr.bf16.mxu0 0
        %1861 = vmatpush2.bf16.msra.mxu0 0
        %1862 = vmatprep.subr.bf16.mxu0 0
        %1863 = vmatpush2.bf16.msra.mxu0 0
        %1864 = vmatprep.subr.bf16.mxu0 0
        %1865 = vmatpush2.bf16.msra.mxu0 0
        %1866 = vmatprep.subr.bf16.mxu0 0
        %1867 = vmatpush2.bf16.msra.mxu0 0
        %1868 = vmatprep.subr.bf16.mxu0 0
        %1869 = vmatpush2.bf16.msra.mxu0 0
        %1870 = vmatprep.mubr.bf16.mxu0 0
        %1871 = vmatmul.mubr.bf16.gmra.mxu0 %v1836
        %v1872 = vpop.f32.mrf.mxu0
        %v1873 = vadd.f32 0.0, %v1872
        %v1874 = vpop.f32.mrf.mxu0
        %v1875 = vpop.f32.mrf.mxu0
        %v1876 = vpop.f32.mrf.mxu0
        %1877 = vdwg.mxu0
        %v1878 = vadd.f32 %v1715, %v1873
        %1879 = vrot.lane.b32.xlu0 %v900, 32
        %v1880 = vpop.permute.xlu0 %1879
        %1881 = vrot.lane.b32.xlu0 %v901, 32
        %v1882 = vpop.permute.xlu0 %1881
        %v1884 = vsel %vm903, %v1880, 0
        %v1887 = vsel %vm903, %v1882, 0
        %1889 = vmatprep.subr.bf16.mxu0 0
        %1890 = vmatpush1.bf16.xpose.msra.mxu0 0
        %1891 = vmatprep.subr.bf16.mxu0 0
        %1892 = vmatpush1.bf16.xpose.msra.mxu0 0
        %1893 = vmatprep.subr.bf16.mxu0 0
        %1894 = vmatpush1.bf16.xpose.msra.mxu0 0
        %1895 = vmatprep.subr.bf16.mxu0 0
        %1896 = vmatpush1.bf16.xpose.msra.mxu0 0
        %1897 = vmatprep.subr.bf16.mxu0 0
        %1898 = vmatpush1.bf16.xpose.msra.mxu0 0
        %1899 = vmatprep.subr.bf16.mxu0 0
        %1900 = vmatpush1.bf16.xpose.msra.mxu0 0
        %1901 = vmatprep.subr.bf16.mxu0 0
        %1902 = vmatpush1.bf16.xpose.msra.mxu0 0
        %1903 = vmatprep.subr.bf16.mxu0 0
        %1904 = vmatpush1.bf16.xpose.msra.mxu0 %v1887
        %1905 = vmatprep.subr.bf16.mxu0 0
        %1906 = vmatpush2.bf16.xpose.msra.mxu0 0
        %1907 = vmatprep.subr.bf16.mxu0 0
        %1908 = vmatpush2.bf16.xpose.msra.mxu0 0
        %1909 = vmatprep.subr.bf16.mxu0 0
        %1910 = vmatpush2.bf16.xpose.msra.mxu0 0
        %1911 = vmatprep.subr.bf16.mxu0 0
        %1912 = vmatpush2.bf16.xpose.msra.mxu0 0
        %1913 = vmatprep.subr.bf16.mxu0 0
        %1914 = vmatpush2.bf16.xpose.msra.mxu0 0
        %1915 = vmatprep.subr.bf16.mxu0 0
        %1916 = vmatpush2.bf16.xpose.msra.mxu0 0
        %1917 = vmatprep.subr.bf16.mxu0 0
        %1918 = vmatpush2.bf16.xpose.msra.mxu0 0
        %1919 = vmatprep.subr.bf16.mxu0 0
        %1920 = vmatpush2.bf16.xpose.msra.mxu0 0
        %1921 = vmatprep.mubr.bf16.mxu0 0
        %1922 = vmatmul.mubr.bf16.gmra.mxu0 %v1884
        %v1923 = vpop.f32.mrf.mxu0
        %v1924 = vadd.f32 %v899, %v1923
        %v1925 = vpop.f32.mrf.mxu0
        %v1926 = vpop.f32.mrf.mxu0
        %v1927 = vpop.f32.mrf.mxu0
        %1928 = vdwg.mxu0
        %v1929 = vsel %vm950, %v1924, -inf
        %1930 = vmax.xlane.f32.xlu0 %v1929
        %v1931 = vpop.xlane.xlu0 %1930
        %v1932 = vsub.f32 %v1924, %v1931
        %v1933 = vmul.f32 %v1932, 1.442695
        %v1934 = vpow.pop %v1933
        %v1935 = vsel %vm950, %v1934, 0.0
        %1936 = vadd.xlane.f32.xlu0 %v1935
        %v1937 = vpop.xlane.xlu0 %1936
        %v1938 = vrcp.pop %v1937
        %v1939 = vmul.f32 %v1934, %v1938
        %v1940 = vpack.c.bf16 %v1939, %v1939
        %1941 = vrot.lane.b32.xlu0 %v902, 32
        %v1942 = vpop.permute.xlu0 %1941
        %v1944 = vsel %vm950, %v1940, 0
        %v1947 = vsel %vm966, %v1942, 0
        %1949 = vmatprep.subr.bf16.mxu0 0
        %1950 = vmatpush1.bf16.msra.mxu0 0
        %1951 = vmatprep.subr.bf16.mxu0 0
        %1952 = vmatpush1.bf16.msra.mxu0 0
        %1953 = vmatprep.subr.bf16.mxu0 0
        %1954 = vmatpush1.bf16.msra.mxu0 0
        %1955 = vmatprep.subr.bf16.mxu0 0
        %1956 = vmatpush1.bf16.msra.mxu0 0
        %1957 = vmatprep.subr.bf16.mxu0 0
        %1958 = vmatpush1.bf16.msra.mxu0 0
        %1959 = vmatprep.subr.bf16.mxu0 0
        %1960 = vmatpush1.bf16.msra.mxu0 0
        %1961 = vmatprep.subr.bf16.mxu0 0
        %1962 = vmatpush1.bf16.msra.mxu0 0
        %1963 = vmatprep.subr.bf16.mxu0 0
        %1964 = vmatpush1.bf16.msra.mxu0 %v1947
        %1965 = vmatprep.subr.bf16.mxu0 0
        %1966 = vmatpush2.bf16.msra.mxu0 0
        %1967 = vmatprep.subr.bf16.mxu0 0
        %1968 = vmatpush2.bf16.msra.mxu0 0
        %1969 = vmatprep.subr.bf16.mxu0 0
        %1970 = vmatpush2.bf16.msra.mxu0 0
        %1971 = vmatprep.subr.bf16.mxu0 0
        %1972 = vmatpush2.bf16.msra.mxu0 0
        %1973 = vmatprep.subr.bf16.mxu0 0
        %1974 = vmatpush2.bf16.msra.mxu0 0
        %1975 = vmatprep.subr.bf16.mxu0 0
        %1976 = vmatpush2.bf16.msra.mxu0 0
        %1977 = vmatprep.subr.bf16.mxu0 0
        %1978 = vmatpush2.bf16.msra.mxu0 0
        %1979 = vmatprep.subr.bf16.mxu0 0
        %1980 = vmatpush2.bf16.msra.mxu0 0
        %1981 = vmatprep.mubr.bf16.mxu0 0
        %1982 = vmatmul.mubr.bf16.gmra.mxu0 %v1944
        %v1983 = vpop.f32.mrf.mxu0
        %v1984 = vadd.f32 0.0, %v1983
        %v1985 = vpop.f32.mrf.mxu0
        %v1986 = vpop.f32.mrf.mxu0
        %v1987 = vpop.f32.mrf.mxu0
        %1988 = vdwg.mxu0
        %v1989 = vpack.c.bf16 %v1984, %v1984
        %v1990 = vld [vmem:[#allocation11 + $0x30] sm:$0xf]
        %v1991 = vld [vmem:[#allocation11 + $0x34] sm:$0xf]
        %v1994 = vunpack.c.l.b16 %v1990
        %v1995 = vunpack.c.l.b16 %v1991
        %v1996 = vpack.c.b16 %v1995, %v1994
        %v1999 = vsel %vm903, %v1989, 0
        %2001 = vmatprep.subr.bf16.mxu0 0
        %2002 = vmatpush1.bf16.msra.mxu0 0
        %2003 = vmatprep.subr.bf16.mxu0 0
        %2004 = vmatpush1.bf16.msra.mxu0 0
        %2005 = vmatprep.subr.bf16.mxu0 0
        %2006 = vmatpush1.bf16.msra.mxu0 0
        %2007 = vmatprep.subr.bf16.mxu0 0
        %2008 = vmatpush1.bf16.msra.mxu0 0
        %2009 = vmatprep.subr.bf16.mxu0 0
        %2010 = vmatpush1.bf16.msra.mxu0 0
        %2011 = vmatprep.subr.bf16.mxu0 0
        %2012 = vmatpush1.bf16.msra.mxu0 0
        %2013 = vmatprep.subr.bf16.mxu0 0
        %2014 = vmatpush1.bf16.msra.mxu0 0
        %2015 = vmatprep.subr.bf16.mxu0 0
        %2016 = vmatpush1.bf16.msra.mxu0 %v1996
        %2017 = vmatprep.subr.bf16.mxu0 0
        %2018 = vmatpush2.bf16.msra.mxu0 0
        %2019 = vmatprep.subr.bf16.mxu0 0
        %2020 = vmatpush2.bf16.msra.mxu0 0
        %2021 = vmatprep.subr.bf16.mxu0 0
        %2022 = vmatpush2.bf16.msra.mxu0 0
        %2023 = vmatprep.subr.bf16.mxu0 0
        %2024 = vmatpush2.bf16.msra.mxu0 0
        %2025 = vmatprep.subr.bf16.mxu0 0
        %2026 = vmatpush2.bf16.msra.mxu0 0
        %2027 = vmatprep.subr.bf16.mxu0 0
        %2028 = vmatpush2.bf16.msra.mxu0 0
        %2029 = vmatprep.subr.bf16.mxu0 0
        %2030 = vmatpush2.bf16.msra.mxu0 0
        %2031 = vmatprep.subr.bf16.mxu0 0
        %2032 = vmatpush2.bf16.msra.mxu0 0
        %2033 = vmatprep.mubr.bf16.mxu0 0
        %2034 = vmatmul.mubr.bf16.gmra.mxu0 %v1999
        %v2035 = vpop.f32.mrf.mxu0
        %v2036 = vadd.f32 0.0, %v2035
        %v2037 = vpop.f32.mrf.mxu0
        %v2038 = vpop.f32.mrf.mxu0
        %v2039 = vpop.f32.mrf.mxu0
        %2040 = vdwg.mxu0
        %v2041 = vadd.f32 %v1878, %v2036
        %2042 = vrot.lane.b32.xlu0 %v900, 16
        %v2043 = vpop.permute.xlu0 %2042
        %2044 = vrot.lane.b32.xlu0 %v901, 16
        %v2045 = vpop.permute.xlu0 %2044
        %v2047 = vsel %vm903, %v2043, 0
        %v2050 = vsel %vm903, %v2045, 0
        %2052 = vmatprep.subr.bf16.mxu0 0
        %2053 = vmatpush1.bf16.xpose.msra.mxu0 0
        %2054 = vmatprep.subr.bf16.mxu0 0
        %2055 = vmatpush1.bf16.xpose.msra.mxu0 0
        %2056 = vmatprep.subr.bf16.mxu0 0
        %2057 = vmatpush1.bf16.xpose.msra.mxu0 0
        %2058 = vmatprep.subr.bf16.mxu0 0
        %2059 = vmatpush1.bf16.xpose.msra.mxu0 0
        %2060 = vmatprep.subr.bf16.mxu0 0
        %2061 = vmatpush1.bf16.xpose.msra.mxu0 0
        %2062 = vmatprep.subr.bf16.mxu0 0
        %2063 = vmatpush1.bf16.xpose.msra.mxu0 0
        %2064 = vmatprep.subr.bf16.mxu0 0
        %2065 = vmatpush1.bf16.xpose.msra.mxu0 0
        %2066 = vmatprep.subr.bf16.mxu0 0
        %2067 = vmatpush1.bf16.xpose.msra.mxu0 %v2050
        %2068 = vmatprep.subr.bf16.mxu0 0
        %2069 = vmatpush2.bf16.xpose.msra.mxu0 0
        %2070 = vmatprep.subr.bf16.mxu0 0
        %2071 = vmatpush2.bf16.xpose.msra.mxu0 0
        %2072 = vmatprep.subr.bf16.mxu0 0
        %2073 = vmatpush2.bf16.xpose.msra.mxu0 0
        %2074 = vmatprep.subr.bf16.mxu0 0
        %2075 = vmatpush2.bf16.xpose.msra.mxu0 0
        %2076 = vmatprep.subr.bf16.mxu0 0
        %2077 = vmatpush2.bf16.xpose.msra.mxu0 0
        %2078 = vmatprep.subr.bf16.mxu0 0
        %2079 = vmatpush2.bf16.xpose.msra.mxu0 0
        %2080 = vmatprep.subr.bf16.mxu0 0
        %2081 = vmatpush2.bf16.xpose.msra.mxu0 0
        %2082 = vmatprep.subr.bf16.mxu0 0
        %2083 = vmatpush2.bf16.xpose.msra.mxu0 0
        %2084 = vmatprep.mubr.bf16.mxu0 0
        %2085 = vmatmul.mubr.bf16.gmra.mxu0 %v2047
        %v2086 = vpop.f32.mrf.mxu0
        %v2087 = vadd.f32 %v899, %v2086
        %v2088 = vpop.f32.mrf.mxu0
        %v2089 = vpop.f32.mrf.mxu0
        %v2090 = vpop.f32.mrf.mxu0
        %2091 = vdwg.mxu0
        %v2092 = vsel %vm950, %v2087, -inf
        %2093 = vmax.xlane.f32.xlu0 %v2092
        %v2094 = vpop.xlane.xlu0 %2093
        %v2095 = vsub.f32 %v2087, %v2094
        %v2096 = vmul.f32 %v2095, 1.442695
        %v2097 = vpow.pop %v2096
        %v2098 = vsel %vm950, %v2097, 0.0
        %2099 = vadd.xlane.f32.xlu0 %v2098
        %v2100 = vpop.xlane.xlu0 %2099
        %v2101 = vrcp.pop %v2100
        %v2102 = vmul.f32 %v2097, %v2101
        %v2103 = vpack.c.bf16 %v2102, %v2102
        %2104 = vrot.lane.b32.xlu0 %v902, 16
        %v2105 = vpop.permute.xlu0 %2104
        %v2107 = vsel %vm950, %v2103, 0
        %v2110 = vsel %vm966, %v2105, 0
        %2112 = vmatprep.subr.bf16.mxu0 0
        %2113 = vmatpush1.bf16.msra.mxu0 0
        %2114 = vmatprep.subr.bf16.mxu0 0
        %2115 = vmatpush1.bf16.msra.mxu0 0
        %2116 = vmatprep.subr.bf16.mxu0 0
        %2117 = vmatpush1.bf16.msra.mxu0 0
        %2118 = vmatprep.subr.bf16.mxu0 0
        %2119 = vmatpush1.bf16.msra.mxu0 0
        %2120 = vmatprep.subr.bf16.mxu0 0
        %2121 = vmatpush1.bf16.msra.mxu0 0
        %2122 = vmatprep.subr.bf16.mxu0 0
        %2123 = vmatpush1.bf16.msra.mxu0 0
        %2124 = vmatprep.subr.bf16.mxu0 0
        %2125 = vmatpush1.bf16.msra.mxu0 0
        %2126 = vmatprep.subr.bf16.mxu0 0
        %2127 = vmatpush1.bf16.msra.mxu0 %v2110
        %2128 = vmatprep.subr.bf16.mxu0 0
        %2129 = vmatpush2.bf16.msra.mxu0 0
        %2130 = vmatprep.subr.bf16.mxu0 0
        %2131 = vmatpush2.bf16.msra.mxu0 0
        %2132 = vmatprep.subr.bf16.mxu0 0
        %2133 = vmatpush2.bf16.msra.mxu0 0
        %2134 = vmatprep.subr.bf16.mxu0 0
        %2135 = vmatpush2.bf16.msra.mxu0 0
        %2136 = vmatprep.subr.bf16.mxu0 0
        %2137 = vmatpush2.bf16.msra.mxu0 0
        %2138 = vmatprep.subr.bf16.mxu0 0
        %2139 = vmatpush2.bf16.msra.mxu0 0
        %2140 = vmatprep.subr.bf16.mxu0 0
        %2141 = vmatpush2.bf16.msra.mxu0 0
        %2142 = vmatprep.subr.bf16.mxu0 0
        %2143 = vmatpush2.bf16.msra.mxu0 0
        %2144 = vmatprep.mubr.bf16.mxu0 0
        %2145 = vmatmul.mubr.bf16.gmra.mxu0 %v2107
        %v2146 = vpop.f32.mrf.mxu0
        %v2147 = vadd.f32 0.0, %v2146
        %v2148 = vpop.f32.mrf.mxu0
        %v2149 = vpop.f32.mrf.mxu0
        %v2150 = vpop.f32.mrf.mxu0
        %2151 = vdwg.mxu0
        %v2152 = vpack.c.bf16 %v2147, %v2147
        %v2153 = vld [vmem:[#allocation11 + $0x38] sm:$0xf]
        %v2154 = vld [vmem:[#allocation11 + $0x3c] sm:$0xf]
        %v2157 = vunpack.c.l.b16 %v2153
        %v2158 = vunpack.c.l.b16 %v2154
        %v2159 = vpack.c.b16 %v2158, %v2157
        %v2162 = vsel %vm903, %v2152, 0
        %2164 = vmatprep.subr.bf16.mxu0 0
        %2165 = vmatpush1.bf16.msra.mxu0 0
        %2166 = vmatprep.subr.bf16.mxu0 0
        %2167 = vmatpush1.bf16.msra.mxu0 0
        %2168 = vmatprep.subr.bf16.mxu0 0
        %2169 = vmatpush1.bf16.msra.mxu0 0
        %2170 = vmatprep.subr.bf16.mxu0 0
        %2171 = vmatpush1.bf16.msra.mxu0 0
        %2172 = vmatprep.subr.bf16.mxu0 0
        %2173 = vmatpush1.bf16.msra.mxu0 0
        %2174 = vmatprep.subr.bf16.mxu0 0
        %2175 = vmatpush1.bf16.msra.mxu0 0
        %2176 = vmatprep.subr.bf16.mxu0 0
        %2177 = vmatpush1.bf16.msra.mxu0 0
        %2178 = vmatprep.subr.bf16.mxu0 0
        %2179 = vmatpush1.bf16.msra.mxu0 %v2159
        %2180 = vmatprep.subr.bf16.mxu0 0
        %2181 = vmatpush2.bf16.msra.mxu0 0
        %2182 = vmatprep.subr.bf16.mxu0 0
        %2183 = vmatpush2.bf16.msra.mxu0 0
        %2184 = vmatprep.subr.bf16.mxu0 0
        %2185 = vmatpush2.bf16.msra.mxu0 0
        %2186 = vmatprep.subr.bf16.mxu0 0
        %2187 = vmatpush2.bf16.msra.mxu0 0
        %2188 = vmatprep.subr.bf16.mxu0 0
        %2189 = vmatpush2.bf16.msra.mxu0 0
        %2190 = vmatprep.subr.bf16.mxu0 0
        %2191 = vmatpush2.bf16.msra.mxu0 0
        %2192 = vmatprep.subr.bf16.mxu0 0
        %2193 = vmatpush2.bf16.msra.mxu0 0
        %2194 = vmatprep.subr.bf16.mxu0 0
        %2195 = vmatpush2.bf16.msra.mxu0 0
        %2196 = vmatprep.mubr.bf16.mxu0 0
        %2197 = vmatmul.mubr.bf16.gmra.mxu0 %v2162
        %v2198 = vpop.f32.mrf.mxu0
        %v2199 = vadd.f32 0.0, %v2198
        %v2200 = vpop.f32.mrf.mxu0
        %v2201 = vpop.f32.mrf.mxu0
        %v2202 = vpop.f32.mrf.mxu0
        %2203 = vdwg.mxu0
        %v2204 = vadd.f32 %v2041, %v2199
        %v2205 = vld [vmem:[%s7] sm:$0x1]
        %v2207 = vlaneseq
        %v2208 = vshrl.u32 %v2207, 7
        %v2209 = vsub.s32 0, %v2208
        %v2210 = vrot.slane %v2205, %v2209
        %v2212 = vadd.f32 %v2204, %v2210
        %v2213 = vadd.f32 %v606, %v2212
        %v2214 = vld [vmem:[%s8] sm:$0x1]
        %v2215 = vld [vmem:[%s9] sm:$0x1]
        %2216 = vadd.xlane.f32.xlu0 %v2213
        %v2217 = vpop.xlane.xlu0 %2216
        %v2218 = vmul.f32 %v2217, %v611
        %v2219 = vsub.f32 %v2213, %v2218
        %v2220 = vmul.f32 %v2219, %v2219
        %2221 = vadd.xlane.f32.xlu0 %v2220
        %v2222 = vpop.xlane.xlu0 %2221
        %v2223 = vmul.f32 %v2222, %v611
        %v2224 = vadd.f32 %v2223, 1e-05
        %v2225 = vrsqrt.pop %v2224
        %v2226 = vmul.f32 %v2219, %v2225
        %v2228 = vlaneseq
        %v2229 = vshrl.u32 %v2228, 7
        %v2230 = vsub.s32 0, %v2229
        %v2231 = vrot.slane %v2214, %v2230
        %v2233 = vmul.f32 %v2226, %v2231
        %v2235 = vlaneseq
        %v2236 = vshrl.u32 %v2235, 7
        %v2237 = vsub.s32 0, %v2236
        %v2238 = vrot.slane %v2215, %v2237
        %v2240 = vadd.f32 %v2233, %v2238
        %v2241 = vpack.c.bf16 %v2240, %v2240
        %v2242 = vld [vmem:[#allocation13] sm:$0xff]
        %v2243 = vld [vmem:[#allocation13 + $0x8] sm:$0xff]
        %v2244 = vld [vmem:[#allocation13 + $0x10] sm:$0xff]
        %v2245 = vld [vmem:[#allocation13 + $0x18] sm:$0xff]
        %v2246 = vld [vmem:[#allocation13 + $0x20] sm:$0xff]
        %v2247 = vld [vmem:[#allocation13 + $0x28] sm:$0xff]
        %v2248 = vld [vmem:[#allocation13 + $0x30] sm:$0xff]
        %v2249 = vld [vmem:[#allocation13 + $0x38] sm:$0xff]
        %v2250 = vld [vmem:[#allocation13 + $0x40] sm:$0xff]
        %v2251 = vld [vmem:[#allocation13 + $0x48] sm:$0xff]
        %v2252 = vld [vmem:[#allocation13 + $0x50] sm:$0xff]
        %v2253 = vld [vmem:[#allocation13 + $0x58] sm:$0xff]
        %v2254 = vld [vmem:[#allocation13 + $0x60] sm:$0xff]
        %v2255 = vld [vmem:[#allocation13 + $0x68] sm:$0xff]
        %v2256 = vld [vmem:[#allocation13 + $0x70] sm:$0xff]
        %v2257 = vld [vmem:[#allocation13 + $0x78] sm:$0xff]
        %v2258 = vld [vmem:[#allocation13 + $0x80] sm:$0xff]
        %v2259 = vld [vmem:[#allocation13 + $0x88] sm:$0xff]
        %v2260 = vld [vmem:[#allocation13 + $0x90] sm:$0xff]
        %v2261 = vld [vmem:[#allocation13 + $0x98] sm:$0xff]
        %v2262 = vld [vmem:[#allocation13 + $0xa0] sm:$0xff]
        %v2263 = vld [vmem:[#allocation13 + $0xa8] sm:$0xff]
        %v2264 = vld [vmem:[#allocation13 + $0xb0] sm:$0xff]
        %v2265 = vld [vmem:[#allocation13 + $0xb8] sm:$0xff]
        %v2266 = vld [vmem:[#allocation13 + $0xc0] sm:$0xff]
        %v2267 = vld [vmem:[#allocation13 + $0xc8] sm:$0xff]
        %v2268 = vld [vmem:[#allocation13 + $0xd0] sm:$0xff]
        %v2269 = vld [vmem:[#allocation13 + $0xd8] sm:$0xff]
        %v2270 = vld [vmem:[#allocation13 + $0xe0] sm:$0xff]
        %v2271 = vld [vmem:[#allocation13 + $0xe8] sm:$0xff]
        %v2272 = vld [vmem:[#allocation13 + $0xf0] sm:$0xff]
        %v2273 = vld [vmem:[#allocation13 + $0xf8] sm:$0xff]
        %v2274 = vld [vmem:[%s11] sm:$0xf]
        %v2276 = vlaneseq
        %v2277 = vshrl.u32 %v2276, 7
        %v2278 = vsub.s32 0, %v2277
        %v2279 = vrot.slane %v2274, %v2278
        %v2280 = vlaneseq
        %v2281 = vshrl.u32 %v2280, 7
        %v2282 = vsub.s32 1, %v2281
        %v2283 = vrot.slane %v2274, %v2282
        %v2284 = vlaneseq
        %v2285 = vshrl.u32 %v2284, 7
        %v2286 = vsub.s32 2, %v2285
        %v2287 = vrot.slane %v2274, %v2286
        %v2288 = vlaneseq
        %v2289 = vshrl.u32 %v2288, 7
        %v2290 = vsub.s32 3, %v2289
        %v2291 = vrot.slane %v2274, %v2290
        %v2328 = vunpack.c.l.b16 %v2242
        %v2329 = vunpack.c.h.b16 %v2242
        %v2330 = vunpack.c.l.b16 %v2243
        %v2331 = vunpack.c.h.b16 %v2243
        %v2332 = vunpack.c.l.b16 %v2244
        %v2333 = vunpack.c.h.b16 %v2244
        %v2334 = vunpack.c.l.b16 %v2245
        %v2335 = vunpack.c.h.b16 %v2245
        %v2336 = vunpack.c.l.b16 %v2246
        %v2337 = vunpack.c.h.b16 %v2246
        %v2338 = vunpack.c.l.b16 %v2247
        %v2339 = vunpack.c.h.b16 %v2247
        %v2340 = vunpack.c.l.b16 %v2248
        %v2341 = vunpack.c.h.b16 %v2248
        %v2342 = vunpack.c.l.b16 %v2249
        %v2343 = vunpack.c.h.b16 %v2249
        %v2344 = vunpack.c.l.b16 %v2250
        %v2345 = vunpack.c.h.b16 %v2250
        %v2346 = vunpack.c.l.b16 %v2251
        %v2347 = vunpack.c.h.b16 %v2251
        %v2348 = vunpack.c.l.b16 %v2252
        %v2349 = vunpack.c.h.b16 %v2252
        %v2350 = vunpack.c.l.b16 %v2253
        %v2351 = vunpack.c.h.b16 %v2253
        %v2352 = vunpack.c.l.b16 %v2254
        %v2353 = vunpack.c.h.b16 %v2254
        %v2354 = vunpack.c.l.b16 %v2255
        %v2355 = vunpack.c.h.b16 %v2255
        %v2356 = vunpack.c.l.b16 %v2256
        %v2357 = vunpack.c.h.b16 %v2256
        %v2358 = vunpack.c.l.b16 %v2257
        %v2359 = vunpack.c.h.b16 %v2257
        %v2360 = vunpack.c.l.b16 %v2258
        %v2361 = vunpack.c.h.b16 %v2258
        %v2362 = vunpack.c.l.b16 %v2259
        %v2363 = vunpack.c.h.b16 %v2259
        %v2364 = vunpack.c.l.b16 %v2260
        %v2365 = vunpack.c.h.b16 %v2260
        %v2366 = vunpack.c.l.b16 %v2261
        %v2367 = vunpack.c.h.b16 %v2261
        %v2368 = vunpack.c.l.b16 %v2262
        %v2369 = vunpack.c.h.b16 %v2262
        %v2370 = vunpack.c.l.b16 %v2263
        %v2371 = vunpack.c.h.b16 %v2263
        %v2372 = vunpack.c.l.b16 %v2264
        %v2373 = vunpack.c.h.b16 %v2264
        %v2374 = vunpack.c.l.b16 %v2265
        %v2375 = vunpack.c.h.b16 %v2265
        %v2376 = vunpack.c.l.b16 %v2266
        %v2377 = vunpack.c.h.b16 %v2266
        %v2378 = vunpack.c.l.b16 %v2267
        %v2379 = vunpack.c.h.b16 %v2267
        %v2380 = vunpack.c.l.b16 %v2268
        %v2381 = vunpack.c.h.b16 %v2268
        %v2382 = vunpack.c.l.b16 %v2269
        %v2383 = vunpack.c.h.b16 %v2269
        %v2384 = vunpack.c.l.b16 %v2270
        %v2385 = vunpack.c.h.b16 %v2270
        %v2386 = vunpack.c.l.b16 %v2271
        %v2387 = vunpack.c.h.b16 %v2271
        %v2388 = vunpack.c.l.b16 %v2272
        %v2389 = vunpack.c.h.b16 %v2272
        %v2390 = vunpack.c.l.b16 %v2273
        %v2391 = vunpack.c.h.b16 %v2273
        %v2392 = vpack.c.b16 %v2332, %v2328
        %v2393 = vpack.c.b16 %v2333, %v2329
        %v2394 = vpack.c.b16 %v2334, %v2330
        %v2395 = vpack.c.b16 %v2335, %v2331
        %v2396 = vpack.c.b16 %v2340, %v2336
        %v2397 = vpack.c.b16 %v2341, %v2337
        %v2398 = vpack.c.b16 %v2342, %v2338
        %v2399 = vpack.c.b16 %v2343, %v2339
        %v2400 = vpack.c.b16 %v2348, %v2344
        %v2401 = vpack.c.b16 %v2349, %v2345
        %v2402 = vpack.c.b16 %v2350, %v2346
        %v2403 = vpack.c.b16 %v2351, %v2347
        %v2404 = vpack.c.b16 %v2356, %v2352
        %v2405 = vpack.c.b16 %v2357, %v2353
        %v2406 = vpack.c.b16 %v2358, %v2354
        %v2407 = vpack.c.b16 %v2359, %v2355
        %v2408 = vpack.c.b16 %v2364, %v2360
        %v2409 = vpack.c.b16 %v2365, %v2361
        %v2410 = vpack.c.b16 %v2366, %v2362
        %v2411 = vpack.c.b16 %v2367, %v2363
        %v2412 = vpack.c.b16 %v2372, %v2368
        %v2413 = vpack.c.b16 %v2373, %v2369
        %v2414 = vpack.c.b16 %v2374, %v2370
        %v2415 = vpack.c.b16 %v2375, %v2371
        %v2416 = vpack.c.b16 %v2380, %v2376
        %v2417 = vpack.c.b16 %v2381, %v2377
        %v2418 = vpack.c.b16 %v2382, %v2378
        %v2419 = vpack.c.b16 %v2383, %v2379
        %v2420 = vpack.c.b16 %v2388, %v2384
        %v2421 = vpack.c.b16 %v2389, %v2385
        %v2422 = vpack.c.b16 %v2390, %v2386
        %v2423 = vpack.c.b16 %v2391, %v2387
        %2456 = vmatprep.subr.bf16.mxu0 %v2421
        %2457 = vmatpush1.bf16.msra.mxu0 %v2420
        %2458 = vmatprep.subr.bf16.mxu0 %v2417
        %2459 = vmatpush1.bf16.msra.mxu0 %v2416
        %2460 = vmatprep.subr.bf16.mxu0 %v2413
        %2461 = vmatpush1.bf16.msra.mxu0 %v2412
        %2462 = vmatprep.subr.bf16.mxu0 %v2409
        %2463 = vmatpush1.bf16.msra.mxu0 %v2408
        %2464 = vmatprep.subr.bf16.mxu0 %v2405
        %2465 = vmatpush1.bf16.msra.mxu0 %v2404
        %2466 = vmatprep.subr.bf16.mxu0 %v2401
        %2467 = vmatpush1.bf16.msra.mxu0 %v2400
        %2468 = vmatprep.subr.bf16.mxu0 %v2397
        %2469 = vmatpush1.bf16.msra.mxu0 %v2396
        %2470 = vmatprep.subr.bf16.mxu0 %v2393
        %2471 = vmatpush1.bf16.msra.mxu0 %v2392
        %2472 = vmatprep.subr.bf16.mxu0 0
        %2473 = vmatpush2.bf16.msra.mxu0 0
        %2474 = vmatprep.subr.bf16.mxu0 0
        %2475 = vmatpush2.bf16.msra.mxu0 0
        %2476 = vmatprep.subr.bf16.mxu0 0
        %2477 = vmatpush2.bf16.msra.mxu0 0
        %2478 = vmatprep.subr.bf16.mxu0 0
        %2479 = vmatpush2.bf16.msra.mxu0 0
        %2480 = vmatprep.subr.bf16.mxu0 0
        %2481 = vmatpush2.bf16.msra.mxu0 0
        %2482 = vmatprep.subr.bf16.mxu0 0
        %2483 = vmatpush2.bf16.msra.mxu0 0
        %2484 = vmatprep.subr.bf16.mxu0 0
        %2485 = vmatpush2.bf16.msra.mxu0 0
        %2486 = vmatprep.subr.bf16.mxu0 0
        %2487 = vmatpush2.bf16.msra.mxu0 0
        %2488 = vmatprep.mubr.bf16.mxu0 0
        %2489 = vmatmul.mubr.bf16.gmra.mxu0 %v2241
        %v2490 = vpop.f32.mrf.mxu0
        %v2491 = vadd.f32 %v2279, %v2490
        %v2492 = vpop.f32.mrf.mxu0
        %v2493 = vadd.f32 %v2283, %v2492
        %v2494 = vpop.f32.mrf.mxu0
        %v2495 = vpop.f32.mrf.mxu0
        %2496 = vdwg.mxu0
        %2497 = vmatprep.subr.bf16.mxu0 %v2423
        %2498 = vmatpush1.bf16.msra.mxu0 %v2422
        %2499 = vmatprep.subr.bf16.mxu0 %v2419
        %2500 = vmatpush1.bf16.msra.mxu0 %v2418
        %2501 = vmatprep.subr.bf16.mxu0 %v2415
        %2502 = vmatpush1.bf16.msra.mxu0 %v2414
        %2503 = vmatprep.subr.bf16.mxu0 %v2411
        %2504 = vmatpush1.bf16.msra.mxu0 %v2410
        %2505 = vmatprep.subr.bf16.mxu0 %v2407
        %2506 = vmatpush1.bf16.msra.mxu0 %v2406
        %2507 = vmatprep.subr.bf16.mxu0 %v2403
        %2508 = vmatpush1.bf16.msra.mxu0 %v2402
        %2509 = vmatprep.subr.bf16.mxu0 %v2399
        %2510 = vmatpush1.bf16.msra.mxu0 %v2398
        %2511 = vmatprep.subr.bf16.mxu0 %v2395
        %2512 = vmatpush1.bf16.msra.mxu0 %v2394
        %2513 = vmatprep.subr.bf16.mxu0 0
        %2514 = vmatpush2.bf16.msra.mxu0 0
        %2515 = vmatprep.subr.bf16.mxu0 0
        %2516 = vmatpush2.bf16.msra.mxu0 0
        %2517 = vmatprep.subr.bf16.mxu0 0
        %2518 = vmatpush2.bf16.msra.mxu0 0
        %2519 = vmatprep.subr.bf16.mxu0 0
        %2520 = vmatpush2.bf16.msra.mxu0 0
        %2521 = vmatprep.subr.bf16.mxu0 0
        %2522 = vmatpush2.bf16.msra.mxu0 0
        %2523 = vmatprep.subr.bf16.mxu0 0
        %2524 = vmatpush2.bf16.msra.mxu0 0
        %2525 = vmatprep.subr.bf16.mxu0 0
        %2526 = vmatpush2.bf16.msra.mxu0 0
        %2527 = vmatprep.subr.bf16.mxu0 0
        %2528 = vmatpush2.bf16.msra.mxu0 0
        %2529 = vmatprep.mubr.bf16.mxu0 0
        %2530 = vmatmul.mubr.bf16.gmra.mxu0 %v2241
        %v2531 = vpop.f32.mrf.mxu0
        %v2532 = vadd.f32 %v2287, %v2531
        %v2533 = vpop.f32.mrf.mxu0
        %v2534 = vadd.f32 %v2291, %v2533
        %v2535 = vpop.f32.mrf.mxu0
        %v2536 = vpop.f32.mrf.mxu0
        %2537 = vdwg.mxu0
        %v2538 = vmul.f32 %v2491, 0.70710677
        %v2539 = vmul.f32 %v2493, 0.70710677
        %v2540 = vmul.f32 %v2532, 0.70710677
        %v2541 = vmul.f32 %v2534, 0.70710677
        %vm2542 = vcmp.ge.f32.partialorder %v2538, 0.0
        %vm2543 = vcmp.ge.f32.partialorder %v2539, 0.0
        %vm2544 = vcmp.ge.f32.partialorder %v2540, 0.0
        %vm2545 = vcmp.ge.f32.partialorder %v2541, 0.0
        %v2546 = vsel %vm2542, 1.0, -1.0
        %v2547 = vsel %vm2543, 1.0, -1.0
        %v2548 = vsel %vm2544, 1.0, -1.0
        %v2549 = vsel %vm2545, 1.0, -1.0
        %v2550 = vand.u32 2147483647, %v2538
        %v2551 = vand.u32 2147483647, %v2539
        %v2552 = vand.u32 2147483647, %v2540
        %v2553 = vand.u32 2147483647, %v2541
        %v2554 = vmul.f32 %v2550, 0.3275911
        %v2555 = vmul.f32 %v2551, 0.3275911
        %v2556 = vmul.f32 %v2552, 0.3275911
        %v2557 = vmul.f32 %v2553, 0.3275911
        %v2558 = vadd.f32 %v2554, 1.0
        %v2559 = vadd.f32 %v2555, 1.0
        %v2560 = vadd.f32 %v2556, 1.0
        %v2561 = vadd.f32 %v2557, 1.0
        %v2562 = vrcp.pop %v2558
        %v2563 = vrcp.pop %v2559
        %v2564 = vrcp.pop %v2560
        %v2565 = vrcp.pop %v2561
        %v2566 = vmul.f32 %v2562, 1.0614054
        %v2567 = vmul.f32 %v2563, 1.0614054
        %v2568 = vmul.f32 %v2564, 1.0614054
        %v2569 = vmul.f32 %v2565, 1.0614054
        %v2570 = vsub.f32 %v2566, 1.4531521
        %v2571 = vsub.f32 %v2567, 1.4531521
        %v2572 = vsub.f32 %v2568, 1.4531521
        %v2573 = vsub.f32 %v2569, 1.4531521
        %v2574 = vmul.f32 %v2570, %v2562
        %v2575 = vmul.f32 %v2571, %v2563
        %v2576 = vmul.f32 %v2572, %v2564
        %v2577 = vmul.f32 %v2573, %v2565
        %v2578 = vadd.f32 %v2574, 1.4214138
        %v2579 = vadd.f32 %v2575, 1.4214138
        %v2580 = vadd.f32 %v2576, 1.4214138
        %v2581 = vadd.f32 %v2577, 1.4214138
        %v2582 = vmul.f32 %v2578, %v2562
        %v2583 = vmul.f32 %v2579, %v2563
        %v2584 = vmul.f32 %v2580, %v2564
        %v2585 = vmul.f32 %v2581, %v2565
        %v2586 = vsub.f32 %v2582, 0.28449672
        %v2587 = vsub.f32 %v2583, 0.28449672
        %v2588 = vsub.f32 %v2584, 0.28449672
        %v2589 = vsub.f32 %v2585, 0.28449672
        %v2590 = vmul.f32 %v2586, %v2562
        %v2591 = vmul.f32 %v2587, %v2563
        %v2592 = vmul.f32 %v2588, %v2564
        %v2593 = vmul.f32 %v2589, %v2565
        %v2594 = vadd.f32 %v2590, 0.2548296
        %v2595 = vadd.f32 %v2591, 0.2548296
        %v2596 = vadd.f32 %v2592, 0.2548296
        %v2597 = vadd.f32 %v2593, 0.2548296
        %v2598 = vmul.f32 %v2594, %v2562
        %v2599 = vmul.f32 %v2595, %v2563
        %v2600 = vmul.f32 %v2596, %v2564
        %v2601 = vmul.f32 %v2597, %v2565
        %v2602 = vsub.f32 0.0, %v2550
        %v2603 = vsub.f32 0.0, %v2551
        %v2604 = vsub.f32 0.0, %v2552
        %v2605 = vsub.f32 0.0, %v2553
        %v2606 = vmul.f32 %v2602, %v2550
        %v2607 = vmul.f32 %v2603, %v2551
        %v2608 = vmul.f32 %v2604, %v2552
        %v2609 = vmul.f32 %v2605, %v2553
        %v2610 = vmul.f32 %v2606, 1.442695
        %v2611 = vpow.pop %v2610
        %v2612 = vmul.f32 %v2607, 1.442695
        %v2613 = vpow.pop %v2612
        %v2614 = vmul.f32 %v2608, 1.442695
        %v2615 = vpow.pop %v2614
        %v2616 = vmul.f32 %v2609, 1.442695
        %v2617 = vpow.pop %v2616
        %v2618 = vmul.f32 %v2598, %v2611
        %v2619 = vmul.f32 %v2599, %v2613
        %v2620 = vmul.f32 %v2600, %v2615
        %v2621 = vmul.f32 %v2601, %v2617
        %v2622 = vsub.f32 1.0, %v2618
        %v2623 = vsub.f32 1.0, %v2619
        %v2624 = vsub.f32 1.0, %v2620
        %v2625 = vsub.f32 1.0, %v2621
        %v2626 = vmul.f32 %v2546, %v2622
        %v2627 = vmul.f32 %v2547, %v2623
        %v2628 = vmul.f32 %v2548, %v2624
        %v2629 = vmul.f32 %v2549, %v2625
        %v2630 = vmul.f32 %v2491, 0.5
        %v2631 = vmul.f32 %v2493, 0.5
        %v2632 = vmul.f32 %v2532, 0.5
        %v2633 = vmul.f32 %v2534, 0.5
        %v2634 = vadd.f32 %v2626, 1.0
        %v2635 = vadd.f32 %v2627, 1.0
        %v2636 = vadd.f32 %v2628, 1.0
        %v2637 = vadd.f32 %v2629, 1.0
        %v2638 = vmul.f32 %v2630, %v2634
        %v2639 = vmul.f32 %v2631, %v2635
        %v2640 = vmul.f32 %v2632, %v2636
        %v2641 = vmul.f32 %v2633, %v2637
        %v2642 = vpack.c.bf16 %v2638, %v2638
        %v2643 = vpack.c.bf16 %v2639, %v2639
        %v2644 = vpack.c.bf16 %v2640, %v2640
        %v2645 = vpack.c.bf16 %v2641, %v2641
        %v2646 = vld [vmem:[#allocation14] sm:$0xf]
        %v2647 = vld [vmem:[#allocation14 + $0x4] sm:$0xf]
        %v2648 = vld [vmem:[#allocation14 + $0x8] sm:$0xf]
        %v2649 = vld [vmem:[#allocation14 + $0xc] sm:$0xf]
        %v2650 = vld [vmem:[#allocation14 + $0x10] sm:$0xf]
        %v2651 = vld [vmem:[#allocation14 + $0x14] sm:$0xf]
        %v2652 = vld [vmem:[#allocation14 + $0x18] sm:$0xf]
        %v2653 = vld [vmem:[#allocation14 + $0x1c] sm:$0xf]
        %v2654 = vld [vmem:[#allocation14 + $0x20] sm:$0xf]
        %v2655 = vld [vmem:[#allocation14 + $0x24] sm:$0xf]
        %v2656 = vld [vmem:[#allocation14 + $0x28] sm:$0xf]
        %v2657 = vld [vmem:[#allocation14 + $0x2c] sm:$0xf]
        %v2658 = vld [vmem:[#allocation14 + $0x30] sm:$0xf]
        %v2659 = vld [vmem:[#allocation14 + $0x34] sm:$0xf]
        %v2660 = vld [vmem:[#allocation14 + $0x38] sm:$0xf]
        %v2661 = vld [vmem:[#allocation14 + $0x3c] sm:$0xf]
        %v2662 = vld [vmem:[#allocation14 + $0x40] sm:$0xf]
        %v2663 = vld [vmem:[#allocation14 + $0x44] sm:$0xf]
        %v2664 = vld [vmem:[#allocation14 + $0x48] sm:$0xf]
        %v2665 = vld [vmem:[#allocation14 + $0x4c] sm:$0xf]
        %v2666 = vld [vmem:[#allocation14 + $0x50] sm:$0xf]
        %v2667 = vld [vmem:[#allocation14 + $0x54] sm:$0xf]
        %v2668 = vld [vmem:[#allocation14 + $0x58] sm:$0xf]
        %v2669 = vld [vmem:[#allocation14 + $0x5c] sm:$0xf]
        %v2670 = vld [vmem:[#allocation14 + $0x60] sm:$0xf]
        %v2671 = vld [vmem:[#allocation14 + $0x64] sm:$0xf]
        %v2672 = vld [vmem:[#allocation14 + $0x68] sm:$0xf]
        %v2673 = vld [vmem:[#allocation14 + $0x6c] sm:$0xf]
        %v2674 = vld [vmem:[#allocation14 + $0x70] sm:$0xf]
        %v2675 = vld [vmem:[#allocation14 + $0x74] sm:$0xf]
        %v2676 = vld [vmem:[#allocation14 + $0x78] sm:$0xf]
        %v2677 = vld [vmem:[#allocation14 + $0x7c] sm:$0xf]
        %v2678 = vld [vmem:[#allocation14 + $0x80] sm:$0xf]
        %v2679 = vld [vmem:[#allocation14 + $0x84] sm:$0xf]
        %v2680 = vld [vmem:[#allocation14 + $0x88] sm:$0xf]
        %v2681 = vld [vmem:[#allocation14 + $0x8c] sm:$0xf]
        %v2682 = vld [vmem:[#allocation14 + $0x90] sm:$0xf]
        %v2683 = vld [vmem:[#allocation14 + $0x94] sm:$0xf]
        %v2684 = vld [vmem:[#allocation14 + $0x98] sm:$0xf]
        %v2685 = vld [vmem:[#allocation14 + $0x9c] sm:$0xf]
        %v2686 = vld [vmem:[#allocation14 + $0xa0] sm:$0xf]
        %v2687 = vld [vmem:[#allocation14 + $0xa4] sm:$0xf]
        %v2688 = vld [vmem:[#allocation14 + $0xa8] sm:$0xf]
        %v2689 = vld [vmem:[#allocation14 + $0xac] sm:$0xf]
        %v2690 = vld [vmem:[#allocation14 + $0xb0] sm:$0xf]
        %v2691 = vld [vmem:[#allocation14 + $0xb4] sm:$0xf]
        %v2692 = vld [vmem:[#allocation14 + $0xb8] sm:$0xf]
        %v2693 = vld [vmem:[#allocation14 + $0xbc] sm:$0xf]
        %v2694 = vld [vmem:[#allocation14 + $0xc0] sm:$0xf]
        %v2695 = vld [vmem:[#allocation14 + $0xc4] sm:$0xf]
        %v2696 = vld [vmem:[#allocation14 + $0xc8] sm:$0xf]
        %v2697 = vld [vmem:[#allocation14 + $0xcc] sm:$0xf]
        %v2698 = vld [vmem:[#allocation14 + $0xd0] sm:$0xf]
        %v2699 = vld [vmem:[#allocation14 + $0xd4] sm:$0xf]
        %v2700 = vld [vmem:[#allocation14 + $0xd8] sm:$0xf]
        %v2701 = vld [vmem:[#allocation14 + $0xdc] sm:$0xf]
        %v2702 = vld [vmem:[#allocation14 + $0xe0] sm:$0xf]
        %v2703 = vld [vmem:[#allocation14 + $0xe4] sm:$0xf]
        %v2704 = vld [vmem:[#allocation14 + $0xe8] sm:$0xf]
        %v2705 = vld [vmem:[#allocation14 + $0xec] sm:$0xf]
        %v2706 = vld [vmem:[#allocation14 + $0xf0] sm:$0xf]
        %v2707 = vld [vmem:[#allocation14 + $0xf4] sm:$0xf]
        %v2708 = vld [vmem:[#allocation14 + $0xf8] sm:$0xf]
        %v2709 = vld [vmem:[#allocation14 + $0xfc] sm:$0xf]
        %v2710 = vld [vmem:[%s13] sm:$0x1]
        %v2712 = vlaneseq
        %v2713 = vshrl.u32 %v2712, 7
        %v2714 = vsub.s32 0, %v2713
        %v2715 = vrot.slane %v2710, %v2714
        %v2781 = vunpack.c.l.b16 %v2646
        %v2782 = vunpack.c.l.b16 %v2647
        %v2783 = vunpack.c.l.b16 %v2648
        %v2784 = vunpack.c.l.b16 %v2649
        %v2785 = vunpack.c.l.b16 %v2650
        %v2786 = vunpack.c.l.b16 %v2651
        %v2787 = vunpack.c.l.b16 %v2652
        %v2788 = vunpack.c.l.b16 %v2653
        %v2789 = vunpack.c.l.b16 %v2654
        %v2790 = vunpack.c.l.b16 %v2655
        %v2791 = vunpack.c.l.b16 %v2656
        %v2792 = vunpack.c.l.b16 %v2657
        %v2793 = vunpack.c.l.b16 %v2658
        %v2794 = vunpack.c.l.b16 %v2659
        %v2795 = vunpack.c.l.b16 %v2660
        %v2796 = vunpack.c.l.b16 %v2661
        %v2797 = vunpack.c.l.b16 %v2662
        %v2798 = vunpack.c.l.b16 %v2663
        %v2799 = vunpack.c.l.b16 %v2664
        %v2800 = vunpack.c.l.b16 %v2665
        %v2801 = vunpack.c.l.b16 %v2666
        %v2802 = vunpack.c.l.b16 %v2667
        %v2803 = vunpack.c.l.b16 %v2668
        %v2804 = vunpack.c.l.b16 %v2669
        %v2805 = vunpack.c.l.b16 %v2670
        %v2806 = vunpack.c.l.b16 %v2671
        %v2807 = vunpack.c.l.b16 %v2672
        %v2808 = vunpack.c.l.b16 %v2673
        %v2809 = vunpack.c.l.b16 %v2674
        %v2810 = vunpack.c.l.b16 %v2675
        %v2811 = vunpack.c.l.b16 %v2676
        %v2812 = vunpack.c.l.b16 %v2677
        %v2813 = vunpack.c.l.b16 %v2678
        %v2814 = vunpack.c.l.b16 %v2679
        %v2815 = vunpack.c.l.b16 %v2680
        %v2816 = vunpack.c.l.b16 %v2681
        %v2817 = vunpack.c.l.b16 %v2682
        %v2818 = vunpack.c.l.b16 %v2683
        %v2819 = vunpack.c.l.b16 %v2684
        %v2820 = vunpack.c.l.b16 %v2685
        %v2821 = vunpack.c.l.b16 %v2686
        %v2822 = vunpack.c.l.b16 %v2687
        %v2823 = vunpack.c.l.b16 %v2688
        %v2824 = vunpack.c.l.b16 %v2689
        %v2825 = vunpack.c.l.b16 %v2690
        %v2826 = vunpack.c.l.b16 %v2691
        %v2827 = vunpack.c.l.b16 %v2692
        %v2828 = vunpack.c.l.b16 %v2693
        %v2829 = vunpack.c.l.b16 %v2694
        %v2830 = vunpack.c.l.b16 %v2695
        %v2831 = vunpack.c.l.b16 %v2696
        %v2832 = vunpack.c.l.b16 %v2697
        %v2833 = vunpack.c.l.b16 %v2698
        %v2834 = vunpack.c.l.b16 %v2699
        %v2835 = vunpack.c.l.b16 %v2700
        %v2836 = vunpack.c.l.b16 %v2701
        %v2837 = vunpack.c.l.b16 %v2702
        %v2838 = vunpack.c.l.b16 %v2703
        %v2839 = vunpack.c.l.b16 %v2704
        %v2840 = vunpack.c.l.b16 %v2705
        %v2841 = vunpack.c.l.b16 %v2706
        %v2842 = vunpack.c.l.b16 %v2707
        %v2843 = vunpack.c.l.b16 %v2708
        %v2844 = vunpack.c.l.b16 %v2709
        %v2845 = vpack.c.b16 %v2782, %v2781
        %v2846 = vpack.c.b16 %v2784, %v2783
        %v2847 = vpack.c.b16 %v2786, %v2785
        %v2848 = vpack.c.b16 %v2788, %v2787
        %v2849 = vpack.c.b16 %v2790, %v2789
        %v2850 = vpack.c.b16 %v2792, %v2791
        %v2851 = vpack.c.b16 %v2794, %v2793
        %v2852 = vpack.c.b16 %v2796, %v2795
        %v2853 = vpack.c.b16 %v2798, %v2797
        %v2854 = vpack.c.b16 %v2800, %v2799
        %v2855 = vpack.c.b16 %v2802, %v2801
        %v2856 = vpack.c.b16 %v2804, %v2803
        %v2857 = vpack.c.b16 %v2806, %v2805
        %v2858 = vpack.c.b16 %v2808, %v2807
        %v2859 = vpack.c.b16 %v2810, %v2809
        %v2860 = vpack.c.b16 %v2812, %v2811
        %v2861 = vpack.c.b16 %v2814, %v2813
        %v2862 = vpack.c.b16 %v2816, %v2815
        %v2863 = vpack.c.b16 %v2818, %v2817
        %v2864 = vpack.c.b16 %v2820, %v2819
        %v2865 = vpack.c.b16 %v2822, %v2821
        %v2866 = vpack.c.b16 %v2824, %v2823
        %v2867 = vpack.c.b16 %v2826, %v2825
        %v2868 = vpack.c.b16 %v2828, %v2827
        %v2869 = vpack.c.b16 %v2830, %v2829
        %v2870 = vpack.c.b16 %v2832, %v2831
        %v2871 = vpack.c.b16 %v2834, %v2833
        %v2872 = vpack.c.b16 %v2836, %v2835
        %v2873 = vpack.c.b16 %v2838, %v2837
        %v2874 = vpack.c.b16 %v2840, %v2839
        %v2875 = vpack.c.b16 %v2842, %v2841
        %v2876 = vpack.c.b16 %v2844, %v2843
        %2909 = vmatprep.subr.bf16.mxu0 0
        %2910 = vmatpush1.bf16.msra.mxu0 %v2852
        %2911 = vmatprep.subr.bf16.mxu0 0
        %2912 = vmatpush1.bf16.msra.mxu0 %v2851
        %2913 = vmatprep.subr.bf16.mxu0 0
        %2914 = vmatpush1.bf16.msra.mxu0 %v2850
        %2915 = vmatprep.subr.bf16.mxu0 0
        %2916 = vmatpush1.bf16.msra.mxu0 %v2849
        %2917 = vmatprep.subr.bf16.mxu0 0
        %2918 = vmatpush1.bf16.msra.mxu0 %v2848
        %2919 = vmatprep.subr.bf16.mxu0 0
        %2920 = vmatpush1.bf16.msra.mxu0 %v2847
        %2921 = vmatprep.subr.bf16.mxu0 0
        %2922 = vmatpush1.bf16.msra.mxu0 %v2846
        %2923 = vmatprep.subr.bf16.mxu0 0
        %2924 = vmatpush1.bf16.msra.mxu0 %v2845
        %2925 = vmatprep.subr.bf16.mxu0 0
        %2926 = vmatpush2.bf16.msra.mxu0 %v2860
        %2927 = vmatprep.subr.bf16.mxu0 0
        %2928 = vmatpush2.bf16.msra.mxu0 %v2859
        %2929 = vmatprep.subr.bf16.mxu0 0
        %2930 = vmatpush2.bf16.msra.mxu0 %v2858
        %2931 = vmatprep.subr.bf16.mxu0 0
        %2932 = vmatpush2.bf16.msra.mxu0 %v2857
        %2933 = vmatprep.subr.bf16.mxu0 0
        %2934 = vmatpush2.bf16.msra.mxu0 %v2856
        %2935 = vmatprep.subr.bf16.mxu0 0
        %2936 = vmatpush2.bf16.msra.mxu0 %v2855
        %2937 = vmatprep.subr.bf16.mxu0 0
        %2938 = vmatpush2.bf16.msra.mxu0 %v2854
        %2939 = vmatprep.subr.bf16.mxu0 0
        %2940 = vmatpush2.bf16.msra.mxu0 %v2853
        %2941 = vmatprep.mubr.bf16.mxu0 %v2643
        %2942 = vmatmul.mubr.bf16.gmra.mxu0 %v2642
        %v2943 = vpop.f32.mrf.mxu0
        %v2944 = vadd.f32 %v2715, %v2943
        %v2945 = vpop.f32.mrf.mxu0
        %v2946 = vpop.f32.mrf.mxu0
        %v2947 = vpop.f32.mrf.mxu0
        %2948 = vdwg.mxu0
        %2949 = vmatprep.subr.bf16.mxu0 0
        %2950 = vmatpush1.bf16.msra.mxu0 %v2868
        %2951 = vmatprep.subr.bf16.mxu0 0
        %2952 = vmatpush1.bf16.msra.mxu0 %v2867
        %2953 = vmatprep.subr.bf16.mxu0 0
        %2954 = vmatpush1.bf16.msra.mxu0 %v2866
        %2955 = vmatprep.subr.bf16.mxu0 0
        %2956 = vmatpush1.bf16.msra.mxu0 %v2865
        %2957 = vmatprep.subr.bf16.mxu0 0
        %2958 = vmatpush1.bf16.msra.mxu0 %v2864
        %2959 = vmatprep.subr.bf16.mxu0 0
        %2960 = vmatpush1.bf16.msra.mxu0 %v2863
        %2961 = vmatprep.subr.bf16.mxu0 0
        %2962 = vmatpush1.bf16.msra.mxu0 %v2862
        %2963 = vmatprep.subr.bf16.mxu0 0
        %2964 = vmatpush1.bf16.msra.mxu0 %v2861
        %2965 = vmatprep.subr.bf16.mxu0 0
        %2966 = vmatpush2.bf16.msra.mxu0 %v2876
        %2967 = vmatprep.subr.bf16.mxu0 0
        %2968 = vmatpush2.bf16.msra.mxu0 %v2875
        %2969 = vmatprep.subr.bf16.mxu0 0
        %2970 = vmatpush2.bf16.msra.mxu0 %v2874
        %2971 = vmatprep.subr.bf16.mxu0 0
        %2972 = vmatpush2.bf16.msra.mxu0 %v2873
        %2973 = vmatprep.subr.bf16.mxu0 0
        %2974 = vmatpush2.bf16.msra.mxu0 %v2872
        %2975 = vmatprep.subr.bf16.mxu0 0
        %2976 = vmatpush2.bf16.msra.mxu0 %v2871
        %2977 = vmatprep.subr.bf16.mxu0 0
        %2978 = vmatpush2.bf16.msra.mxu0 %v2870
        %2979 = vmatprep.subr.bf16.mxu0 0
        %2980 = vmatpush2.bf16.msra.mxu0 %v2869
        %2981 = vmatprep.mubr.bf16.mxu0 %v2645
        %2982 = vmatmul.mubr.bf16.gmra.mxu0 %v2644
        %v2983 = vpop.f32.mrf.mxu0
        %v2984 = vadd.f32 %v2944, %v2983
        %v2985 = vpop.f32.mrf.mxu0
        %v2986 = vpop.f32.mrf.mxu0
        %v2987 = vpop.f32.mrf.mxu0
        %2988 = vdwg.mxu0
        %v2989 = vadd.f32 %v2213, %v2984
        %2990 = vst [vmem:[%s602] sm:$0xff] %v2989
        %s2991 = sand.u32 %s349, 1
        %s2992 = scalar_lea.sflag [#allocation4], %s2991
        %s2993 = sand.u32 %s349, 1
        %s2994 = smul.addr %s2993, 8
        %s2995 = scalar_lea.vmem [#allocation16], %s2994
        // Predicated region
        $region109: #{tpu_custom_call.1} parent=75 // pred_check
          %p2996 = pneg %p359
        $region110: #{tpu_custom_call.1} parent=75 // pred_check_branch
          %2998 = sbr.rel (%p2996) target = $region112
        $region111: #{tpu_custom_call.1} parent=75 // pred_region
          %s3000 = ssub.s32 128, 128
          %3001 = vsyncadd %s2992, %s3000
          %s3002 = smul.addr %s37, 128
          %s3003 = scalar_lea.hbm %s14, %s3002
          %s3005 = sshll.u32 %s2995, 4
          %s3006 = int_to_ptr.vmem [resolvable:$true] %s3005
          %3008 = dma.vmem_to_hbm [thread:$0]  %s3006, 128, %s3003, %s2992
        $region112: #{tpu_custom_call.1} parent=75 // pred_fallthru
          _
      $region76: #{tpu_custom_call.1} parent=5 // pred_fallthru
        _
      %p3009 = scmp.le.s32.totalorder 2, %s32
      // Predicated region
      $region113: #{tpu_custom_call.1} parent=5 // pred_check
        %p3010 = pneg %p3009
      $region114: #{tpu_custom_call.1} parent=5 // pred_check_branch
        %3012 = sbr.rel (%p3010) target = $region116
      $region115: #{tpu_custom_call.1} parent=5 // pred_region
        %s3013 = ssub.s32 %s32, 2
        // Predicated region
        $region117: #{tpu_custom_call.1} parent=115 // pred_check
          %p3014 = pneg %p365
        $region118: #{tpu_custom_call.1} parent=115 // pred_check_branch
          %3016 = sbr.rel (%p3014) target = $region120
        $region119: #{tpu_custom_call.1} parent=115 // pred_region
          %s3017 = sand.u32 %s350, 1
          %s3018 = scalar_lea.sflag [#allocation4], %s3017
          %s3019 = sand.u32 %s350, 1
          %s3020 = smul.addr %s3019, 8
          %s3021 = scalar_lea.vmem [#allocation16], %s3020
          %3022 = dma.done %s3018, 128
        $region120: #{tpu_custom_call.1} parent=115 // pred_fallthru
          _
      $region116: #{tpu_custom_call.1} parent=5 // pred_fallthru
        _
    $region6: #{tpu_custom_call.1} parent=1 // loop_footer
      %s36 = sadd.s32 1, %s32
    $region7: #{tpu_custom_call.1} parent=1 // loop_footer_branch
      %31 = sbr.rel target = $region3
    $region8: #{tpu_custom_call.1} parent=1 // loop_exit
      _
    %3023 = vsyncpa [#allocation3], 1
    %s3024 = scalar_lea.sflag [#allocation3], 1
    %3025 = vsyncpa %s3024, 1
    %3026 = vsyncpa [#allocation6], 1
    %s3027 = scalar_lea.sflag [#allocation6], 1
    %3028 = vsyncpa %s3027, 1
    %3029 = vsyncpa [#allocation9], 1
    %3030 = vsyncpa [#allocation12], 1
    %3031 = vsyncpa [#allocation15], 1
    %3032 = vsyncpa [#allocation4], 1
    %s3033 = scalar_lea.sflag [#allocation4], 1
    %3034 = vsyncpa %s3033, 1

</llo_original>
